<compile_context>
chip_gen: v6e
topology: v6e:2x2x1
jax: 0.10.0
libtpu: 0.0.40
codegen_flags: <defaults>
</compile_context>

<pallas_src>
import functools

import jax
import jax.numpy as jnp
from jax import lax
from jax.experimental import pallas as pl
from jax.experimental.pallas import tpu as pltpu


def _pam_kernel(x_ref,            # (1, C, N)   f32  (resident per batch)
                wbc_ref,          # (2*C8, C)   bf16 : [Wb | Wc]^T
                bbc_ref,          # (2*C8, 1)   f32
                wd_ref,           # (C, C)      bf16 : alpha already folded in
                bd_ref,           # (C, 1)      f32  : alpha already folded in
                o_ref,            # (1, C, TQ)  f32
                fbt_sc,           # VMEM (N, C8) bf16 : feat_b^T (query-major)
                fc_sc,            # VMEM (C8, N) bf16 : feat_c
                fd_sc,            # VMEM (C, N)  bf16 : alpha * feat_d
                m_sc,             # VMEM (TQ, 1) f32  : online-softmax running max
                l_sc,             # VMEM (TQ, 1) f32  : online-softmax running sum
                acc_sc,           # VMEM (TQ, C) f32  : unnormalized PV accumulator
                *, ns, tk):
    q = pl.program_id(1)
    c8, n = fc_sc.shape
    tq = o_ref.shape[2]

    # ---- once per batch: fused 1x1-conv projections into resident scratch ----
    # Chunked over NS-column slabs so the f32 intermediates stay small; x is cast
    # to bf16 per slab (no wrapper-side cast pass over HBM).
    @pl.when(q == 0)
    def _():
        bbc = bbc_ref[...]
        bd = bd_ref[...]

        @pl.loop(0, n // ns)
        def _(i):
            off = pl.multiple_of(i * ns, ns)
            xs = x_ref[0, :, pl.ds(off, ns)].astype(jnp.bfloat16)           # (C, NS)
            pbc = jnp.dot(wbc_ref[...], xs,
                          preferred_element_type=jnp.float32) + bbc          # (2*C8, NS)
            pd = jnp.dot(wd_ref[...], xs,
                         preferred_element_type=jnp.float32) + bd            # (C, NS)
            # NOTE: the (N, C8) scratch lane-pads C8 -> 128 when C8 < 128 (accepted,
            # documented VMEM trade-off); in exchange the hot per-tile query path
            # needs no transpose at all.
            fbt_sc[pl.ds(off, ns), :] = pbc[:c8, :].T.astype(jnp.bfloat16)   # (NS, C8)
            fc_sc[:, pl.ds(off, ns)] = pbc[c8:, :].astype(jnp.bfloat16)
            fd_sc[:, pl.ds(off, ns)] = pd.astype(jnp.bfloat16)

    # ---- per query tile: flash-style online softmax over TK-wide key chunks ----
    qoff = pl.multiple_of(q * tq, tq)
    fb_q = fbt_sc[pl.ds(qoff, tq), :]                                        # (TQ, C8) bf16

    m_sc[...] = jnp.full_like(m_sc, -jnp.inf)
    l_sc[...] = jnp.zeros_like(l_sc)
    acc_sc[...] = jnp.zeros_like(acc_sc)

    @pl.loop(0, n // tk)
    def _(kk):
        koff = pl.multiple_of(kk * tk, tk)
        fc_k = fc_sc[:, pl.ds(koff, tk)]                                     # (C8, TK)
        fd_k = fd_sc[:, pl.ds(koff, tk)]                                     # (C, TK)
        s = jnp.dot(fb_q, fc_k, preferred_element_type=jnp.float32)          # (TQ, TK) f32
        m_prev = m_sc[...]
        m_new = jnp.maximum(m_prev, jnp.max(s, axis=-1, keepdims=True))      # (TQ, 1)
        a = jnp.exp(m_prev - m_new)                                          # (TQ, 1)
        # exp stays f32 for v5e portability; on v6e/v7x a bf16 exp would halve
        # EUP time if that slot ever saturates.
        p = jnp.exp(s - m_new)                                               # (TQ, TK) f32
        l_sc[...] = a * l_sc[...] + jnp.sum(p, axis=-1, keepdims=True)
        m_sc[...] = m_new
        # pv[nq, c] = sum_m p[nq, m] * fd[c, m]  (NT contraction, same pattern as
        # the flash-attention q @ k^T einsum -> no materialized transpose).
        pv = lax.dot_general(p.astype(jnp.bfloat16), fd_k,
                             dimension_numbers=(((1,), (1,)), ((), ())),
                             preferred_element_type=jnp.float32)             # (TQ, C)
        acc_sc[...] = acc_sc[...] * a + pv

    # ---- epilogue: post-PV softmax normalization on the small (TQ, C) tile ----
    o_t = acc_sc[...] * pl.reciprocal(l_sc[...], approx=True)                # (TQ, C)
    o_ref[0] = jnp.transpose(o_t).astype(o_ref.dtype)                        # (C, TQ)


def position_attention(x_nchw, wb, bb, wc, bc, wd, bd, alpha,
                       *, tq=256, tk=512, ns=512):
    """x_nchw: (B, C, H, W) f32.  Weights in "x @ W" form: wb/wc (C, C//8),
       wd (C, C); biases (C//8,)/(C,); alpha (1,).  Returns (B, C, H, W) f32."""
    B, C, H, W = x_nchw.shape
    N = H * W
    C8 = wb.shape[1]
    TQ, TK, NS = min(tq, N), min(tk, N), min(ns, N)
    assert N % TQ == 0 and N % TK == 0 and N % NS == 0, \
        "H*W must be divisible by the query/key/projection tile sizes"
    assert TQ == N or TQ % 128 == 0, "query tile must be lane-aligned"

    # channel-first flatten: reshape only, no HBM transpose / dtype pass on x.
    x_cn = x_nchw.reshape(B, C, N)
    # fuse conv_b/conv_c into one projection; pre-transpose weights so in-kernel
    # projections are plain (P, C) @ (C, NS) matmuls.  Fold alpha into conv_d.
    alpha_s = alpha.reshape(()).astype(jnp.float32)
    wbc_t = jnp.concatenate([wb, wc], axis=1).T.astype(jnp.bfloat16)          # (2*C8, C)
    bbc = jnp.concatenate([bb, bc], axis=0).reshape(2 * C8, 1).astype(jnp.float32)
    wd_t = (alpha_s * wd.T).astype(jnp.bfloat16)                              # (C, C)
    bd2 = (alpha_s * bd).reshape(C, 1).astype(jnp.float32)

    const2d = lambda b, q: (0, 0)   # weights: constant block index -> no re-DMA

    kernel = functools.partial(_pam_kernel, ns=NS, tk=TK)

    out_cn = pl.pallas_call(
        kernel,
        out_shape=jax.ShapeDtypeStruct((B, C, N), jnp.float32),
        grid_spec=pltpu.PrefetchScalarGridSpec(
            num_scalar_prefetch=0,
            grid=(B, N // TQ),
            in_specs=[
                pl.BlockSpec((1, C, N), lambda b, q: (b, 0, 0)),    # x (f32, resident/batch)
                pl.BlockSpec((2 * C8, C), const2d),                 # [Wb | Wc]^T
                pl.BlockSpec((2 * C8, 1), const2d),                 # [bb ; bc]
                pl.BlockSpec((C, C), const2d),                      # alpha * Wd^T
                pl.BlockSpec((C, 1), const2d),                      # alpha * bd
            ],
            out_specs=pl.BlockSpec((1, C, TQ), lambda b, q: (b, 0, q)),
            scratch_shapes=[
                pltpu.VMEM((N, C8), jnp.bfloat16),    # feat_b^T (lane-padded if C8 < 128)
                pltpu.VMEM((C8, N), jnp.bfloat16),    # feat_c
                pltpu.VMEM((C, N), jnp.bfloat16),     # alpha * feat_d
                pltpu.VMEM((TQ, 1), jnp.float32),     # running max
                pltpu.VMEM((TQ, 1), jnp.float32),     # running sum
                pltpu.VMEM((TQ, C), jnp.float32),     # PV accumulator
            ],
        ),
        compiler_params=pltpu.CompilerParams(
            # batch axis is megacore-parallel; the query axis must stay sequential
            # per batch because the projection scratch is filled at q == 0.
            # TODO(synk): for B < num_cores (v7x has 2 TCs) precompute the
            # projections in a separate pallas_call (or split q per core with
            # redundant projections) so the q axis can be marked parallel.
            dimension_semantics=("parallel", "arbitrary"),
            # 32 MiB stays within v7x's scoped budget; raise toward 64-96 MiB on
            # v5e/v6e for larger C / N (128 MiB physical VMEM there).
            vmem_limit_bytes=32 * 1024 * 1024,
        ),
    )(x_cn, wbc_t, bbc, wd_t, bd2)

    return out_cn.reshape(B, C, H, W)


def _reference(x_nchw, wb, bb, wc, bc, wd, bd, alpha):
    """Pure-JAX f32 reference mirroring the PyTorch forward (no residual)."""
    B, C, H, W = x_nchw.shape
    N = H * W
    xf = x_nchw.reshape(B, C, N)                                     # (B, C, N)
    feat_b = jnp.einsum("bcn,ce->ben", xf, wb) + bb[None, :, None]   # (B, C8, N)
    feat_c = jnp.einsum("bcn,ce->ben", xf, wc) + bc[None, :, None]
    feat_d = jnp.einsum("bcn,ce->ben", xf, wd) + bd[None, :, None]   # (B, C, N)
    fb_t = jnp.transpose(feat_b, (0, 2, 1))                          # (B, N, C8)
    attn = jax.nn.softmax(jnp.einsum("bne,bem->bnm", fb_t, feat_c), axis=-1)
    feat_e = jnp.einsum("bcm,bnm->bcn", feat_d, attn)                # bmm(d, attn^T)
    return (alpha.reshape(()) * feat_e).reshape(B, C, H, W)


if __name__ == "__main__":
    key = jax.random.PRNGKey(0)
    # in_channels=64 -> reduced channels C//8 = 8; N = 32*32 = 1024 exercises
    # 4 query tiles of 256, 2 key chunks of 512 and 2 projection slabs of 512.
    B, C, H, W = 2, 64, 32, 32
    C8 = C // 8

    ks = jax.random.split(key, 8)
    x = jax.random.normal(ks[0], (B, C, H, W), dtype=jnp.float32)
    wb = 0.1 * jax.random.normal(ks[1], (C, C8), dtype=jnp.float32)
    bb = 0.1 * jax.random.normal(ks[2], (C8,), dtype=jnp.float32)
    wc = 0.1 * jax.random.normal(ks[3], (C, C8), dtype=jnp.float32)
    bc = 0.1 * jax.random.normal(ks[4], (C8,), dtype=jnp.float32)
    wd = 0.1 * jax.random.normal(ks[5], (C, C), dtype=jnp.float32)
    bd = 0.1 * jax.random.normal(ks[6], (C,), dtype=jnp.float32)
    # module inits alpha = 0 (which yields an exactly-zero output, matching the
    # PyTorch module); use a nonzero value so the numerical check is non-trivial.
    alpha = jnp.array([0.5], dtype=jnp.float32)

    out = jax.block_until_ready(position_attention(x, wb, bb, wc, bc, wd, bd, alpha))
    ref = _reference(x, wb, bb, wc, bc, wd, bd, alpha)

    assert out.shape == (B, C, H, W)
    # bf16 matmul inputs + approx reciprocal vs f32 reference -> scale-aware tolerance.
    rel_err = float(jnp.max(jnp.abs(out - ref)) / (jnp.max(jnp.abs(ref)) + 1e-6))
    assert rel_err < 5e-2, f"mismatch vs reference: rel_err={rel_err}"

    print("KERNEL_OK")
</pallas_src>

<mosaic_0001>
module attributes {stable_mosaic.version = 11 : i64} {
  func.func @_pam_kernel(%arg0: i32, %arg1: i32, %arg2: memref<1x64x1024xf32, #tpu.memory_space<vmem>>, %arg3: memref<16x64xbf16, #tpu.memory_space<vmem>>, %arg4: memref<16x1xf32, #tpu.memory_space<vmem>>, %arg5: memref<64x64xbf16, #tpu.memory_space<vmem>>, %arg6: memref<64x1xf32, #tpu.memory_space<vmem>>, %arg7: memref<1x64x256xf32, #tpu.memory_space<vmem>>, %arg8: memref<1024x8xbf16, #tpu.memory_space<vmem>>, %arg9: memref<8x1024xbf16, #tpu.memory_space<vmem>>, %arg10: memref<64x1024xbf16, #tpu.memory_space<vmem>>, %arg11: memref<256x1xf32, #tpu.memory_space<vmem>>, %arg12: memref<256x1xf32, #tpu.memory_space<vmem>>, %arg13: memref<256x64xf32, #tpu.memory_space<vmem>>) attributes {dimension_semantics = [#tpu.dimension_semantics<parallel>, #tpu.dimension_semantics<arbitrary>], iteration_bounds = array<i64: 2, 4>, scalar_prefetch = 0 : i64, scratch_operands = 6 : i64, tpu.core_type = #tpu.core_type<tc>, window_params = [{transform_indices = @transform_0, window_bounds = array<i64: 1, 64, 1024>}, {pipeline_mode = #tpu.pipeline_mode<synchronous>, transform_indices = @transform_1, window_bounds = array<i64: 16, 64>}, {pipeline_mode = #tpu.pipeline_mode<synchronous>, transform_indices = @transform_2, window_bounds = array<i64: 16, 1>}, {pipeline_mode = #tpu.pipeline_mode<synchronous>, transform_indices = @transform_3, window_bounds = array<i64: 64, 64>}, {pipeline_mode = #tpu.pipeline_mode<synchronous>, transform_indices = @transform_4, window_bounds = array<i64: 64, 1>}, {transform_indices = @transform_5, window_bounds = array<i64: 1, 64, 256>}]} {
    %c0_i32 = arith.constant 0 : i32
    %0 = arith.cmpi eq, %arg1, %c0_i32 : i32
    %1 = arith.extui %0 : i1 to i32
    %c0_i32_0 = arith.constant 0 : i32
    %2 = arith.cmpi ne, %1, %c0_i32_0 : i32
    scf.if %2 {
      %c0_18 = arith.constant 0 : index
      %c0_19 = arith.constant 0 : index
      %23 = vector.load %arg4[%c0_18, %c0_19] : memref<16x1xf32, #tpu.memory_space<vmem>>, vector<16x1xf32>
      %c0_20 = arith.constant 0 : index
      %c0_21 = arith.constant 0 : index
      %24 = vector.load %arg6[%c0_20, %c0_21] : memref<64x1xf32, #tpu.memory_space<vmem>>, vector<64x1xf32>
      %c0_i32_22 = arith.constant 0 : i32
      %c2_i32_23 = arith.constant 2 : i32
      %25 = arith.addi %c0_i32_22, %c2_i32_23 : i32
      %c1_i32_24 = arith.constant 1 : i32
      scf.for %arg14 = %c0_i32_22 to %25 step %c1_i32_24  : i32 {
        %c1_i32_26 = arith.constant 1 : i32
        %26 = arith.muli %arg14, %c1_i32_26 : i32
        %c0_i32_27 = arith.constant 0 : i32
        %27 = arith.addi %c0_i32_27, %26 : i32
        %c512_i32 = arith.constant 512 : i32
        %28 = arith.muli %27, %c512_i32 : i32
        %29 = tpu.assume_multiple %28, 512 : i32
        %c0_28 = arith.constant 0 : index
        %c0_29 = arith.constant 0 : index
        %30 = arith.index_cast %29 : i32 to index
        %31 = vector.load %arg2[%c0_28, %c0_29, %30] : memref<1x64x1024xf32, #tpu.memory_space<vmem>>, vector<1x64x512xf32>
        %32 = vector.shape_cast %31 : vector<1x64x512xf32> to vector<64x512xf32>
        %33 = arith.truncf %32 : vector<64x512xf32> to vector<64x512xbf16>
        %c0_30 = arith.constant 0 : index
        %c0_31 = arith.constant 0 : index
        %34 = vector.load %arg3[%c0_30, %c0_31] : memref<16x64xbf16, #tpu.memory_space<vmem>>, vector<16x64xbf16>
        %cst_32 = arith.constant dense<0.000000e+00> : vector<16x512xf32>
        %35 = tpu.matmul %34, %33, %cst_32 {dimension_numbers = #tpu.dot_dimension_numbers<[1], [0], [0], [1], [0, 0, 1, 1], [], []>} : vector<16x64xbf16>, vector<64x512xbf16>, vector<16x512xf32> -> vector<16x512xf32>
        %36 = vector.broadcast %23 : vector<16x1xf32> to vector<16x512xf32>
        %37 = arith.addf %35, %36 : vector<16x512xf32>
        %c0_33 = arith.constant 0 : index
        %c0_34 = arith.constant 0 : index
        %38 = vector.load %arg5[%c0_33, %c0_34] : memref<64x64xbf16, #tpu.memory_space<vmem>>, vector<64x64xbf16>
        %cst_35 = arith.constant dense<0.000000e+00> : vector<64x512xf32>
        %39 = tpu.matmul %38, %33, %cst_35 {dimension_numbers = #tpu.dot_dimension_numbers<[1], [0], [0], [1], [0, 0, 1, 1], [], []>} : vector<64x64xbf16>, vector<64x512xbf16>, vector<64x512xf32> -> vector<64x512xf32>
        %40 = vector.broadcast %24 : vector<64x1xf32> to vector<64x512xf32>
        %41 = arith.addf %39, %40 : vector<64x512xf32>
        %42 = vector.extract_strided_slice %37 {offsets = [0, 0], sizes = [8, 512], strides = [1, 1]} : vector<16x512xf32> to vector<8x512xf32>
        %43 = tpu.transpose %42, [1, 0] : vector<8x512xf32> -> vector<512x8xf32>
        %44 = arith.truncf %43 : vector<512x8xf32> to vector<512x8xbf16>
        %45 = arith.index_cast %29 : i32 to index
        %c0_36 = arith.constant 0 : index
        %46 = vector.load %arg8[%45, %c0_36] : memref<1024x8xbf16, #tpu.memory_space<vmem>>, vector<512x8xbf16>
        tpu.vector_store %arg8[%45, %c0_36], %44 {strides = array<i32>} : memref<1024x8xbf16, #tpu.memory_space<vmem>>, vector<512x8xbf16>,
        %47 = vector.extract_strided_slice %37 {offsets = [8, 0], sizes = [8, 512], strides = [1, 1]} : vector<16x512xf32> to vector<8x512xf32>
        %48 = arith.truncf %47 : vector<8x512xf32> to vector<8x512xbf16>
        %c0_37 = arith.constant 0 : index
        %49 = arith.index_cast %29 : i32 to index
        %50 = vector.load %arg9[%c0_37, %49] : memref<8x1024xbf16, #tpu.memory_space<vmem>>, vector<8x512xbf16>
        tpu.vector_store %arg9[%c0_37, %49], %48 {strides = array<i32>} : memref<8x1024xbf16, #tpu.memory_space<vmem>>, vector<8x512xbf16>,
        %51 = arith.truncf %41 : vector<64x512xf32> to vector<64x512xbf16>
        %c0_38 = arith.constant 0 : index
        %52 = arith.index_cast %29 : i32 to index
        %53 = vector.load %arg10[%c0_38, %52] : memref<64x1024xbf16, #tpu.memory_space<vmem>>, vector<64x512xbf16>
        tpu.vector_store %arg10[%c0_38, %52], %51 {strides = array<i32>} : memref<64x1024xbf16, #tpu.memory_space<vmem>>, vector<64x512xbf16>,
      }
      %c2_i32_25 = arith.constant 2 : i32
    } else {
    }
    %c256_i32 = arith.constant 256 : i32
    %3 = arith.muli %arg1, %c256_i32 : i32
    %4 = tpu.assume_multiple %3, 256 : i32
    %5 = arith.index_cast %4 : i32 to index
    %c0 = arith.constant 0 : index
    %6 = vector.load %arg8[%5, %c0] : memref<1024x8xbf16, #tpu.memory_space<vmem>>, vector<256x8xbf16>
    %cst = arith.constant 0xFF800000 : f32
    %7 = vector.broadcast %cst : f32 to vector<256x1xf32>
    %c0_1 = arith.constant 0 : index
    %c0_2 = arith.constant 0 : index
    %8 = vector.load %arg11[%c0_1, %c0_2] : memref<256x1xf32, #tpu.memory_space<vmem>>, vector<256x1xf32>
    tpu.vector_store %arg11[%c0_1, %c0_2], %7 {strides = array<i32>} : memref<256x1xf32, #tpu.memory_space<vmem>>, vector<256x1xf32>,
    %cst_3 = arith.constant 0.000000e+00 : f32
    %9 = vector.broadcast %cst_3 : f32 to vector<256x1xf32>
    %c0_4 = arith.constant 0 : index
    %c0_5 = arith.constant 0 : index
    %10 = vector.load %arg12[%c0_4, %c0_5] : memref<256x1xf32, #tpu.memory_space<vmem>>, vector<256x1xf32>
    tpu.vector_store %arg12[%c0_4, %c0_5], %9 {strides = array<i32>} : memref<256x1xf32, #tpu.memory_space<vmem>>, vector<256x1xf32>,
    %cst_6 = arith.constant 0.000000e+00 : f32
    %11 = vector.broadcast %cst_6 : f32 to vector<256x64xf32>
    %c0_7 = arith.constant 0 : index
    %c0_8 = arith.constant 0 : index
    %12 = vector.load %arg13[%c0_7, %c0_8] : memref<256x64xf32, #tpu.memory_space<vmem>>, vector<256x64xf32>
    tpu.vector_store %arg13[%c0_7, %c0_8], %11 {strides = array<i32>} : memref<256x64xf32, #tpu.memory_space<vmem>>, vector<256x64xf32>,
    %c0_i32_9 = arith.constant 0 : i32
    %c2_i32 = arith.constant 2 : i32
    %13 = arith.addi %c0_i32_9, %c2_i32 : i32
    %c1_i32 = arith.constant 1 : i32
    scf.for %arg14 = %c0_i32_9 to %13 step %c1_i32  : i32 {
      %c1_i32_18 = arith.constant 1 : i32
      %23 = arith.muli %arg14, %c1_i32_18 : i32
      %c0_i32_19 = arith.constant 0 : i32
      %24 = arith.addi %c0_i32_19, %23 : i32
      %c512_i32 = arith.constant 512 : i32
      %25 = arith.muli %24, %c512_i32 : i32
      %26 = tpu.assume_multiple %25, 512 : i32
      %c0_20 = arith.constant 0 : index
      %27 = arith.index_cast %26 : i32 to index
      %28 = vector.load %arg9[%c0_20, %27] : memref<8x1024xbf16, #tpu.memory_space<vmem>>, vector<8x512xbf16>
      %c0_21 = arith.constant 0 : index
      %29 = arith.index_cast %26 : i32 to index
      %30 = vector.load %arg10[%c0_21, %29] : memref<64x1024xbf16, #tpu.memory_space<vmem>>, vector<64x512xbf16>
      %cst_22 = arith.constant dense<0.000000e+00> : vector<256x512xf32>
      %31 = tpu.matmul %6, %28, %cst_22 {dimension_numbers = #tpu.dot_dimension_numbers<[1], [0], [0], [1], [0, 0, 1, 1], [], []>} : vector<256x8xbf16>, vector<8x512xbf16>, vector<256x512xf32> -> vector<256x512xf32>
      %c0_23 = arith.constant 0 : index
      %c0_24 = arith.constant 0 : index
      %32 = vector.load %arg11[%c0_23, %c0_24] : memref<256x1xf32, #tpu.memory_space<vmem>>, vector<256x1xf32>
      %cst_25 = arith.constant dense<0xFF800000> : vector<256xf32>
      %33 = vector.multi_reduction <maximumf>, %31, %cst_25 [1] : vector<256x512xf32> to vector<256xf32>
      %34 = vector.shape_cast %33 : vector<256xf32> to vector<256x1xf32>
      %35 = arith.maximumf %32, %34 : vector<256x1xf32>
      %36 = arith.subf %32, %35 : vector<256x1xf32>
      %37 = math.exp %36 : vector<256x1xf32>
      %38 = vector.broadcast %35 : vector<256x1xf32> to vector<256x512xf32>
      %39 = arith.subf %31, %38 : vector<256x512xf32>
      %40 = math.exp %39 : vector<256x512xf32>
      %c0_26 = arith.constant 0 : index
      %c0_27 = arith.constant 0 : index
      %41 = vector.load %arg12[%c0_26, %c0_27] : memref<256x1xf32, #tpu.memory_space<vmem>>, vector<256x1xf32>
      %42 = arith.mulf %37, %41 : vector<256x1xf32>
      %cst_28 = arith.constant dense<0.000000e+00> : vector<256xf32>
      %43 = vector.multi_reduction <add>, %40, %cst_28 [1] : vector<256x512xf32> to vector<256xf32>
      %44 = vector.shape_cast %43 : vector<256xf32> to vector<256x1xf32>
      %45 = arith.addf %42, %44 : vector<256x1xf32>
      %c0_29 = arith.constant 0 : index
      %c0_30 = arith.constant 0 : index
      %46 = vector.load %arg12[%c0_29, %c0_30] : memref<256x1xf32, #tpu.memory_space<vmem>>, vector<256x1xf32>
      tpu.vector_store %arg12[%c0_29, %c0_30], %45 {strides = array<i32>} : memref<256x1xf32, #tpu.memory_space<vmem>>, vector<256x1xf32>,
      %c0_31 = arith.constant 0 : index
      %c0_32 = arith.constant 0 : index
      %47 = vector.load %arg11[%c0_31, %c0_32] : memref<256x1xf32, #tpu.memory_space<vmem>>, vector<256x1xf32>
      tpu.vector_store %arg11[%c0_31, %c0_32], %35 {strides = array<i32>} : memref<256x1xf32, #tpu.memory_space<vmem>>, vector<256x1xf32>,
      %48 = arith.truncf %40 : vector<256x512xf32> to vector<256x512xbf16>
      %cst_33 = arith.constant dense<0.000000e+00> : vector<256x64xf32>
      %49 = tpu.matmul %48, %30, %cst_33 {dimension_numbers = #tpu.dot_dimension_numbers<[1], [1], [0], [0], [0, 0, 1, 0], [], []>} : vector<256x512xbf16>, vector<64x512xbf16>, vector<256x64xf32> -> vector<256x64xf32>
      %c0_34 = arith.constant 0 : index
      %c0_35 = arith.constant 0 : index
      %50 = vector.load %arg13[%c0_34, %c0_35] : memref<256x64xf32, #tpu.memory_space<vmem>>, vector<256x64xf32>
      %51 = vector.broadcast %37 : vector<256x1xf32> to vector<256x64xf32>
      %52 = arith.mulf %50, %51 : vector<256x64xf32>
      %53 = arith.addf %52, %49 : vector<256x64xf32>
      %c0_36 = arith.constant 0 : index
      %c0_37 = arith.constant 0 : index
      %54 = vector.load %arg13[%c0_36, %c0_37] : memref<256x64xf32, #tpu.memory_space<vmem>>, vector<256x64xf32>
      tpu.vector_store %arg13[%c0_36, %c0_37], %53 {strides = array<i32>} : memref<256x64xf32, #tpu.memory_space<vmem>>, vector<256x64xf32>,
    }
    %c2_i32_10 = arith.constant 2 : i32
    %c0_11 = arith.constant 0 : index
    %c0_12 = arith.constant 0 : index
    %14 = vector.load %arg13[%c0_11, %c0_12] : memref<256x64xf32, #tpu.memory_space<vmem>>, vector<256x64xf32>
    %c0_13 = arith.constant 0 : index
    %c0_14 = arith.constant 0 : index
    %15 = vector.load %arg12[%c0_13, %c0_14] : memref<256x1xf32, #tpu.memory_space<vmem>>, vector<256x1xf32>
    %16 = tpu.reciprocal %15 {approx = true} : vector<256x1xf32> -> vector<256x1xf32>
    %17 = vector.broadcast %16 : vector<256x1xf32> to vector<256x64xf32>
    %18 = arith.mulf %14, %17 : vector<256x64xf32>
    %19 = tpu.transpose %18, [1, 0] : vector<256x64xf32> -> vector<64x256xf32>
    %c0_15 = arith.constant 0 : index
    %c0_16 = arith.constant 0 : index
    %c0_17 = arith.constant 0 : index
    %20 = vector.load %arg7[%c0_15, %c0_16, %c0_17] : memref<1x64x256xf32, #tpu.memory_space<vmem>>, vector<1x64x256xf32>
    %21 = vector.shape_cast %20 : vector<1x64x256xf32> to vector<64x256xf32>
    %22 = vector.shape_cast %19 : vector<64x256xf32> to vector<1x64x256xf32>
    tpu.vector_store %arg7[%c0_15, %c0_16, %c0_17], %22 {strides = array<i32>} : memref<1x64x256xf32, #tpu.memory_space<vmem>>, vector<1x64x256xf32>,
    return
  }
  func.func @transform_0(%arg0: i32, %arg1: i32) -> (i32, i32, i32) {
    %c0_i32 = arith.constant 0 : i32
    %c0_i32_0 = arith.constant 0 : i32
    %c0_i32_1 = arith.constant 0 : i32
    return %arg0, %c0_i32, %c0_i32_0 : i32, i32, i32
  }
  func.func @transform_1(%arg0: i32, %arg1: i32) -> (i32, i32) {
    %c0_i32 = arith.constant 0 : i32
    %c0_i32_0 = arith.constant 0 : i32
    %c0_i32_1 = arith.constant 0 : i32
    return %c0_i32, %c0_i32_0 : i32, i32
  }
  func.func @transform_2(%arg0: i32, %arg1: i32) -> (i32, i32) {
    %c0_i32 = arith.constant 0 : i32
    %c0_i32_0 = arith.constant 0 : i32
    %c0_i32_1 = arith.constant 0 : i32
    return %c0_i32, %c0_i32_0 : i32, i32
  }
  func.func @transform_3(%arg0: i32, %arg1: i32) -> (i32, i32) {
    %c0_i32 = arith.constant 0 : i32
    %c0_i32_0 = arith.constant 0 : i32
    %c0_i32_1 = arith.constant 0 : i32
    return %c0_i32, %c0_i32_0 : i32, i32
  }
  func.func @transform_4(%arg0: i32, %arg1: i32) -> (i32, i32) {
    %c0_i32 = arith.constant 0 : i32
    %c0_i32_0 = arith.constant 0 : i32
    %c0_i32_1 = arith.constant 0 : i32
    return %c0_i32, %c0_i32_0 : i32, i32
  }
  func.func @transform_5(%arg0: i32, %arg1: i32) -> (i32, i32, i32) {
    %c0_i32 = arith.constant 0 : i32
    %c0_i32_0 = arith.constant 0 : i32
    return %arg0, %c0_i32, %arg1 : i32, i32, i32
  }
}

</mosaic_0001>

<llo_original>
// kernel: tpu_custom_call.1
$region0: #{tpu_custom_call.1}
  #allocation0 [shape = 'u32[]', space=smem, size = 0x4, offset = 0x4, fixed_abs, tag = 'smem constant byte address 0x4 - core index']
  #allocation1 [shape = 'u32[144,128]{1,0:T(1,128)}', space=vmem, size = 0x12000, scoped, tag = 'internal scratch']
  #allocation2 [shape = 'bf16[1024,8]{1,0:T(8,128)(2,1)}', space=vmem, size = 0x40000, scoped, tag = 'scratch operand']
  #allocation3 [shape = 'bf16[8,1024]{1,0:T(8,128)(2,1)}', space=vmem, size = 0x4000, scoped, tag = 'scratch operand']
  #allocation4 [shape = 'bf16[64,1024]{1,0:T(8,128)(2,1)}', space=vmem, size = 0x20000, scoped, tag = 'scratch operand']
  #allocation5 [shape = 'f32[256,1]{1,0:T(8,128)}', space=vmem, size = 0x20000, scoped, tag = 'scratch operand']
  #allocation6 [shape = 'f32[256,1]{1,0:T(8,128)}', space=vmem, size = 0x20000, scoped, tag = 'scratch operand']
  #allocation7 [shape = 'f32[256,64]{1,0:T(8,128)}', space=vmem, size = 0x20000, scoped, tag = 'scratch operand']
  %s0 = inlined_call_operand.hbm [shape: f32[2,64,1024], index: 0, kind: input, shape index: {}]
  %s1 = inlined_call_operand.vmem [shape: bf16[16,64], index: 1, kind: input, shape index: {}]
  %s2 = inlined_call_operand.vmem [shape: f32[16,1], index: 2, kind: input, shape index: {}]
  %s3 = inlined_call_operand.vmem [shape: bf16[64,64], index: 3, kind: input, shape index: {}]
  %s4 = inlined_call_operand.vmem [shape: f32[64,1], index: 4, kind: input, shape index: {}]
  %s5 = inlined_call_operand.hbm [shape: f32[2,64,1024], index: 5, kind: output, shape index: {}]
  %s6 = sld [smem:[#allocation0]]
  $region75: #{tpu_custom_call.1} parent=0
    _
  %s8 = ssub.s32 1, %s6
  %s9 = scalar_select 0, %s8, %s6
  $region1: #{tpu_custom_call.1} parent=0
    #allocation8 [shape = 'u8[524288]{0}', space=vmem, size = 0x80000, scoped, tag = 'input window, operand 0']
    #allocation9 [shape = 's32[2]{0}', space=sflag, size = 0x8, scoped, tag = 'scoped memory for tpu_custom_call.1']
    #allocation10 [shape = 's32[2]{0}', space=sflag, size = 0x8, scoped, tag = 'scoped memory for tpu_custom_call.1']
    #allocation11 [shape = 'u8[131072]{0}', space=vmem, size = 0x20000, scoped, tag = 'output window, operand 0']
    %10 = vsyncpa [#allocation9], 0
    %s11 = scalar_lea.sflag [#allocation9], 1
    %12 = vsyncpa %s11, 0
    %13 = vsyncpa [#allocation10], 0
    %s14 = scalar_lea.sflag [#allocation10], 1
    %15 = vsyncpa %s14, 0
    loop: start=0, step=1, limit=10
    $region2: #{tpu_custom_call.1} parent=1 // loop_pre_header
      _
    $region3: #{tpu_custom_call.1} parent=1 // loop_header
      %s17 = sphi 0, %s21
      %p18 = scmp.ge.s32.totalorder %s17, 10
      %s24 = sphi 0, %s36
      %s25 = sphi 0, %s32
      %s26 = sphi 0, %s24
      %s27 = sphi 0, %s25
      %s28 = sphi 0, %s26
      %s29 = sphi 0, %s27
      %s39 = sphi 0, %s41
      %s42 = sphi 0, %s39
      %s43 = sphi 0, %s42
      %s59 = sphi 0, %s43
      %s63 = sphi 0, %s63
      %s65 = sphi 0, %s63
      %s66 = sphi 0, %s65
      %s80 = sphi 0, %s66
      %s84 = sphi 0, %s84
      %s86 = sphi 0, %s84
      %s87 = sphi 0, %s86
      %s101 = sphi 0, %s87
      %s105 = sphi 0, %s105
      %s107 = sphi 0, %s105
      %s108 = sphi 0, %s107
      %s122 = sphi 0, %s108
      %s126 = sphi 0, %s126
      %s128 = sphi 0, %s126
      %s129 = sphi 0, %s128
      %s143 = sphi 0, %s129
      %s151 = sphi 0, %s153
      %s154 = sphi 0, %s151
      %s155 = sphi 0, %s154
      %s171 = sphi 0, %s155
    $region4: #{tpu_custom_call.1} parent=1 // loop_header_branch
      %20 = sbr.rel (%p18) target = $region8
    $region5: #{tpu_custom_call.1} parent=1 // loop_body
      %s22 = ssub.s32 %s17, 1
      %s23 = ssub.s32 %s17, 2
      %s30 = sadd.s32 1, %s25
      %p31 = scmp.ge.s32.totalorder %s30, 4
      %s32 = scalar_select %p31, 0, %s30
      %s33 = sadd.s32 1, %s24
      %s34 = scalar_select %p31, %s33, %s24
      %p35 = scmp.ge.s32.totalorder %s34, 2
      %s36 = scalar_select %p35, 0, %s34
      %s37 = ssub.s32 %s24, %s36
      %p38 = scmp.eq.s32.totalorder %s37, 0
      %s40 = sadd.s32 %s39, 1
      %s41 = scalar_select %p38, %s39, %s40
      %p44 = pneg %p38
      %p45 = scmp.eq.s32.totalorder %s17, 7
      %p46 = por %p44, %p45
      %p47 = scmp.ne.s32.totalorder %s39, %s42
      %p48 = scmp.eq.s32.totalorder %s17, 0
      %p49 = por %p47, %p48
      %p50 = scmp.ne.s32.totalorder %s39, %s42
      %p51 = scmp.eq.s32.totalorder %s22, 7
      %p52 = por %p50, %p51
      %p53 = scmp.ne.s32.totalorder %s42, %s43
      %p54 = scmp.eq.s32.totalorder %s22, 0
      %p55 = por %p53, %p54
      %p56 = scmp.ne.s32.totalorder %s42, %s43
      %p57 = scmp.eq.s32.totalorder %s23, 7
      %p58 = por %p56, %p57
      %p60 = scmp.ne.s32.totalorder %s43, %s59
      %p61 = scmp.eq.s32.totalorder %s23, 0
      %p62 = por %p60, %p61
      %s64 = sadd.s32 %s63, 1
      %p67 = scmp.eq.s32.totalorder %s17, 7
      %p68 = scmp.ne.s32.totalorder %s63, %s65
      %p69 = scmp.eq.s32.totalorder %s17, 0
      %p70 = por %p68, %p69
      %p71 = scmp.ne.s32.totalorder %s63, %s65
      %p72 = scmp.eq.s32.totalorder %s22, 7
      %p73 = por %p71, %p72
      %p74 = scmp.ne.s32.totalorder %s65, %s66
      %p75 = scmp.eq.s32.totalorder %s22, 0
      %p76 = por %p74, %p75
      %p77 = scmp.ne.s32.totalorder %s65, %s66
      %p78 = scmp.eq.s32.totalorder %s23, 7
      %p79 = por %p77, %p78
      %p81 = scmp.ne.s32.totalorder %s66, %s80
      %p82 = scmp.eq.s32.totalorder %s23, 0
      %p83 = por %p81, %p82
      %s85 = sadd.s32 %s84, 1
      %p88 = scmp.eq.s32.totalorder %s17, 7
      %p89 = scmp.ne.s32.totalorder %s84, %s86
      %p90 = scmp.eq.s32.totalorder %s17, 0
      %p91 = por %p89, %p90
      %p92 = scmp.ne.s32.totalorder %s84, %s86
      %p93 = scmp.eq.s32.totalorder %s22, 7
      %p94 = por %p92, %p93
      %p95 = scmp.ne.s32.totalorder %s86, %s87
      %p96 = scmp.eq.s32.totalorder %s22, 0
      %p97 = por %p95, %p96
      %p98 = scmp.ne.s32.totalorder %s86, %s87
      %p99 = scmp.eq.s32.totalorder %s23, 7
      %p100 = por %p98, %p99
      %p102 = scmp.ne.s32.totalorder %s87, %s101
      %p103 = scmp.eq.s32.totalorder %s23, 0
      %p104 = por %p102, %p103
      %s106 = sadd.s32 %s105, 1
      %p109 = scmp.eq.s32.totalorder %s17, 7
      %p110 = scmp.ne.s32.totalorder %s105, %s107
      %p111 = scmp.eq.s32.totalorder %s17, 0
      %p112 = por %p110, %p111
      %p113 = scmp.ne.s32.totalorder %s105, %s107
      %p114 = scmp.eq.s32.totalorder %s22, 7
      %p115 = por %p113, %p114
      %p116 = scmp.ne.s32.totalorder %s107, %s108
      %p117 = scmp.eq.s32.totalorder %s22, 0
      %p118 = por %p116, %p117
      %p119 = scmp.ne.s32.totalorder %s107, %s108
      %p120 = scmp.eq.s32.totalorder %s23, 7
      %p121 = por %p119, %p120
      %p123 = scmp.ne.s32.totalorder %s108, %s122
      %p124 = scmp.eq.s32.totalorder %s23, 0
      %p125 = por %p123, %p124
      %s127 = sadd.s32 %s126, 1
      %p130 = scmp.eq.s32.totalorder %s17, 7
      %p131 = scmp.ne.s32.totalorder %s126, %s128
      %p132 = scmp.eq.s32.totalorder %s17, 0
      %p133 = por %p131, %p132
      %p134 = scmp.ne.s32.totalorder %s126, %s128
      %p135 = scmp.eq.s32.totalorder %s22, 7
      %p136 = por %p134, %p135
      %p137 = scmp.ne.s32.totalorder %s128, %s129
      %p138 = scmp.eq.s32.totalorder %s22, 0
      %p139 = por %p137, %p138
      %p140 = scmp.ne.s32.totalorder %s128, %s129
      %p141 = scmp.eq.s32.totalorder %s23, 7
      %p142 = por %p140, %p141
      %p144 = scmp.ne.s32.totalorder %s129, %s143
      %p145 = scmp.eq.s32.totalorder %s23, 0
      %p146 = por %p144, %p145
      %s147 = ssub.s32 %s24, %s36
      %s148 = ssub.s32 %s25, %s32
      %s149 = sor.u32 %s147, %s148
      %p150 = scmp.eq.s32.totalorder %s149, 0
      %s152 = sadd.s32 %s151, 1
      %s153 = scalar_select %p150, %s151, %s152
      %p156 = pneg %p150
      %p157 = scmp.eq.s32.totalorder %s17, 7
      %p158 = por %p156, %p157
      %p159 = scmp.ne.s32.totalorder %s151, %s154
      %p160 = scmp.eq.s32.totalorder %s17, 0
      %p161 = por %p159, %p160
      %p162 = scmp.ne.s32.totalorder %s151, %s154
      %p163 = scmp.eq.s32.totalorder %s22, 7
      %p164 = por %p162, %p163
      %p165 = scmp.ne.s32.totalorder %s154, %s155
      %p166 = scmp.eq.s32.totalorder %s22, 0
      %p167 = por %p165, %p166
      %p168 = scmp.ne.s32.totalorder %s154, %s155
      %p169 = scmp.eq.s32.totalorder %s23, 7
      %p170 = por %p168, %p169
      %p172 = scmp.ne.s32.totalorder %s155, %s171
      %p173 = scmp.eq.s32.totalorder %s23, 0
      %p174 = por %p172, %p173
      %p175 = scmp.le.s32.totalorder 1, %s17
      %p176 = scmp.lt.s32.totalorder %s17, 9
      %p177 = pnand %p175, %p176
      %p178 = pneg %p177
      // Predicated region
      $region9: #{tpu_custom_call.1} parent=5 // pred_check
        _
      $region10: #{tpu_custom_call.1} parent=5 // pred_check_branch
        %180 = sbr.rel (%p177) target = $region12
      $region11: #{tpu_custom_call.1} parent=5 // pred_region
        %s181 = ssub.s32 %s17, 1
        // Predicated region
        $region13: #{tpu_custom_call.1} parent=11 // pred_check
          %p182 = pneg %p76
        $region14: #{tpu_custom_call.1} parent=11 // pred_check_branch
          %184 = sbr.rel (%p182) target = $region16
        $region15: #{tpu_custom_call.1} parent=11 // pred_region
          _
        $region16: #{tpu_custom_call.1} parent=11 // pred_fallthru
          _
        // Predicated region
        $region17: #{tpu_custom_call.1} parent=11 // pred_check
          %p185 = pneg %p97
        $region18: #{tpu_custom_call.1} parent=11 // pred_check_branch
          %187 = sbr.rel (%p185) target = $region20
        $region19: #{tpu_custom_call.1} parent=11 // pred_region
          _
        $region20: #{tpu_custom_call.1} parent=11 // pred_fallthru
          _
        // Predicated region
        $region21: #{tpu_custom_call.1} parent=11 // pred_check
          %p188 = pneg %p118
        $region22: #{tpu_custom_call.1} parent=11 // pred_check_branch
          %190 = sbr.rel (%p188) target = $region24
        $region23: #{tpu_custom_call.1} parent=11 // pred_region
          _
        $region24: #{tpu_custom_call.1} parent=11 // pred_fallthru
          _
        // Predicated region
        $region25: #{tpu_custom_call.1} parent=11 // pred_check
          %p191 = pneg %p139
        $region26: #{tpu_custom_call.1} parent=11 // pred_check_branch
          %193 = sbr.rel (%p191) target = $region28
        $region27: #{tpu_custom_call.1} parent=11 // pred_region
          _
        $region28: #{tpu_custom_call.1} parent=11 // pred_fallthru
          _
      $region12: #{tpu_custom_call.1} parent=5 // pred_fallthru
        _
      %p194 = scmp.lt.s32.totalorder %s17, 8
      // Predicated region
      $region29: #{tpu_custom_call.1} parent=5 // pred_check
        %p195 = pneg %p194
      $region30: #{tpu_custom_call.1} parent=5 // pred_check_branch
        %197 = sbr.rel (%p195) target = $region32
      $region31: #{tpu_custom_call.1} parent=5 // pred_region
        // Predicated region
        $region33: #{tpu_custom_call.1} parent=31 // pred_check
          %p198 = pneg %p49
        $region34: #{tpu_custom_call.1} parent=31 // pred_check_branch
          %200 = sbr.rel (%p198) target = $region36
        $region35: #{tpu_custom_call.1} parent=31 // pred_region
          %s201 = sand.u32 %s39, 1
          %s202 = scalar_lea.sflag [#allocation9], %s201
          %s203 = sand.u32 %s39, 1
          %s204 = smul.addr %s203, 512
          %s205 = scalar_lea.vmem [#allocation8], %s204
          %s207 = ssub.s32 8192, 8192
          %208 = vsyncadd %s202, %s207
          %s209 = smul.addr %s24, 64
          %s210 = smul.addr %s209, 128
          %s211 = scalar_lea.hbm %s0, %s210
          %s212 = sshll.u32 %s205, 4
          %s213 = int_to_ptr.vmem [resolvable:$true] %s212
          %218 = dma.hbm_to_vmem [thread:$0]  %s211, 8192, %s213, %s202, 1024, 1024, 64
        $region36: #{tpu_custom_call.1} parent=31 // pred_fallthru
          _
      $region32: #{tpu_custom_call.1} parent=5 // pred_fallthru
        _
      %p219 = scmp.le.s32.totalorder 1, %s17
      %p220 = scmp.lt.s32.totalorder %s17, 9
      %p221 = pnand %p219, %p220
      %p222 = pneg %p221
      // Predicated region
      $region37: #{tpu_custom_call.1} parent=5 // pred_check
        _
      $region38: #{tpu_custom_call.1} parent=5 // pred_check_branch
        %224 = sbr.rel (%p221) target = $region40
      $region39: #{tpu_custom_call.1} parent=5 // pred_region
        %s225 = ssub.s32 %s17, 1
        %s226 = sand.u32 %s42, 1
        %s227 = scalar_lea.sflag [#allocation9], %s226
        %s228 = sand.u32 %s42, 1
        %s229 = smul.addr %s228, 512
        %s230 = scalar_lea.vmem [#allocation8], %s229
        // Predicated region
        $region41: #{tpu_custom_call.1} parent=39 // pred_check
          %p231 = pneg %p55
        $region42: #{tpu_custom_call.1} parent=39 // pred_check_branch
          %233 = sbr.rel (%p231) target = $region44
        $region43: #{tpu_custom_call.1} parent=39 // pred_region
          %234 = dma.done %s227, 8192
        $region44: #{tpu_custom_call.1} parent=39 // pred_fallthru
          _
        %s235 = sand.u32 %s42, 1
        %s236 = scalar_lea.sflag [#allocation9], %s235
        %s237 = sand.u32 %s42, 1
        %s238 = smul.addr %s237, 512
        %s239 = scalar_lea.vmem [#allocation8], %s238
        %p240 = pneg %p55
        %p241 = pneg %p52
        %p242 = pneg %p76
        %p243 = pneg %p73
        %p244 = pneg %p97
        %p245 = pneg %p94
        %p246 = pneg %p118
        %p247 = pneg %p115
        %p248 = pneg %p139
        %p249 = pneg %p136
        %p250 = pneg %p167
        %p251 = pneg %p164
        %s252 = sand.u32 %s154, 1
        %s253 = scalar_lea.sflag [#allocation10], %s252
        %s254 = sand.u32 %s154, 1
        %s255 = smul.addr %s254, 128
        %s256 = scalar_lea.vmem [#allocation11], %s255
        %s257 = smul.u32 2, %s27
        %p259 = scmp.eq.s32.totalorder %s27, 0
        // Predicated region
        $region45: #{tpu_custom_call.1} parent=39 // pred_check
          %p260 = pneg %p259
        $region46: #{tpu_custom_call.1} parent=39 // pred_check_branch
          %262 = sbr.rel (%p260) target = $region48
        $region47: #{tpu_custom_call.1} parent=39 // pred_region
          %v263 = vld [vmem:[%s2] sm:$0xff]
          %v264 = vld [vmem:[%s2 + $0x8] sm:$0xff]
          %v265 = vld [vmem:[%s4] sm:$0xff]
          %v266 = vld [vmem:[%s4 + $0x8] sm:$0xff]
          %v267 = vld [vmem:[%s4 + $0x10] sm:$0xff]
          %v268 = vld [vmem:[%s4 + $0x18] sm:$0xff]
          %v269 = vld [vmem:[%s4 + $0x20] sm:$0xff]
          %v270 = vld [vmem:[%s4 + $0x28] sm:$0xff]
          %v271 = vld [vmem:[%s4 + $0x30] sm:$0xff]
          %v272 = vld [vmem:[%s4 + $0x38] sm:$0xff]
          loop: start=0, step=1, limit=2
          $region49: #{tpu_custom_call.1} parent=47 // loop_pre_header
            _
          $region50: #{tpu_custom_call.1} parent=47 // loop_header
            %s274 = sphi 0, %s278
            %p275 = scmp.ge.s32.totalorder %s274, 2
          $region51: #{tpu_custom_call.1} parent=47 // loop_header_branch
            %277 = sbr.rel (%p275) target = $region55
          $region52: #{tpu_custom_call.1} parent=47 // loop_body
            %s279 = smul.u32 %s274, 512
            %s280 = sshra.s32 %s279, 7
            %s281 = sand.u32 %s279, 127
            %s282 = smul.addr %s280, 8
            %s283 = scalar_lea.vmem %s230, %s282 [#allocation8]
            %v284 = vld [vmem:[%s283] sm:$0xff]
            %v285 = vld [vmem:[%s283 + $0x8] sm:$0xff]
            %v286 = vld [vmem:[%s283 + $0x10] sm:$0xff]
            %v287 = vld [vmem:[%s283 + $0x18] sm:$0xff]
            %v288 = vld [vmem:[%s283 + $0x40] sm:$0xff]
            %v289 = vld [vmem:[%s283 + $0x48] sm:$0xff]
            %v290 = vld [vmem:[%s283 + $0x50] sm:$0xff]
            %v291 = vld [vmem:[%s283 + $0x58] sm:$0xff]
            %v292 = vld [vmem:[%s283 + $0x80] sm:$0xff]
            %v293 = vld [vmem:[%s283 + $0x88] sm:$0xff]
            %v294 = vld [vmem:[%s283 + $0x90] sm:$0xff]
            %v295 = vld [vmem:[%s283 + $0x98] sm:$0xff]
            %v296 = vld [vmem:[%s283 + $0xc0] sm:$0xff]
            %v297 = vld [vmem:[%s283 + $0xc8] sm:$0xff]
            %v298 = vld [vmem:[%s283 + $0xd0] sm:$0xff]
            %v299 = vld [vmem:[%s283 + $0xd8] sm:$0xff]
            %v300 = vld [vmem:[%s283 + $0x100] sm:$0xff]
            %v301 = vld [vmem:[%s283 + $0x108] sm:$0xff]
            %v302 = vld [vmem:[%s283 + $0x110] sm:$0xff]
            %v303 = vld [vmem:[%s283 + $0x118] sm:$0xff]
            %v304 = vld [vmem:[%s283 + $0x140] sm:$0xff]
            %v305 = vld [vmem:[%s283 + $0x148] sm:$0xff]
            %v306 = vld [vmem:[%s283 + $0x150] sm:$0xff]
            %v307 = vld [vmem:[%s283 + $0x158] sm:$0xff]
            %v308 = vld [vmem:[%s283 + $0x180] sm:$0xff]
            %v309 = vld [vmem:[%s283 + $0x188] sm:$0xff]
            %v310 = vld [vmem:[%s283 + $0x190] sm:$0xff]
            %v311 = vld [vmem:[%s283 + $0x198] sm:$0xff]
            %v312 = vld [vmem:[%s283 + $0x1c0] sm:$0xff]
            %v313 = vld [vmem:[%s283 + $0x1c8] sm:$0xff]
            %v314 = vld [vmem:[%s283 + $0x1d0] sm:$0xff]
            %v315 = vld [vmem:[%s283 + $0x1d8] sm:$0xff]
            %v316 = vpack.c.bf16 %v288, %v284
            %v317 = vpack.c.bf16 %v289, %v285
            %v318 = vpack.c.bf16 %v290, %v286
            %v319 = vpack.c.bf16 %v291, %v287
            %v320 = vpack.c.bf16 %v296, %v292
            %v321 = vpack.c.bf16 %v297, %v293
            %v322 = vpack.c.bf16 %v298, %v294
            %v323 = vpack.c.bf16 %v299, %v295
            %v324 = vpack.c.bf16 %v304, %v300
            %v325 = vpack.c.bf16 %v305, %v301
            %v326 = vpack.c.bf16 %v306, %v302
            %v327 = vpack.c.bf16 %v307, %v303
            %v328 = vpack.c.bf16 %v312, %v308
            %v329 = vpack.c.bf16 %v313, %v309
            %v330 = vpack.c.bf16 %v314, %v310
            %v331 = vpack.c.bf16 %v315, %v311
            %v332 = vld [vmem:[%s1] sm:$0xf]
            %v333 = vld [vmem:[%s1 + $0x4] sm:$0xf]
            %335 = vset.pattern.permute.xlu0 0
            %336 = vperm.xlu0 %335, %v263
            %v337 = vpop.permute.xlu0 %336
            %340 = vset.pattern.permute.xlu0 0
            %341 = vperm.xlu0 %340, %v264
            %v342 = vpop.permute.xlu0 %341
            %v346 = vunpack.c.l.b16 %v332
            %v347 = vunpack.c.l.b16 %v333
            %v348 = vpack.c.b16 %v347, %v346
            %vm349 = vcmask 523264
            %v351 = vsel %vm349, %v348, 0
            %353 = vmatprep.subr.bf16.mxu0 0
            %354 = vmatpush1.bf16.msra.mxu0 0
            %355 = vmatprep.subr.bf16.mxu0 0
            %356 = vmatpush1.bf16.msra.mxu0 0
            %357 = vmatprep.subr.bf16.mxu0 0
            %358 = vmatpush1.bf16.msra.mxu0 0
            %359 = vmatprep.subr.bf16.mxu0 0
            %360 = vmatpush1.bf16.msra.mxu0 0
            %361 = vmatprep.subr.bf16.mxu0 %v329
            %362 = vmatpush1.bf16.msra.mxu0 %v328
            %363 = vmatprep.subr.bf16.mxu0 %v325
            %364 = vmatpush1.bf16.msra.mxu0 %v324
            %365 = vmatprep.subr.bf16.mxu0 %v321
            %366 = vmatpush1.bf16.msra.mxu0 %v320
            %367 = vmatprep.subr.bf16.mxu0 %v317
            %368 = vmatpush1.bf16.msra.mxu0 %v316
            %369 = vmatprep.subr.bf16.mxu0 0
            %370 = vmatpush2.bf16.msra.mxu0 0
            %371 = vmatprep.subr.bf16.mxu0 0
            %372 = vmatpush2.bf16.msra.mxu0 0
            %373 = vmatprep.subr.bf16.mxu0 0
            %374 = vmatpush2.bf16.msra.mxu0 0
            %375 = vmatprep.subr.bf16.mxu0 0
            %376 = vmatpush2.bf16.msra.mxu0 0
            %377 = vmatprep.subr.bf16.mxu0 0
            %378 = vmatpush2.bf16.msra.mxu0 0
            %379 = vmatprep.subr.bf16.mxu0 0
            %380 = vmatpush2.bf16.msra.mxu0 0
            %381 = vmatprep.subr.bf16.mxu0 0
            %382 = vmatpush2.bf16.msra.mxu0 0
            %383 = vmatprep.subr.bf16.mxu0 0
            %384 = vmatpush2.bf16.msra.mxu0 0
            %385 = vmatprep.mubr.bf16.mxu0 0
            %386 = vmatmul.mubr.bf16.gmra.mxu0 %v351
            %v387 = vpop.f32.mrf.mxu0
            %v388 = vadd.f32 %v337, %v387
            %v389 = vpop.f32.mrf.mxu0
            %v390 = vadd.f32 %v337, %v389
            %v391 = vpop.f32.mrf.mxu0
            %v392 = vadd.f32 %v342, %v391
            %v393 = vpop.f32.mrf.mxu0
            %v394 = vadd.f32 %v342, %v393
            %395 = vdwg.mxu0
            %396 = vmatprep.subr.bf16.mxu0 0
            %397 = vmatpush1.bf16.msra.mxu0 0
            %398 = vmatprep.subr.bf16.mxu0 0
            %399 = vmatpush1.bf16.msra.mxu0 0
            %400 = vmatprep.subr.bf16.mxu0 0
            %401 = vmatpush1.bf16.msra.mxu0 0
            %402 = vmatprep.subr.bf16.mxu0 0
            %403 = vmatpush1.bf16.msra.mxu0 0
            %404 = vmatprep.subr.bf16.mxu0 %v331
            %405 = vmatpush1.bf16.msra.mxu0 %v330
            %406 = vmatprep.subr.bf16.mxu0 %v327
            %407 = vmatpush1.bf16.msra.mxu0 %v326
            %408 = vmatprep.subr.bf16.mxu0 %v323
            %409 = vmatpush1.bf16.msra.mxu0 %v322
            %410 = vmatprep.subr.bf16.mxu0 %v319
            %411 = vmatpush1.bf16.msra.mxu0 %v318
            %412 = vmatprep.subr.bf16.mxu0 0
            %413 = vmatpush2.bf16.msra.mxu0 0
            %414 = vmatprep.subr.bf16.mxu0 0
            %415 = vmatpush2.bf16.msra.mxu0 0
            %416 = vmatprep.subr.bf16.mxu0 0
            %417 = vmatpush2.bf16.msra.mxu0 0
            %418 = vmatprep.subr.bf16.mxu0 0
            %419 = vmatpush2.bf16.msra.mxu0 0
            %420 = vmatprep.subr.bf16.mxu0 0
            %421 = vmatpush2.bf16.msra.mxu0 0
            %422 = vmatprep.subr.bf16.mxu0 0
            %423 = vmatpush2.bf16.msra.mxu0 0
            %424 = vmatprep.subr.bf16.mxu0 0
            %425 = vmatpush2.bf16.msra.mxu0 0
            %426 = vmatprep.subr.bf16.mxu0 0
            %427 = vmatpush2.bf16.msra.mxu0 0
            %428 = vmatprep.mubr.bf16.mxu0 0
            %429 = vmatmul.mubr.bf16.gmra.mxu0 %v351
            %v430 = vpop.f32.mrf.mxu0
            %v431 = vadd.f32 %v337, %v430
            %v432 = vpop.f32.mrf.mxu0
            %v433 = vadd.f32 %v337, %v432
            %v434 = vpop.f32.mrf.mxu0
            %v435 = vadd.f32 %v342, %v434
            %v436 = vpop.f32.mrf.mxu0
            %v437 = vadd.f32 %v342, %v436
            %438 = vdwg.mxu0
            %v439 = vld [vmem:[%s3] sm:$0xf]
            %v440 = vld [vmem:[%s3 + $0x4] sm:$0xf]
            %v441 = vld [vmem:[%s3 + $0x8] sm:$0xf]
            %v442 = vld [vmem:[%s3 + $0xc] sm:$0xf]
            %v443 = vld [vmem:[%s3 + $0x10] sm:$0xf]
            %v444 = vld [vmem:[%s3 + $0x14] sm:$0xf]
            %v445 = vld [vmem:[%s3 + $0x18] sm:$0xf]
            %v446 = vld [vmem:[%s3 + $0x1c] sm:$0xf]
            %448 = vset.pattern.permute.xlu0 0
            %449 = vperm.xlu0 %448, %v265
            %v450 = vpop.permute.xlu0 %449
            %453 = vset.pattern.permute.xlu0 0
            %454 = vperm.xlu0 %453, %v266
            %v455 = vpop.permute.xlu0 %454
            %458 = vset.pattern.permute.xlu0 0
            %459 = vperm.xlu0 %458, %v267
            %v460 = vpop.permute.xlu0 %459
            %463 = vset.pattern.permute.xlu0 0
            %464 = vperm.xlu0 %463, %v268
            %v465 = vpop.permute.xlu0 %464
            %468 = vset.pattern.permute.xlu0 0
            %469 = vperm.xlu0 %468, %v269
            %v470 = vpop.permute.xlu0 %469
            %473 = vset.pattern.permute.xlu0 0
            %474 = vperm.xlu0 %473, %v270
            %v475 = vpop.permute.xlu0 %474
            %478 = vset.pattern.permute.xlu0 0
            %479 = vperm.xlu0 %478, %v271
            %v480 = vpop.permute.xlu0 %479
            %483 = vset.pattern.permute.xlu0 0
            %484 = vperm.xlu0 %483, %v272
            %v485 = vpop.permute.xlu0 %484
            %v495 = vunpack.c.l.b16 %v439
            %v496 = vunpack.c.l.b16 %v440
            %v497 = vunpack.c.l.b16 %v441
            %v498 = vunpack.c.l.b16 %v442
            %v499 = vunpack.c.l.b16 %v443
            %v500 = vunpack.c.l.b16 %v444
            %v501 = vunpack.c.l.b16 %v445
            %v502 = vunpack.c.l.b16 %v446
            %v503 = vpack.c.b16 %v496, %v495
            %v504 = vpack.c.b16 %v498, %v497
            %v505 = vpack.c.b16 %v500, %v499
            %v506 = vpack.c.b16 %v502, %v501
            %v508 = vsel %vm349, %v503, 0
            %v511 = vsel %vm349, %v504, 0
            %v514 = vsel %vm349, %v505, 0
            %v517 = vsel %vm349, %v506, 0
            %519 = vmatprep.subr.bf16.mxu0 0
            %520 = vmatpush1.bf16.msra.mxu0 0
            %521 = vmatprep.subr.bf16.mxu0 0
            %522 = vmatpush1.bf16.msra.mxu0 0
            %523 = vmatprep.subr.bf16.mxu0 0
            %524 = vmatpush1.bf16.msra.mxu0 0
            %525 = vmatprep.subr.bf16.mxu0 0
            %526 = vmatpush1.bf16.msra.mxu0 0
            %527 = vmatprep.subr.bf16.mxu0 %v329
            %528 = vmatpush1.bf16.msra.mxu0 %v328
            %529 = vmatprep.subr.bf16.mxu0 %v325
            %530 = vmatpush1.bf16.msra.mxu0 %v324
            %531 = vmatprep.subr.bf16.mxu0 %v321
            %532 = vmatpush1.bf16.msra.mxu0 %v320
            %533 = vmatprep.subr.bf16.mxu0 %v317
            %534 = vmatpush1.bf16.msra.mxu0 %v316
            %535 = vmatprep.subr.bf16.mxu0 0
            %536 = vmatpush2.bf16.msra.mxu0 0
            %537 = vmatprep.subr.bf16.mxu0 0
            %538 = vmatpush2.bf16.msra.mxu0 0
            %539 = vmatprep.subr.bf16.mxu0 0
            %540 = vmatpush2.bf16.msra.mxu0 0
            %541 = vmatprep.subr.bf16.mxu0 0
            %542 = vmatpush2.bf16.msra.mxu0 0
            %543 = vmatprep.subr.bf16.mxu0 0
            %544 = vmatpush2.bf16.msra.mxu0 0
            %545 = vmatprep.subr.bf16.mxu0 0
            %546 = vmatpush2.bf16.msra.mxu0 0
            %547 = vmatprep.subr.bf16.mxu0 0
            %548 = vmatpush2.bf16.msra.mxu0 0
            %549 = vmatprep.subr.bf16.mxu0 0
            %550 = vmatpush2.bf16.msra.mxu0 0
            %551 = vmatprep.mubr.bf16.mxu0 0
            %552 = vmatmul.mubr.bf16.gmra.mxu0 %v508
            %v553 = vpop.f32.mrf.mxu0
            %v554 = vadd.f32 %v450, %v553
            %v555 = vpop.f32.mrf.mxu0
            %v556 = vadd.f32 %v450, %v555
            %v557 = vpop.f32.mrf.mxu0
            %v558 = vadd.f32 %v455, %v557
            %v559 = vpop.f32.mrf.mxu0
            %v560 = vadd.f32 %v455, %v559
            %561 = vmatprep.mubr.bf16.mxu0 0
            %562 = vmatmul.mubr.bf16.gmra.mxu0 %v511
            %v563 = vpop.f32.mrf.mxu0
            %v564 = vadd.f32 %v460, %v563
            %v565 = vpop.f32.mrf.mxu0
            %v566 = vadd.f32 %v460, %v565
            %v567 = vpop.f32.mrf.mxu0
            %v568 = vadd.f32 %v465, %v567
            %v569 = vpop.f32.mrf.mxu0
            %v570 = vadd.f32 %v465, %v569
            %571 = vmatprep.mubr.bf16.mxu0 0
            %572 = vmatmul.mubr.bf16.gmra.mxu0 %v514
            %v573 = vpop.f32.mrf.mxu0
            %v574 = vadd.f32 %v470, %v573
            %v575 = vpop.f32.mrf.mxu0
            %v576 = vadd.f32 %v470, %v575
            %v577 = vpop.f32.mrf.mxu0
            %v578 = vadd.f32 %v475, %v577
            %v579 = vpop.f32.mrf.mxu0
            %v580 = vadd.f32 %v475, %v579
            %581 = vmatprep.mubr.bf16.mxu0 0
            %582 = vmatmul.mubr.bf16.gmra.mxu0 %v517
            %v583 = vpop.f32.mrf.mxu0
            %v584 = vadd.f32 %v480, %v583
            %v585 = vpop.f32.mrf.mxu0
            %v586 = vadd.f32 %v480, %v585
            %v587 = vpop.f32.mrf.mxu0
            %v588 = vadd.f32 %v485, %v587
            %v589 = vpop.f32.mrf.mxu0
            %v590 = vadd.f32 %v485, %v589
            %591 = vdwg.mxu0
            %592 = vmatprep.subr.bf16.mxu0 0
            %593 = vmatpush1.bf16.msra.mxu0 0
            %594 = vmatprep.subr.bf16.mxu0 0
            %595 = vmatpush1.bf16.msra.mxu0 0
            %596 = vmatprep.subr.bf16.mxu0 0
            %597 = vmatpush1.bf16.msra.mxu0 0
            %598 = vmatprep.subr.bf16.mxu0 0
            %599 = vmatpush1.bf16.msra.mxu0 0
            %600 = vmatprep.subr.bf16.mxu0 %v331
            %601 = vmatpush1.bf16.msra.mxu0 %v330
            %602 = vmatprep.subr.bf16.mxu0 %v327
            %603 = vmatpush1.bf16.msra.mxu0 %v326
            %604 = vmatprep.subr.bf16.mxu0 %v323
            %605 = vmatpush1.bf16.msra.mxu0 %v322
            %606 = vmatprep.subr.bf16.mxu0 %v319
            %607 = vmatpush1.bf16.msra.mxu0 %v318
            %608 = vmatprep.subr.bf16.mxu0 0
            %609 = vmatpush2.bf16.msra.mxu0 0
            %610 = vmatprep.subr.bf16.mxu0 0
            %611 = vmatpush2.bf16.msra.mxu0 0
            %612 = vmatprep.subr.bf16.mxu0 0
            %613 = vmatpush2.bf16.msra.mxu0 0
            %614 = vmatprep.subr.bf16.mxu0 0
            %615 = vmatpush2.bf16.msra.mxu0 0
            %616 = vmatprep.subr.bf16.mxu0 0
            %617 = vmatpush2.bf16.msra.mxu0 0
            %618 = vmatprep.subr.bf16.mxu0 0
            %619 = vmatpush2.bf16.msra.mxu0 0
            %620 = vmatprep.subr.bf16.mxu0 0
            %621 = vmatpush2.bf16.msra.mxu0 0
            %622 = vmatprep.subr.bf16.mxu0 0
            %623 = vmatpush2.bf16.msra.mxu0 0
            %624 = vmatprep.mubr.bf16.mxu0 0
            %625 = vmatmul.mubr.bf16.gmra.mxu0 %v508
            %v626 = vpop.f32.mrf.mxu0
            %v627 = vadd.f32 %v450, %v626
            %v628 = vpop.f32.mrf.mxu0
            %v629 = vadd.f32 %v450, %v628
            %v630 = vpop.f32.mrf.mxu0
            %v631 = vadd.f32 %v455, %v630
            %v632 = vpop.f32.mrf.mxu0
            %v633 = vadd.f32 %v455, %v632
            %634 = vmatprep.mubr.bf16.mxu0 0
            %635 = vmatmul.mubr.bf16.gmra.mxu0 %v511
            %v636 = vpop.f32.mrf.mxu0
            %v637 = vadd.f32 %v460, %v636
            %v638 = vpop.f32.mrf.mxu0
            %v639 = vadd.f32 %v460, %v638
            %v640 = vpop.f32.mrf.mxu0
            %v641 = vadd.f32 %v465, %v640
            %v642 = vpop.f32.mrf.mxu0
            %v643 = vadd.f32 %v465, %v642
            %644 = vmatprep.mubr.bf16.mxu0 0
            %645 = vmatmul.mubr.bf16.gmra.mxu0 %v514
            %v646 = vpop.f32.mrf.mxu0
            %v647 = vadd.f32 %v470, %v646
            %v648 = vpop.f32.mrf.mxu0
            %v649 = vadd.f32 %v470, %v648
            %v650 = vpop.f32.mrf.mxu0
            %v651 = vadd.f32 %v475, %v650
            %v652 = vpop.f32.mrf.mxu0
            %v653 = vadd.f32 %v475, %v652
            %654 = vmatprep.mubr.bf16.mxu0 0
            %655 = vmatmul.mubr.bf16.gmra.mxu0 %v517
            %v656 = vpop.f32.mrf.mxu0
            %v657 = vadd.f32 %v480, %v656
            %v658 = vpop.f32.mrf.mxu0
            %v659 = vadd.f32 %v480, %v658
            %v660 = vpop.f32.mrf.mxu0
            %v661 = vadd.f32 %v485, %v660
            %v662 = vpop.f32.mrf.mxu0
            %v663 = vadd.f32 %v485, %v662
            %664 = vdwg.mxu0
            %665 = vxpose.xlu0.b32.start [1/16] %v388, 128
            %666 = vxpose.xlu0.b32.cont [2/16] 0.0, 128
            %667 = vxpose.xlu0.b32.cont [3/16] 0.0, 128
            %668 = vxpose.xlu0.b32.cont [4/16] 0.0, 128
            %669 = vxpose.xlu0.b32.cont [5/16] 0.0, 128
            %670 = vxpose.xlu0.b32.cont [6/16] 0.0, 128
            %671 = vxpose.xlu0.b32.cont [7/16] 0.0, 128
            %672 = vxpose.xlu0.b32.cont [8/16] 0.0, 128
            %673 = vxpose.xlu0.b32.cont [9/16] 0.0, 128
            %674 = vxpose.xlu0.b32.cont [10/16] 0.0, 128
            %675 = vxpose.xlu0.b32.cont [11/16] 0.0, 128
            %676 = vxpose.xlu0.b32.cont [12/16] 0.0, 128
            %677 = vxpose.xlu0.b32.cont [13/16] 0.0, 128
            %678 = vxpose.xlu0.b32.cont [14/16] 0.0, 128
            %679 = vxpose.xlu0.b32.cont [15/16] 0.0, 128
            %680 = vxpose.xlu0.b32.end [16/16] 0.0, 128
            %v681 = vpop.trf.xlu0
            %v682 = vpop.trf.xlu0
            %v683 = vpop.trf.xlu0
            %v684 = vpop.trf.xlu0
            %v685 = vpop.trf.xlu0
            %v686 = vpop.trf.xlu0
            %v687 = vpop.trf.xlu0
            %v688 = vpop.trf.xlu0
            %v689 = vpop.trf.xlu0
            %v690 = vpop.trf.xlu0
            %v691 = vpop.trf.xlu0
            %v692 = vpop.trf.xlu0
            %v693 = vpop.trf.xlu0
            %v694 = vpop.trf.xlu0
            %v695 = vpop.trf.xlu0
            %v696 = vpop.trf.xlu0
            %697 = vxpose.xlu0.b32.start [1/16] %v390, 128
            %698 = vxpose.xlu0.b32.cont [2/16] 0.0, 128
            %699 = vxpose.xlu0.b32.cont [3/16] 0.0, 128
            %700 = vxpose.xlu0.b32.cont [4/16] 0.0, 128
            %701 = vxpose.xlu0.b32.cont [5/16] 0.0, 128
            %702 = vxpose.xlu0.b32.cont [6/16] 0.0, 128
            %703 = vxpose.xlu0.b32.cont [7/16] 0.0, 128
            %704 = vxpose.xlu0.b32.cont [8/16] 0.0, 128
            %705 = vxpose.xlu0.b32.cont [9/16] 0.0, 128
            %706 = vxpose.xlu0.b32.cont [10/16] 0.0, 128
            %707 = vxpose.xlu0.b32.cont [11/16] 0.0, 128
            %708 = vxpose.xlu0.b32.cont [12/16] 0.0, 128
            %709 = vxpose.xlu0.b32.cont [13/16] 0.0, 128
            %710 = vxpose.xlu0.b32.cont [14/16] 0.0, 128
            %711 = vxpose.xlu0.b32.cont [15/16] 0.0, 128
            %712 = vxpose.xlu0.b32.end [16/16] 0.0, 128
            %v713 = vpop.trf.xlu0
            %v714 = vpop.trf.xlu0
            %v715 = vpop.trf.xlu0
            %v716 = vpop.trf.xlu0
            %v717 = vpop.trf.xlu0
            %v718 = vpop.trf.xlu0
            %v719 = vpop.trf.xlu0
            %v720 = vpop.trf.xlu0
            %v721 = vpop.trf.xlu0
            %v722 = vpop.trf.xlu0
            %v723 = vpop.trf.xlu0
            %v724 = vpop.trf.xlu0
            %v725 = vpop.trf.xlu0
            %v726 = vpop.trf.xlu0
            %v727 = vpop.trf.xlu0
            %v728 = vpop.trf.xlu0
            %729 = vxpose.xlu0.b32.start [1/16] %v431, 128
            %730 = vxpose.xlu0.b32.cont [2/16] 0.0, 128
            %731 = vxpose.xlu0.b32.cont [3/16] 0.0, 128
            %732 = vxpose.xlu0.b32.cont [4/16] 0.0, 128
            %733 = vxpose.xlu0.b32.cont [5/16] 0.0, 128
            %734 = vxpose.xlu0.b32.cont [6/16] 0.0, 128
            %735 = vxpose.xlu0.b32.cont [7/16] 0.0, 128
            %736 = vxpose.xlu0.b32.cont [8/16] 0.0, 128
            %737 = vxpose.xlu0.b32.cont [9/16] 0.0, 128
            %738 = vxpose.xlu0.b32.cont [10/16] 0.0, 128
            %739 = vxpose.xlu0.b32.cont [11/16] 0.0, 128
            %740 = vxpose.xlu0.b32.cont [12/16] 0.0, 128
            %741 = vxpose.xlu0.b32.cont [13/16] 0.0, 128
            %742 = vxpose.xlu0.b32.cont [14/16] 0.0, 128
            %743 = vxpose.xlu0.b32.cont [15/16] 0.0, 128
            %744 = vxpose.xlu0.b32.end [16/16] 0.0, 128
            %v745 = vpop.trf.xlu0
            %v746 = vpop.trf.xlu0
            %v747 = vpop.trf.xlu0
            %v748 = vpop.trf.xlu0
            %v749 = vpop.trf.xlu0
            %v750 = vpop.trf.xlu0
            %v751 = vpop.trf.xlu0
            %v752 = vpop.trf.xlu0
            %v753 = vpop.trf.xlu0
            %v754 = vpop.trf.xlu0
            %v755 = vpop.trf.xlu0
            %v756 = vpop.trf.xlu0
            %v757 = vpop.trf.xlu0
            %v758 = vpop.trf.xlu0
            %v759 = vpop.trf.xlu0
            %v760 = vpop.trf.xlu0
            %761 = vxpose.xlu0.b32.start [1/16] %v433, 128
            %762 = vxpose.xlu0.b32.cont [2/16] 0.0, 128
            %763 = vxpose.xlu0.b32.cont [3/16] 0.0, 128
            %764 = vxpose.xlu0.b32.cont [4/16] 0.0, 128
            %765 = vxpose.xlu0.b32.cont [5/16] 0.0, 128
            %766 = vxpose.xlu0.b32.cont [6/16] 0.0, 128
            %767 = vxpose.xlu0.b32.cont [7/16] 0.0, 128
            %768 = vxpose.xlu0.b32.cont [8/16] 0.0, 128
            %769 = vxpose.xlu0.b32.cont [9/16] 0.0, 128
            %770 = vxpose.xlu0.b32.cont [10/16] 0.0, 128
            %771 = vxpose.xlu0.b32.cont [11/16] 0.0, 128
            %772 = vxpose.xlu0.b32.cont [12/16] 0.0, 128
            %773 = vxpose.xlu0.b32.cont [13/16] 0.0, 128
            %774 = vxpose.xlu0.b32.cont [14/16] 0.0, 128
            %775 = vxpose.xlu0.b32.cont [15/16] 0.0, 128
            %776 = vxpose.xlu0.b32.end [16/16] 0.0, 128
            %v777 = vpop.trf.xlu0
            %v778 = vpop.trf.xlu0
            %v779 = vpop.trf.xlu0
            %v780 = vpop.trf.xlu0
            %v781 = vpop.trf.xlu0
            %v782 = vpop.trf.xlu0
            %v783 = vpop.trf.xlu0
            %v784 = vpop.trf.xlu0
            %v785 = vpop.trf.xlu0
            %v786 = vpop.trf.xlu0
            %v787 = vpop.trf.xlu0
            %v788 = vpop.trf.xlu0
            %v789 = vpop.trf.xlu0
            %v790 = vpop.trf.xlu0
            %v791 = vpop.trf.xlu0
            %v792 = vpop.trf.xlu0
            %v793 = vpack.c.bf16 %v682, %v681
            %v794 = vpack.c.bf16 %v684, %v683
            %v795 = vpack.c.bf16 %v686, %v685
            %v796 = vpack.c.bf16 %v688, %v687
            %v797 = vpack.c.bf16 %v690, %v689
            %v798 = vpack.c.bf16 %v692, %v691
            %v799 = vpack.c.bf16 %v694, %v693
            %v800 = vpack.c.bf16 %v696, %v695
            %v801 = vpack.c.bf16 %v714, %v713
            %v802 = vpack.c.bf16 %v716, %v715
            %v803 = vpack.c.bf16 %v718, %v717
            %v804 = vpack.c.bf16 %v720, %v719
            %v805 = vpack.c.bf16 %v722, %v721
            %v806 = vpack.c.bf16 %v724, %v723
            %v807 = vpack.c.bf16 %v726, %v725
            %v808 = vpack.c.bf16 %v728, %v727
            %v809 = vpack.c.bf16 %v746, %v745
            %v810 = vpack.c.bf16 %v748, %v747
            %v811 = vpack.c.bf16 %v750, %v749
            %v812 = vpack.c.bf16 %v752, %v751
            %v813 = vpack.c.bf16 %v754, %v753
            %v814 = vpack.c.bf16 %v756, %v755
            %v815 = vpack.c.bf16 %v758, %v757
            %v816 = vpack.c.bf16 %v760, %v759
            %v817 = vpack.c.bf16 %v778, %v777
            %v818 = vpack.c.bf16 %v780, %v779
            %v819 = vpack.c.bf16 %v782, %v781
            %v820 = vpack.c.bf16 %v784, %v783
            %v821 = vpack.c.bf16 %v786, %v785
            %v822 = vpack.c.bf16 %v788, %v787
            %v823 = vpack.c.bf16 %v790, %v789
            %v824 = vpack.c.bf16 %v792, %v791
            %v857 = vunpack.c.l.b16 %v793
            %v858 = vunpack.c.h.b16 %v793
            %v859 = vunpack.c.l.b16 %v794
            %v860 = vunpack.c.h.b16 %v794
            %v861 = vunpack.c.l.b16 %v795
            %v862 = vunpack.c.h.b16 %v795
            %v863 = vunpack.c.l.b16 %v796
            %v864 = vunpack.c.h.b16 %v796
            %v865 = vunpack.c.l.b16 %v797
            %v866 = vunpack.c.h.b16 %v797
            %v867 = vunpack.c.l.b16 %v798
            %v868 = vunpack.c.h.b16 %v798
            %v869 = vunpack.c.l.b16 %v799
            %v870 = vunpack.c.h.b16 %v799
            %v871 = vunpack.c.l.b16 %v800
            %v872 = vunpack.c.h.b16 %v800
            %v873 = vunpack.c.l.b16 %v801
            %v874 = vunpack.c.h.b16 %v801
            %v875 = vunpack.c.l.b16 %v802
            %v876 = vunpack.c.h.b16 %v802
            %v877 = vunpack.c.l.b16 %v803
            %v878 = vunpack.c.h.b16 %v803
            %v879 = vunpack.c.l.b16 %v804
            %v880 = vunpack.c.h.b16 %v804
            %v881 = vunpack.c.l.b16 %v805
            %v882 = vunpack.c.h.b16 %v805
            %v883 = vunpack.c.l.b16 %v806
            %v884 = vunpack.c.h.b16 %v806
            %v885 = vunpack.c.l.b16 %v807
            %v886 = vunpack.c.h.b16 %v807
            %v887 = vunpack.c.l.b16 %v808
            %v888 = vunpack.c.h.b16 %v808
            %v889 = vunpack.c.l.b16 %v809
            %v890 = vunpack.c.h.b16 %v809
            %v891 = vunpack.c.l.b16 %v810
            %v892 = vunpack.c.h.b16 %v810
            %v893 = vunpack.c.l.b16 %v811
            %v894 = vunpack.c.h.b16 %v811
            %v895 = vunpack.c.l.b16 %v812
            %v896 = vunpack.c.h.b16 %v812
            %v897 = vunpack.c.l.b16 %v813
            %v898 = vunpack.c.h.b16 %v813
            %v899 = vunpack.c.l.b16 %v814
            %v900 = vunpack.c.h.b16 %v814
            %v901 = vunpack.c.l.b16 %v815
            %v902 = vunpack.c.h.b16 %v815
            %v903 = vunpack.c.l.b16 %v816
            %v904 = vunpack.c.h.b16 %v816
            %v905 = vunpack.c.l.b16 %v817
            %v906 = vunpack.c.h.b16 %v817
            %v907 = vunpack.c.l.b16 %v818
            %v908 = vunpack.c.h.b16 %v818
            %v909 = vunpack.c.l.b16 %v819
            %v910 = vunpack.c.h.b16 %v819
            %v911 = vunpack.c.l.b16 %v820
            %v912 = vunpack.c.h.b16 %v820
            %v913 = vunpack.c.l.b16 %v821
            %v914 = vunpack.c.h.b16 %v821
            %v915 = vunpack.c.l.b16 %v822
            %v916 = vunpack.c.h.b16 %v822
            %v917 = vunpack.c.l.b16 %v823
            %v918 = vunpack.c.h.b16 %v823
            %v919 = vunpack.c.l.b16 %v824
            %v920 = vunpack.c.h.b16 %v824
            %v921 = vpack.c.b16 %v857, %v857
            %v922 = vpack.c.b16 %v858, %v858
            %v923 = vpack.c.b16 %v859, %v859
            %v924 = vpack.c.b16 %v860, %v860
            %v925 = vpack.c.b16 %v861, %v861
            %v926 = vpack.c.b16 %v862, %v862
            %v927 = vpack.c.b16 %v863, %v863
            %v928 = vpack.c.b16 %v864, %v864
            %v929 = vpack.c.b16 %v865, %v865
            %v930 = vpack.c.b16 %v866, %v866
            %v931 = vpack.c.b16 %v867, %v867
            %v932 = vpack.c.b16 %v868, %v868
            %v933 = vpack.c.b16 %v869, %v869
            %v934 = vpack.c.b16 %v870, %v870
            %v935 = vpack.c.b16 %v871, %v871
            %v936 = vpack.c.b16 %v872, %v872
            %v937 = vpack.c.b16 %v873, %v873
            %v938 = vpack.c.b16 %v874, %v874
            %v939 = vpack.c.b16 %v875, %v875
            %v940 = vpack.c.b16 %v876, %v876
            %v941 = vpack.c.b16 %v877, %v877
            %v942 = vpack.c.b16 %v878, %v878
            %v943 = vpack.c.b16 %v879, %v879
            %v944 = vpack.c.b16 %v880, %v880
            %v945 = vpack.c.b16 %v881, %v881
            %v946 = vpack.c.b16 %v882, %v882
            %v947 = vpack.c.b16 %v883, %v883
            %v948 = vpack.c.b16 %v884, %v884
            %v949 = vpack.c.b16 %v885, %v885
            %v950 = vpack.c.b16 %v886, %v886
            %v951 = vpack.c.b16 %v887, %v887
            %v952 = vpack.c.b16 %v888, %v888
            %v953 = vpack.c.b16 %v889, %v889
            %v954 = vpack.c.b16 %v890, %v890
            %v955 = vpack.c.b16 %v891, %v891
            %v956 = vpack.c.b16 %v892, %v892
            %v957 = vpack.c.b16 %v893, %v893
            %v958 = vpack.c.b16 %v894, %v894
            %v959 = vpack.c.b16 %v895, %v895
            %v960 = vpack.c.b16 %v896, %v896
            %v961 = vpack.c.b16 %v897, %v897
            %v962 = vpack.c.b16 %v898, %v898
            %v963 = vpack.c.b16 %v899, %v899
            %v964 = vpack.c.b16 %v900, %v900
            %v965 = vpack.c.b16 %v901, %v901
            %v966 = vpack.c.b16 %v902, %v902
            %v967 = vpack.c.b16 %v903, %v903
            %v968 = vpack.c.b16 %v904, %v904
            %v969 = vpack.c.b16 %v905, %v905
            %v970 = vpack.c.b16 %v906, %v906
            %v971 = vpack.c.b16 %v907, %v907
            %v972 = vpack.c.b16 %v908, %v908
            %v973 = vpack.c.b16 %v909, %v909
            %v974 = vpack.c.b16 %v910, %v910
            %v975 = vpack.c.b16 %v911, %v911
            %v976 = vpack.c.b16 %v912, %v912
            %v977 = vpack.c.b16 %v913, %v913
            %v978 = vpack.c.b16 %v914, %v914
            %v979 = vpack.c.b16 %v915, %v915
            %v980 = vpack.c.b16 %v916, %v916
            %v981 = vpack.c.b16 %v917, %v917
            %v982 = vpack.c.b16 %v918, %v918
            %v983 = vpack.c.b16 %v919, %v919
            %v984 = vpack.c.b16 %v920, %v920
            %s1049 = sshra.s32 %s279, 3
            %s1050 = sand.u32 %s279, 7
            %s1051 = smul.addr %s1049, 4
            %s1052 = scalar_lea.vmem [#allocation2], %s1051
            %vm1053 = vcmask 60416
            %1054 = vst.msk [vmem:[%s1052] sm:$0xf] %vm1053, %v921
            %1055 = vst.msk [vmem:[%s1052 + $0x4] sm:$0xf] %vm1053, %v922
            %1056 = vst.msk [vmem:[%s1052 + $0x8] sm:$0xf] %vm1053, %v923
            %1057 = vst.msk [vmem:[%s1052 + $0xc] sm:$0xf] %vm1053, %v924
            %1058 = vst.msk [vmem:[%s1052 + $0x10] sm:$0xf] %vm1053, %v925
            %1059 = vst.msk [vmem:[%s1052 + $0x14] sm:$0xf] %vm1053, %v926
            %1060 = vst.msk [vmem:[%s1052 + $0x18] sm:$0xf] %vm1053, %v927
            %1061 = vst.msk [vmem:[%s1052 + $0x1c] sm:$0xf] %vm1053, %v928
            %1062 = vst.msk [vmem:[%s1052 + $0x20] sm:$0xf] %vm1053, %v929
            %1063 = vst.msk [vmem:[%s1052 + $0x24] sm:$0xf] %vm1053, %v930
            %1064 = vst.msk [vmem:[%s1052 + $0x28] sm:$0xf] %vm1053, %v931
            %1065 = vst.msk [vmem:[%s1052 + $0x2c] sm:$0xf] %vm1053, %v932
            %1066 = vst.msk [vmem:[%s1052 + $0x30] sm:$0xf] %vm1053, %v933
            %1067 = vst.msk [vmem:[%s1052 + $0x34] sm:$0xf] %vm1053, %v934
            %1068 = vst.msk [vmem:[%s1052 + $0x38] sm:$0xf] %vm1053, %v935
            %1069 = vst.msk [vmem:[%s1052 + $0x3c] sm:$0xf] %vm1053, %v936
            %1070 = vst.msk [vmem:[%s1052 + $0x40] sm:$0xf] %vm1053, %v937
            %1071 = vst.msk [vmem:[%s1052 + $0x44] sm:$0xf] %vm1053, %v938
            %1072 = vst.msk [vmem:[%s1052 + $0x48] sm:$0xf] %vm1053, %v939
            %1073 = vst.msk [vmem:[%s1052 + $0x4c] sm:$0xf] %vm1053, %v940
            %1074 = vst.msk [vmem:[%s1052 + $0x50] sm:$0xf] %vm1053, %v941
            %1075 = vst.msk [vmem:[%s1052 + $0x54] sm:$0xf] %vm1053, %v942
            %1076 = vst.msk [vmem:[%s1052 + $0x58] sm:$0xf] %vm1053, %v943
            %1077 = vst.msk [vmem:[%s1052 + $0x5c] sm:$0xf] %vm1053, %v944
            %1078 = vst.msk [vmem:[%s1052 + $0x60] sm:$0xf] %vm1053, %v945
            %1079 = vst.msk [vmem:[%s1052 + $0x64] sm:$0xf] %vm1053, %v946
            %1080 = vst.msk [vmem:[%s1052 + $0x68] sm:$0xf] %vm1053, %v947
            %1081 = vst.msk [vmem:[%s1052 + $0x6c] sm:$0xf] %vm1053, %v948
            %1082 = vst.msk [vmem:[%s1052 + $0x70] sm:$0xf] %vm1053, %v949
            %1083 = vst.msk [vmem:[%s1052 + $0x74] sm:$0xf] %vm1053, %v950
            %1084 = vst.msk [vmem:[%s1052 + $0x78] sm:$0xf] %vm1053, %v951
            %1085 = vst.msk [vmem:[%s1052 + $0x7c] sm:$0xf] %vm1053, %v952
            %1086 = vst.msk [vmem:[%s1052 + $0x80] sm:$0xf] %vm1053, %v953
            %1087 = vst.msk [vmem:[%s1052 + $0x84] sm:$0xf] %vm1053, %v954
            %1088 = vst.msk [vmem:[%s1052 + $0x88] sm:$0xf] %vm1053, %v955
            %1089 = vst.msk [vmem:[%s1052 + $0x8c] sm:$0xf] %vm1053, %v956
            %1090 = vst.msk [vmem:[%s1052 + $0x90] sm:$0xf] %vm1053, %v957
            %1091 = vst.msk [vmem:[%s1052 + $0x94] sm:$0xf] %vm1053, %v958
            %1092 = vst.msk [vmem:[%s1052 + $0x98] sm:$0xf] %vm1053, %v959
            %1093 = vst.msk [vmem:[%s1052 + $0x9c] sm:$0xf] %vm1053, %v960
            %1094 = vst.msk [vmem:[%s1052 + $0xa0] sm:$0xf] %vm1053, %v961
            %1095 = vst.msk [vmem:[%s1052 + $0xa4] sm:$0xf] %vm1053, %v962
            %1096 = vst.msk [vmem:[%s1052 + $0xa8] sm:$0xf] %vm1053, %v963
            %1097 = vst.msk [vmem:[%s1052 + $0xac] sm:$0xf] %vm1053, %v964
            %1098 = vst.msk [vmem:[%s1052 + $0xb0] sm:$0xf] %vm1053, %v965
            %1099 = vst.msk [vmem:[%s1052 + $0xb4] sm:$0xf] %vm1053, %v966
            %1100 = vst.msk [vmem:[%s1052 + $0xb8] sm:$0xf] %vm1053, %v967
            %1101 = vst.msk [vmem:[%s1052 + $0xbc] sm:$0xf] %vm1053, %v968
            %1102 = vst.msk [vmem:[%s1052 + $0xc0] sm:$0xf] %vm1053, %v969
            %1103 = vst.msk [vmem:[%s1052 + $0xc4] sm:$0xf] %vm1053, %v970
            %1104 = vst.msk [vmem:[%s1052 + $0xc8] sm:$0xf] %vm1053, %v971
            %1105 = vst.msk [vmem:[%s1052 + $0xcc] sm:$0xf] %vm1053, %v972
            %1106 = vst.msk [vmem:[%s1052 + $0xd0] sm:$0xf] %vm1053, %v973
            %1107 = vst.msk [vmem:[%s1052 + $0xd4] sm:$0xf] %vm1053, %v974
            %1108 = vst.msk [vmem:[%s1052 + $0xd8] sm:$0xf] %vm1053, %v975
            %1109 = vst.msk [vmem:[%s1052 + $0xdc] sm:$0xf] %vm1053, %v976
            %1110 = vst.msk [vmem:[%s1052 + $0xe0] sm:$0xf] %vm1053, %v977
            %1111 = vst.msk [vmem:[%s1052 + $0xe4] sm:$0xf] %vm1053, %v978
            %1112 = vst.msk [vmem:[%s1052 + $0xe8] sm:$0xf] %vm1053, %v979
            %1113 = vst.msk [vmem:[%s1052 + $0xec] sm:$0xf] %vm1053, %v980
            %1114 = vst.msk [vmem:[%s1052 + $0xf0] sm:$0xf] %vm1053, %v981
            %1115 = vst.msk [vmem:[%s1052 + $0xf4] sm:$0xf] %vm1053, %v982
            %1116 = vst.msk [vmem:[%s1052 + $0xf8] sm:$0xf] %vm1053, %v983
            %1117 = vst.msk [vmem:[%s1052 + $0xfc] sm:$0xf] %vm1053, %v984
            %v1118 = vpack.c.bf16 %v392, %v392
            %v1119 = vpack.c.bf16 %v394, %v394
            %v1120 = vpack.c.bf16 %v435, %v435
            %v1121 = vpack.c.bf16 %v437, %v437
            %v1126 = vunpack.c.l.b16 %v1118
            %v1127 = vunpack.c.l.b16 %v1119
            %v1128 = vunpack.c.l.b16 %v1120
            %v1129 = vunpack.c.l.b16 %v1121
            %v1130 = vpack.c.b16 %v1127, %v1126
            %v1131 = vpack.c.b16 %v1129, %v1128
            %s1134 = smul.addr %s280, 4
            %s1135 = scalar_lea.vmem [#allocation3], %s1134
            %1136 = vst [vmem:[%s1135] sm:$0xff] %v1130
            %1137 = vst [vmem:[%s1135 + $0x8] sm:$0xff] %v1131
            %v1138 = vpack.c.bf16 %v558, %v554
            %v1139 = vpack.c.bf16 %v560, %v556
            %v1140 = vpack.c.bf16 %v631, %v627
            %v1141 = vpack.c.bf16 %v633, %v629
            %v1142 = vpack.c.bf16 %v568, %v564
            %v1143 = vpack.c.bf16 %v570, %v566
            %v1144 = vpack.c.bf16 %v641, %v637
            %v1145 = vpack.c.bf16 %v643, %v639
            %v1146 = vpack.c.bf16 %v578, %v574
            %v1147 = vpack.c.bf16 %v580, %v576
            %v1148 = vpack.c.bf16 %v651, %v647
            %v1149 = vpack.c.bf16 %v653, %v649
            %v1150 = vpack.c.bf16 %v588, %v584
            %v1151 = vpack.c.bf16 %v590, %v586
            %v1152 = vpack.c.bf16 %v661, %v657
            %v1153 = vpack.c.bf16 %v663, %v659
            %v1170 = vunpack.c.l.b16 %v1138
            %v1171 = vunpack.c.l.b16 %v1139
            %v1172 = vunpack.c.l.b16 %v1140
            %v1173 = vunpack.c.l.b16 %v1141
            %v1174 = vunpack.c.h.b16 %v1138
            %v1175 = vunpack.c.h.b16 %v1139
            %v1176 = vunpack.c.h.b16 %v1140
            %v1177 = vunpack.c.h.b16 %v1141
            %v1178 = vunpack.c.l.b16 %v1142
            %v1179 = vunpack.c.l.b16 %v1143
            %v1180 = vunpack.c.l.b16 %v1144
            %v1181 = vunpack.c.l.b16 %v1145
            %v1182 = vunpack.c.h.b16 %v1142
            %v1183 = vunpack.c.h.b16 %v1143
            %v1184 = vunpack.c.h.b16 %v1144
            %v1185 = vunpack.c.h.b16 %v1145
            %v1186 = vunpack.c.l.b16 %v1146
            %v1187 = vunpack.c.l.b16 %v1147
            %v1188 = vunpack.c.l.b16 %v1148
            %v1189 = vunpack.c.l.b16 %v1149
            %v1190 = vunpack.c.h.b16 %v1146
            %v1191 = vunpack.c.h.b16 %v1147
            %v1192 = vunpack.c.h.b16 %v1148
            %v1193 = vunpack.c.h.b16 %v1149
            %v1194 = vunpack.c.l.b16 %v1150
            %v1195 = vunpack.c.l.b16 %v1151
            %v1196 = vunpack.c.l.b16 %v1152
            %v1197 = vunpack.c.l.b16 %v1153
            %v1198 = vunpack.c.h.b16 %v1150
            %v1199 = vunpack.c.h.b16 %v1151
            %v1200 = vunpack.c.h.b16 %v1152
            %v1201 = vunpack.c.h.b16 %v1153
            %v1202 = vpack.c.b16 %v1171, %v1170
            %v1203 = vpack.c.b16 %v1173, %v1172
            %v1204 = vpack.c.b16 %v1175, %v1174
            %v1205 = vpack.c.b16 %v1177, %v1176
            %v1206 = vpack.c.b16 %v1179, %v1178
            %v1207 = vpack.c.b16 %v1181, %v1180
            %v1208 = vpack.c.b16 %v1183, %v1182
            %v1209 = vpack.c.b16 %v1185, %v1184
            %v1210 = vpack.c.b16 %v1187, %v1186
            %v1211 = vpack.c.b16 %v1189, %v1188
            %v1212 = vpack.c.b16 %v1191, %v1190
            %v1213 = vpack.c.b16 %v1193, %v1192
            %v1214 = vpack.c.b16 %v1195, %v1194
            %v1215 = vpack.c.b16 %v1197, %v1196
            %v1216 = vpack.c.b16 %v1199, %v1198
            %v1217 = vpack.c.b16 %v1201, %v1200
            %s1234 = smul.addr %s280, 4
            %s1235 = scalar_lea.vmem [#allocation4], %s1234
            %1236 = vst [vmem:[%s1235] sm:$0xff] %v1202
            %1237 = vst [vmem:[%s1235 + $0x8] sm:$0xff] %v1203
            %1238 = vst [vmem:[%s1235 + $0x20] sm:$0xff] %v1204
            %1239 = vst [vmem:[%s1235 + $0x28] sm:$0xff] %v1205
            %1240 = vst [vmem:[%s1235 + $0x40] sm:$0xff] %v1206
            %1241 = vst [vmem:[%s1235 + $0x48] sm:$0xff] %v1207
            %1242 = vst [vmem:[%s1235 + $0x60] sm:$0xff] %v1208
            %1243 = vst [vmem:[%s1235 + $0x68] sm:$0xff] %v1209
            %1244 = vst [vmem:[%s1235 + $0x80] sm:$0xff] %v1210
            %1245 = vst [vmem:[%s1235 + $0x88] sm:$0xff] %v1211
            %1246 = vst [vmem:[%s1235 + $0xa0] sm:$0xff] %v1212
            %1247 = vst [vmem:[%s1235 + $0xa8] sm:$0xff] %v1213
            %1248 = vst [vmem:[%s1235 + $0xc0] sm:$0xff] %v1214
            %1249 = vst [vmem:[%s1235 + $0xc8] sm:$0xff] %v1215
            %1250 = vst [vmem:[%s1235 + $0xe0] sm:$0xff] %v1216
            %1251 = vst [vmem:[%s1235 + $0xe8] sm:$0xff] %v1217
          $region53: #{tpu_custom_call.1} parent=47 // loop_footer
            %s278 = sadd.s32 1, %s274
          $region54: #{tpu_custom_call.1} parent=47 // loop_footer_branch
            %273 = sbr.rel target = $region50
          $region55: #{tpu_custom_call.1} parent=47 // loop_exit
            _
        $region48: #{tpu_custom_call.1} parent=39 // pred_fallthru
          _
        %s1252 = smul.u32 %s27, 256
        %s1253 = sshra.s32 %s1252, 3
        %s1254 = sand.u32 %s1252, 7
        %s1255 = smul.addr %s1253, 4
        %s1256 = scalar_lea.vmem [#allocation2], %s1255
        %v1257 = vld [vmem:[%s1256] sm:$0xf]
        %v1258 = vld [vmem:[%s1256 + $0x4] sm:$0xf]
        %v1259 = vld [vmem:[%s1256 + $0x8] sm:$0xf]
        %v1260 = vld [vmem:[%s1256 + $0xc] sm:$0xf]
        %v1261 = vld [vmem:[%s1256 + $0x10] sm:$0xf]
        %v1262 = vld [vmem:[%s1256 + $0x14] sm:$0xf]
        %v1263 = vld [vmem:[%s1256 + $0x18] sm:$0xf]
        %v1264 = vld [vmem:[%s1256 + $0x1c] sm:$0xf]
        %v1265 = vld [vmem:[%s1256 + $0x20] sm:$0xf]
        %v1266 = vld [vmem:[%s1256 + $0x24] sm:$0xf]
        %v1267 = vld [vmem:[%s1256 + $0x28] sm:$0xf]
        %v1268 = vld [vmem:[%s1256 + $0x2c] sm:$0xf]
        %v1269 = vld [vmem:[%s1256 + $0x30] sm:$0xf]
        %v1270 = vld [vmem:[%s1256 + $0x34] sm:$0xf]
        %v1271 = vld [vmem:[%s1256 + $0x38] sm:$0xf]
        %v1272 = vld [vmem:[%s1256 + $0x3c] sm:$0xf]
        %v1273 = vld [vmem:[%s1256 + $0x40] sm:$0xf]
        %v1274 = vld [vmem:[%s1256 + $0x44] sm:$0xf]
        %v1275 = vld [vmem:[%s1256 + $0x48] sm:$0xf]
        %v1276 = vld [vmem:[%s1256 + $0x4c] sm:$0xf]
        %v1277 = vld [vmem:[%s1256 + $0x50] sm:$0xf]
        %v1278 = vld [vmem:[%s1256 + $0x54] sm:$0xf]
        %v1279 = vld [vmem:[%s1256 + $0x58] sm:$0xf]
        %v1280 = vld [vmem:[%s1256 + $0x5c] sm:$0xf]
        %v1281 = vld [vmem:[%s1256 + $0x60] sm:$0xf]
        %v1282 = vld [vmem:[%s1256 + $0x64] sm:$0xf]
        %v1283 = vld [vmem:[%s1256 + $0x68] sm:$0xf]
        %v1284 = vld [vmem:[%s1256 + $0x6c] sm:$0xf]
        %v1285 = vld [vmem:[%s1256 + $0x70] sm:$0xf]
        %v1286 = vld [vmem:[%s1256 + $0x74] sm:$0xf]
        %v1287 = vld [vmem:[%s1256 + $0x78] sm:$0xf]
        %v1288 = vld [vmem:[%s1256 + $0x7c] sm:$0xf]
        %vm1289 = vcmask 7168
        %1290 = vst.msk [vmem:[#allocation5] sm:$0xff] %vm1289, -inf
        %1291 = vst.msk [vmem:[#allocation5 + $0x8] sm:$0xff] %vm1289, -inf
        %1292 = vst.msk [vmem:[#allocation5 + $0x10] sm:$0xff] %vm1289, -inf
        %1293 = vst.msk [vmem:[#allocation5 + $0x18] sm:$0xff] %vm1289, -inf
        %1294 = vst.msk [vmem:[#allocation5 + $0x20] sm:$0xff] %vm1289, -inf
        %1295 = vst.msk [vmem:[#allocation5 + $0x28] sm:$0xff] %vm1289, -inf
        %1296 = vst.msk [vmem:[#allocation5 + $0x30] sm:$0xff] %vm1289, -inf
        %1297 = vst.msk [vmem:[#allocation5 + $0x38] sm:$0xff] %vm1289, -inf
        %1298 = vst.msk [vmem:[#allocation5 + $0x40] sm:$0xff] %vm1289, -inf
        %1299 = vst.msk [vmem:[#allocation5 + $0x48] sm:$0xff] %vm1289, -inf
        %1300 = vst.msk [vmem:[#allocation5 + $0x50] sm:$0xff] %vm1289, -inf
        %1301 = vst.msk [vmem:[#allocation5 + $0x58] sm:$0xff] %vm1289, -inf
        %1302 = vst.msk [vmem:[#allocation5 + $0x60] sm:$0xff] %vm1289, -inf
        %1303 = vst.msk [vmem:[#allocation5 + $0x68] sm:$0xff] %vm1289, -inf
        %1304 = vst.msk [vmem:[#allocation5 + $0x70] sm:$0xff] %vm1289, -inf
        %1305 = vst.msk [vmem:[#allocation5 + $0x78] sm:$0xff] %vm1289, -inf
        %1306 = vst.msk [vmem:[#allocation5 + $0x80] sm:$0xff] %vm1289, -inf
        %1307 = vst.msk [vmem:[#allocation5 + $0x88] sm:$0xff] %vm1289, -inf
        %1308 = vst.msk [vmem:[#allocation5 + $0x90] sm:$0xff] %vm1289, -inf
        %1309 = vst.msk [vmem:[#allocation5 + $0x98] sm:$0xff] %vm1289, -inf
        %1310 = vst.msk [vmem:[#allocation5 + $0xa0] sm:$0xff] %vm1289, -inf
        %1311 = vst.msk [vmem:[#allocation5 + $0xa8] sm:$0xff] %vm1289, -inf
        %1312 = vst.msk [vmem:[#allocation5 + $0xb0] sm:$0xff] %vm1289, -inf
        %1313 = vst.msk [vmem:[#allocation5 + $0xb8] sm:$0xff] %vm1289, -inf
        %1314 = vst.msk [vmem:[#allocation5 + $0xc0] sm:$0xff] %vm1289, -inf
        %1315 = vst.msk [vmem:[#allocation5 + $0xc8] sm:$0xff] %vm1289, -inf
        %1316 = vst.msk [vmem:[#allocation5 + $0xd0] sm:$0xff] %vm1289, -inf
        %1317 = vst.msk [vmem:[#allocation5 + $0xd8] sm:$0xff] %vm1289, -inf
        %1318 = vst.msk [vmem:[#allocation5 + $0xe0] sm:$0xff] %vm1289, -inf
        %1319 = vst.msk [vmem:[#allocation5 + $0xe8] sm:$0xff] %vm1289, -inf
        %1320 = vst.msk [vmem:[#allocation5 + $0xf0] sm:$0xff] %vm1289, -inf
        %1321 = vst.msk [vmem:[#allocation5 + $0xf8] sm:$0xff] %vm1289, -inf
        %1322 = vst.msk [vmem:[#allocation6] sm:$0xff] %vm1289, 0.0
        %1323 = vst.msk [vmem:[#allocation6 + $0x8] sm:$0xff] %vm1289, 0.0
        %1324 = vst.msk [vmem:[#allocation6 + $0x10] sm:$0xff] %vm1289, 0.0
        %1325 = vst.msk [vmem:[#allocation6 + $0x18] sm:$0xff] %vm1289, 0.0
        %1326 = vst.msk [vmem:[#allocation6 + $0x20] sm:$0xff] %vm1289, 0.0
        %1327 = vst.msk [vmem:[#allocation6 + $0x28] sm:$0xff] %vm1289, 0.0
        %1328 = vst.msk [vmem:[#allocation6 + $0x30] sm:$0xff] %vm1289, 0.0
        %1329 = vst.msk [vmem:[#allocation6 + $0x38] sm:$0xff] %vm1289, 0.0
        %1330 = vst.msk [vmem:[#allocation6 + $0x40] sm:$0xff] %vm1289, 0.0
        %1331 = vst.msk [vmem:[#allocation6 + $0x48] sm:$0xff] %vm1289, 0.0
        %1332 = vst.msk [vmem:[#allocation6 + $0x50] sm:$0xff] %vm1289, 0.0
        %1333 = vst.msk [vmem:[#allocation6 + $0x58] sm:$0xff] %vm1289, 0.0
        %1334 = vst.msk [vmem:[#allocation6 + $0x60] sm:$0xff] %vm1289, 0.0
        %1335 = vst.msk [vmem:[#allocation6 + $0x68] sm:$0xff] %vm1289, 0.0
        %1336 = vst.msk [vmem:[#allocation6 + $0x70] sm:$0xff] %vm1289, 0.0
        %1337 = vst.msk [vmem:[#allocation6 + $0x78] sm:$0xff] %vm1289, 0.0
        %1338 = vst.msk [vmem:[#allocation6 + $0x80] sm:$0xff] %vm1289, 0.0
        %1339 = vst.msk [vmem:[#allocation6 + $0x88] sm:$0xff] %vm1289, 0.0
        %1340 = vst.msk [vmem:[#allocation6 + $0x90] sm:$0xff] %vm1289, 0.0
        %1341 = vst.msk [vmem:[#allocation6 + $0x98] sm:$0xff] %vm1289, 0.0
        %1342 = vst.msk [vmem:[#allocation6 + $0xa0] sm:$0xff] %vm1289, 0.0
        %1343 = vst.msk [vmem:[#allocation6 + $0xa8] sm:$0xff] %vm1289, 0.0
        %1344 = vst.msk [vmem:[#allocation6 + $0xb0] sm:$0xff] %vm1289, 0.0
        %1345 = vst.msk [vmem:[#allocation6 + $0xb8] sm:$0xff] %vm1289, 0.0
        %1346 = vst.msk [vmem:[#allocation6 + $0xc0] sm:$0xff] %vm1289, 0.0
        %1347 = vst.msk [vmem:[#allocation6 + $0xc8] sm:$0xff] %vm1289, 0.0
        %1348 = vst.msk [vmem:[#allocation6 + $0xd0] sm:$0xff] %vm1289, 0.0
        %1349 = vst.msk [vmem:[#allocation6 + $0xd8] sm:$0xff] %vm1289, 0.0
        %1350 = vst.msk [vmem:[#allocation6 + $0xe0] sm:$0xff] %vm1289, 0.0
        %1351 = vst.msk [vmem:[#allocation6 + $0xe8] sm:$0xff] %vm1289, 0.0
        %1352 = vst.msk [vmem:[#allocation6 + $0xf0] sm:$0xff] %vm1289, 0.0
        %1353 = vst.msk [vmem:[#allocation6 + $0xf8] sm:$0xff] %vm1289, 0.0
        %vm1354 = vcmask 523264
        %1355 = vst.msk [vmem:[#allocation7] sm:$0xff] %vm1354, 0.0
        %1356 = vst.msk [vmem:[#allocation7 + $0x8] sm:$0xff] %vm1354, 0.0
        %1357 = vst.msk [vmem:[#allocation7 + $0x10] sm:$0xff] %vm1354, 0.0
        %1358 = vst.msk [vmem:[#allocation7 + $0x18] sm:$0xff] %vm1354, 0.0
        %1359 = vst.msk [vmem:[#allocation7 + $0x20] sm:$0xff] %vm1354, 0.0
        %1360 = vst.msk [vmem:[#allocation7 + $0x28] sm:$0xff] %vm1354, 0.0
        %1361 = vst.msk [vmem:[#allocation7 + $0x30] sm:$0xff] %vm1354, 0.0
        %1362 = vst.msk [vmem:[#allocation7 + $0x38] sm:$0xff] %vm1354, 0.0
        %1363 = vst.msk [vmem:[#allocation7 + $0x40] sm:$0xff] %vm1354, 0.0
        %1364 = vst.msk [vmem:[#allocation7 + $0x48] sm:$0xff] %vm1354, 0.0
        %1365 = vst.msk [vmem:[#allocation7 + $0x50] sm:$0xff] %vm1354, 0.0
        %1366 = vst.msk [vmem:[#allocation7 + $0x58] sm:$0xff] %vm1354, 0.0
        %1367 = vst.msk [vmem:[#allocation7 + $0x60] sm:$0xff] %vm1354, 0.0
        %1368 = vst.msk [vmem:[#allocation7 + $0x68] sm:$0xff] %vm1354, 0.0
        %1369 = vst.msk [vmem:[#allocation7 + $0x70] sm:$0xff] %vm1354, 0.0
        %1370 = vst.msk [vmem:[#allocation7 + $0x78] sm:$0xff] %vm1354, 0.0
        %1371 = vst.msk [vmem:[#allocation7 + $0x80] sm:$0xff] %vm1354, 0.0
        %1372 = vst.msk [vmem:[#allocation7 + $0x88] sm:$0xff] %vm1354, 0.0
        %1373 = vst.msk [vmem:[#allocation7 + $0x90] sm:$0xff] %vm1354, 0.0
        %1374 = vst.msk [vmem:[#allocation7 + $0x98] sm:$0xff] %vm1354, 0.0
        %1375 = vst.msk [vmem:[#allocation7 + $0xa0] sm:$0xff] %vm1354, 0.0
        %1376 = vst.msk [vmem:[#allocation7 + $0xa8] sm:$0xff] %vm1354, 0.0
        %1377 = vst.msk [vmem:[#allocation7 + $0xb0] sm:$0xff] %vm1354, 0.0
        %1378 = vst.msk [vmem:[#allocation7 + $0xb8] sm:$0xff] %vm1354, 0.0
        %1379 = vst.msk [vmem:[#allocation7 + $0xc0] sm:$0xff] %vm1354, 0.0
        %1380 = vst.msk [vmem:[#allocation7 + $0xc8] sm:$0xff] %vm1354, 0.0
        %1381 = vst.msk [vmem:[#allocation7 + $0xd0] sm:$0xff] %vm1354, 0.0
        %1382 = vst.msk [vmem:[#allocation7 + $0xd8] sm:$0xff] %vm1354, 0.0
        %1383 = vst.msk [vmem:[#allocation7 + $0xe0] sm:$0xff] %vm1354, 0.0
        %1384 = vst.msk [vmem:[#allocation7 + $0xe8] sm:$0xff] %vm1354, 0.0
        %1385 = vst.msk [vmem:[#allocation7 + $0xf0] sm:$0xff] %vm1354, 0.0
        %1386 = vst.msk [vmem:[#allocation7 + $0xf8] sm:$0xff] %vm1354, 0.0
        loop: start=0, step=1, limit=2
        $region56: #{tpu_custom_call.1} parent=39 // loop_pre_header
          _
        $region57: #{tpu_custom_call.1} parent=39 // loop_header
          %s1388 = sphi 0, %s1392
          %p1389 = scmp.ge.s32.totalorder %s1388, 2
        $region58: #{tpu_custom_call.1} parent=39 // loop_header_branch
          %1391 = sbr.rel (%p1389) target = $region62
        $region59: #{tpu_custom_call.1} parent=39 // loop_body
          %s1393 = smul.u32 %s1388, 512
          %s1394 = sshra.s32 %s1393, 7
          %s1395 = sand.u32 %s1393, 127
          %s1396 = smul.addr %s1394, 4
          %s1397 = scalar_lea.vmem [#allocation3], %s1396
          %v1398 = vld [vmem:[%s1397] sm:$0xff]
          %v1399 = vld [vmem:[%s1397 + $0x8] sm:$0xff]
          %s1400 = smul.addr %s1394, 4
          %s1401 = scalar_lea.vmem [#allocation4], %s1400
          %v1402 = vld [vmem:[%s1401] sm:$0xff]
          %v1403 = vld [vmem:[%s1401 + $0x8] sm:$0xff]
          %v1404 = vld [vmem:[%s1401 + $0x20] sm:$0xff]
          %v1405 = vld [vmem:[%s1401 + $0x28] sm:$0xff]
          %v1406 = vld [vmem:[%s1401 + $0x40] sm:$0xff]
          %v1407 = vld [vmem:[%s1401 + $0x48] sm:$0xff]
          %v1408 = vld [vmem:[%s1401 + $0x60] sm:$0xff]
          %v1409 = vld [vmem:[%s1401 + $0x68] sm:$0xff]
          %v1410 = vld [vmem:[%s1401 + $0x80] sm:$0xff]
          %v1411 = vld [vmem:[%s1401 + $0x88] sm:$0xff]
          %v1412 = vld [vmem:[%s1401 + $0xa0] sm:$0xff]
          %v1413 = vld [vmem:[%s1401 + $0xa8] sm:$0xff]
          %v1414 = vld [vmem:[%s1401 + $0xc0] sm:$0xff]
          %v1415 = vld [vmem:[%s1401 + $0xc8] sm:$0xff]
          %v1416 = vld [vmem:[%s1401 + $0xe0] sm:$0xff]
          %v1417 = vld [vmem:[%s1401 + $0xe8] sm:$0xff]
          %v1450 = vunpack.c.l.b16 %v1257
          %v1451 = vunpack.c.l.b16 %v1258
          %v1452 = vunpack.c.l.b16 %v1259
          %v1453 = vunpack.c.l.b16 %v1260
          %v1454 = vunpack.c.l.b16 %v1261
          %v1455 = vunpack.c.l.b16 %v1262
          %v1456 = vunpack.c.l.b16 %v1263
          %v1457 = vunpack.c.l.b16 %v1264
          %v1458 = vunpack.c.l.b16 %v1265
          %v1459 = vunpack.c.l.b16 %v1266
          %v1460 = vunpack.c.l.b16 %v1267
          %v1461 = vunpack.c.l.b16 %v1268
          %v1462 = vunpack.c.l.b16 %v1269
          %v1463 = vunpack.c.l.b16 %v1270
          %v1464 = vunpack.c.l.b16 %v1271
          %v1465 = vunpack.c.l.b16 %v1272
          %v1466 = vunpack.c.l.b16 %v1273
          %v1467 = vunpack.c.l.b16 %v1274
          %v1468 = vunpack.c.l.b16 %v1275
          %v1469 = vunpack.c.l.b16 %v1276
          %v1470 = vunpack.c.l.b16 %v1277
          %v1471 = vunpack.c.l.b16 %v1278
          %v1472 = vunpack.c.l.b16 %v1279
          %v1473 = vunpack.c.l.b16 %v1280
          %v1474 = vunpack.c.l.b16 %v1281
          %v1475 = vunpack.c.l.b16 %v1282
          %v1476 = vunpack.c.l.b16 %v1283
          %v1477 = vunpack.c.l.b16 %v1284
          %v1478 = vunpack.c.l.b16 %v1285
          %v1479 = vunpack.c.l.b16 %v1286
          %v1480 = vunpack.c.l.b16 %v1287
          %v1481 = vunpack.c.l.b16 %v1288
          %v1482 = vpack.c.b16 %v1451, %v1450
          %v1483 = vpack.c.b16 %v1453, %v1452
          %v1484 = vpack.c.b16 %v1455, %v1454
          %v1485 = vpack.c.b16 %v1457, %v1456
          %v1486 = vpack.c.b16 %v1459, %v1458
          %v1487 = vpack.c.b16 %v1461, %v1460
          %v1488 = vpack.c.b16 %v1463, %v1462
          %v1489 = vpack.c.b16 %v1465, %v1464
          %v1490 = vpack.c.b16 %v1467, %v1466
          %v1491 = vpack.c.b16 %v1469, %v1468
          %v1492 = vpack.c.b16 %v1471, %v1470
          %v1493 = vpack.c.b16 %v1473, %v1472
          %v1494 = vpack.c.b16 %v1475, %v1474
          %v1495 = vpack.c.b16 %v1477, %v1476
          %v1496 = vpack.c.b16 %v1479, %v1478
          %v1497 = vpack.c.b16 %v1481, %v1480
          %v1500 = vunpack.c.l.b16 %v1398
          %v1501 = vunpack.c.h.b16 %v1398
          %v1502 = vunpack.c.l.b16 %v1399
          %v1503 = vunpack.c.h.b16 %v1399
          %v1504 = vpack.c.b16 %v1500, %v1500
          %v1505 = vpack.c.b16 %v1501, %v1501
          %v1506 = vpack.c.b16 %v1502, %v1502
          %v1507 = vpack.c.b16 %v1503, %v1503
          %vm1508 = vcmask 64512
          %v1510 = vsel %vm1508, %v1482, 0
          %v1513 = vsel %vm1508, %v1483, 0
          %v1516 = vsel %vm1508, %v1484, 0
          %v1519 = vsel %vm1508, %v1485, 0
          %v1522 = vsel %vm1508, %v1486, 0
          %v1525 = vsel %vm1508, %v1487, 0
          %v1528 = vsel %vm1508, %v1488, 0
          %v1531 = vsel %vm1508, %v1489, 0
          %v1534 = vsel %vm1508, %v1490, 0
          %v1537 = vsel %vm1508, %v1491, 0
          %v1540 = vsel %vm1508, %v1492, 0
          %v1543 = vsel %vm1508, %v1493, 0
          %v1546 = vsel %vm1508, %v1494, 0
          %v1549 = vsel %vm1508, %v1495, 0
          %v1552 = vsel %vm1508, %v1496, 0
          %v1555 = vsel %vm1508, %v1497, 0
          %vm1557 = vcmask 1043456
          %v1559 = vsel %vm1557, %v1504, 0
          %v1562 = vsel %vm1557, %v1505, 0
          %v1565 = vsel %vm1557, %v1506, 0
          %v1568 = vsel %vm1557, %v1507, 0
          %1570 = vmatprep.subr.bf16.mxu0 0
          %1571 = vmatpush1.bf16.msra.mxu0 0
          %1572 = vmatprep.subr.bf16.mxu0 0
          %1573 = vmatpush1.bf16.msra.mxu0 0
          %1574 = vmatprep.subr.bf16.mxu0 0
          %1575 = vmatpush1.bf16.msra.mxu0 0
          %1576 = vmatprep.subr.bf16.mxu0 0
          %1577 = vmatpush1.bf16.msra.mxu0 0
          %1578 = vmatprep.subr.bf16.mxu0 0
          %1579 = vmatpush1.bf16.msra.mxu0 0
          %1580 = vmatprep.subr.bf16.mxu0 0
          %1581 = vmatpush1.bf16.msra.mxu0 0
          %1582 = vmatprep.subr.bf16.mxu0 0
          %1583 = vmatpush1.bf16.msra.mxu0 0
          %1584 = vmatprep.subr.bf16.mxu0 %v1562
          %1585 = vmatpush1.bf16.msra.mxu0 %v1559
          %1586 = vmatprep.subr.bf16.mxu0 0
          %1587 = vmatpush2.bf16.msra.mxu0 0
          %1588 = vmatprep.subr.bf16.mxu0 0
          %1589 = vmatpush2.bf16.msra.mxu0 0
          %1590 = vmatprep.subr.bf16.mxu0 0
          %1591 = vmatpush2.bf16.msra.mxu0 0
          %1592 = vmatprep.subr.bf16.mxu0 0
          %1593 = vmatpush2.bf16.msra.mxu0 0
          %1594 = vmatprep.subr.bf16.mxu0 0
          %1595 = vmatpush2.bf16.msra.mxu0 0
          %1596 = vmatprep.subr.bf16.mxu0 0
          %1597 = vmatpush2.bf16.msra.mxu0 0
          %1598 = vmatprep.subr.bf16.mxu0 0
          %1599 = vmatpush2.bf16.msra.mxu0 0
          %1600 = vmatprep.subr.bf16.mxu0 0
          %1601 = vmatpush2.bf16.msra.mxu0 0
          %1602 = vmatprep.mubr.bf16.mxu0 0
          %1603 = vmatmul.mubr.bf16.gmra.mxu0 %v1510
          %v1604 = vpop.f32.mrf.mxu0
          %v1605 = vadd.f32 0.0, %v1604
          %v1606 = vpop.f32.mrf.mxu0
          %v1607 = vadd.f32 0.0, %v1606
          %v1608 = vpop.f32.mrf.mxu0
          %v1609 = vadd.f32 0.0, %v1608
          %v1610 = vpop.f32.mrf.mxu0
          %v1611 = vadd.f32 0.0, %v1610
          %1612 = vmatprep.mubr.bf16.mxu0 0
          %1613 = vmatmul.mubr.bf16.gmra.mxu0 %v1513
          %v1614 = vpop.f32.mrf.mxu0
          %v1615 = vadd.f32 0.0, %v1614
          %v1616 = vpop.f32.mrf.mxu0
          %v1617 = vadd.f32 0.0, %v1616
          %v1618 = vpop.f32.mrf.mxu0
          %v1619 = vadd.f32 0.0, %v1618
          %v1620 = vpop.f32.mrf.mxu0
          %v1621 = vadd.f32 0.0, %v1620
          %1622 = vmatprep.mubr.bf16.mxu0 0
          %1623 = vmatmul.mubr.bf16.gmra.mxu0 %v1516
          %v1624 = vpop.f32.mrf.mxu0
          %v1625 = vadd.f32 0.0, %v1624
          %v1626 = vpop.f32.mrf.mxu0
          %v1627 = vadd.f32 0.0, %v1626
          %v1628 = vpop.f32.mrf.mxu0
          %v1629 = vadd.f32 0.0, %v1628
          %v1630 = vpop.f32.mrf.mxu0
          %v1631 = vadd.f32 0.0, %v1630
          %1632 = vmatprep.mubr.bf16.mxu0 0
          %1633 = vmatmul.mubr.bf16.gmra.mxu0 %v1519
          %v1634 = vpop.f32.mrf.mxu0
          %v1635 = vadd.f32 0.0, %v1634
          %v1636 = vpop.f32.mrf.mxu0
          %v1637 = vadd.f32 0.0, %v1636
          %v1638 = vpop.f32.mrf.mxu0
          %v1639 = vadd.f32 0.0, %v1638
          %v1640 = vpop.f32.mrf.mxu0
          %v1641 = vadd.f32 0.0, %v1640
          %1642 = vmatprep.mubr.bf16.mxu0 0
          %1643 = vmatmul.mubr.bf16.gmra.mxu0 %v1522
          %v1644 = vpop.f32.mrf.mxu0
          %v1645 = vadd.f32 0.0, %v1644
          %v1646 = vpop.f32.mrf.mxu0
          %v1647 = vadd.f32 0.0, %v1646
          %v1648 = vpop.f32.mrf.mxu0
          %v1649 = vadd.f32 0.0, %v1648
          %v1650 = vpop.f32.mrf.mxu0
          %v1651 = vadd.f32 0.0, %v1650
          %1652 = vmatprep.mubr.bf16.mxu0 0
          %1653 = vmatmul.mubr.bf16.gmra.mxu0 %v1525
          %v1654 = vpop.f32.mrf.mxu0
          %v1655 = vadd.f32 0.0, %v1654
          %v1656 = vpop.f32.mrf.mxu0
          %v1657 = vadd.f32 0.0, %v1656
          %v1658 = vpop.f32.mrf.mxu0
          %v1659 = vadd.f32 0.0, %v1658
          %v1660 = vpop.f32.mrf.mxu0
          %v1661 = vadd.f32 0.0, %v1660
          %1662 = vmatprep.mubr.bf16.mxu0 0
          %1663 = vmatmul.mubr.bf16.gmra.mxu0 %v1528
          %v1664 = vpop.f32.mrf.mxu0
          %v1665 = vadd.f32 0.0, %v1664
          %v1666 = vpop.f32.mrf.mxu0
          %v1667 = vadd.f32 0.0, %v1666
          %v1668 = vpop.f32.mrf.mxu0
          %v1669 = vadd.f32 0.0, %v1668
          %v1670 = vpop.f32.mrf.mxu0
          %v1671 = vadd.f32 0.0, %v1670
          %1672 = vmatprep.mubr.bf16.mxu0 0
          %1673 = vmatmul.mubr.bf16.gmra.mxu0 %v1531
          %v1674 = vpop.f32.mrf.mxu0
          %v1675 = vadd.f32 0.0, %v1674
          %v1676 = vpop.f32.mrf.mxu0
          %v1677 = vadd.f32 0.0, %v1676
          %v1678 = vpop.f32.mrf.mxu0
          %v1679 = vadd.f32 0.0, %v1678
          %v1680 = vpop.f32.mrf.mxu0
          %v1681 = vadd.f32 0.0, %v1680
          %1682 = vmatprep.mubr.bf16.mxu0 0
          %1683 = vmatmul.mubr.bf16.gmra.mxu0 %v1534
          %v1684 = vpop.f32.mrf.mxu0
          %v1685 = vadd.f32 0.0, %v1684
          %v1686 = vpop.f32.mrf.mxu0
          %v1687 = vadd.f32 0.0, %v1686
          %v1688 = vpop.f32.mrf.mxu0
          %v1689 = vadd.f32 0.0, %v1688
          %v1690 = vpop.f32.mrf.mxu0
          %v1691 = vadd.f32 0.0, %v1690
          %1692 = vmatprep.mubr.bf16.mxu0 0
          %1693 = vmatmul.mubr.bf16.gmra.mxu0 %v1537
          %v1694 = vpop.f32.mrf.mxu0
          %v1695 = vadd.f32 0.0, %v1694
          %v1696 = vpop.f32.mrf.mxu0
          %v1697 = vadd.f32 0.0, %v1696
          %v1698 = vpop.f32.mrf.mxu0
          %v1699 = vadd.f32 0.0, %v1698
          %v1700 = vpop.f32.mrf.mxu0
          %v1701 = vadd.f32 0.0, %v1700
          %1702 = vmatprep.mubr.bf16.mxu0 0
          %1703 = vmatmul.mubr.bf16.gmra.mxu0 %v1540
          %v1704 = vpop.f32.mrf.mxu0
          %v1705 = vadd.f32 0.0, %v1704
          %v1706 = vpop.f32.mrf.mxu0
          %v1707 = vadd.f32 0.0, %v1706
          %v1708 = vpop.f32.mrf.mxu0
          %v1709 = vadd.f32 0.0, %v1708
          %v1710 = vpop.f32.mrf.mxu0
          %v1711 = vadd.f32 0.0, %v1710
          %1712 = vmatprep.mubr.bf16.mxu0 0
          %1713 = vmatmul.mubr.bf16.gmra.mxu0 %v1543
          %v1714 = vpop.f32.mrf.mxu0
          %v1715 = vadd.f32 0.0, %v1714
          %v1716 = vpop.f32.mrf.mxu0
          %v1717 = vadd.f32 0.0, %v1716
          %v1718 = vpop.f32.mrf.mxu0
          %v1719 = vadd.f32 0.0, %v1718
          %v1720 = vpop.f32.mrf.mxu0
          %v1721 = vadd.f32 0.0, %v1720
          %1722 = vmatprep.mubr.bf16.mxu0 0
          %1723 = vmatmul.mubr.bf16.gmra.mxu0 %v1546
          %v1724 = vpop.f32.mrf.mxu0
          %v1725 = vadd.f32 0.0, %v1724
          %v1726 = vpop.f32.mrf.mxu0
          %v1727 = vadd.f32 0.0, %v1726
          %v1728 = vpop.f32.mrf.mxu0
          %v1729 = vadd.f32 0.0, %v1728
          %v1730 = vpop.f32.mrf.mxu0
          %v1731 = vadd.f32 0.0, %v1730
          %1732 = vmatprep.mubr.bf16.mxu0 0
          %1733 = vmatmul.mubr.bf16.gmra.mxu0 %v1549
          %v1734 = vpop.f32.mrf.mxu0
          %v1735 = vadd.f32 0.0, %v1734
          %v1736 = vpop.f32.mrf.mxu0
          %v1737 = vadd.f32 0.0, %v1736
          %v1738 = vpop.f32.mrf.mxu0
          %v1739 = vadd.f32 0.0, %v1738
          %v1740 = vpop.f32.mrf.mxu0
          %v1741 = vadd.f32 0.0, %v1740
          %1742 = vmatprep.mubr.bf16.mxu0 0
          %1743 = vmatmul.mubr.bf16.gmra.mxu0 %v1552
          %v1744 = vpop.f32.mrf.mxu0
          %v1745 = vadd.f32 0.0, %v1744
          %v1746 = vpop.f32.mrf.mxu0
          %v1747 = vadd.f32 0.0, %v1746
          %v1748 = vpop.f32.mrf.mxu0
          %v1749 = vadd.f32 0.0, %v1748
          %v1750 = vpop.f32.mrf.mxu0
          %v1751 = vadd.f32 0.0, %v1750
          %1752 = vmatprep.mubr.bf16.mxu0 0
          %1753 = vmatmul.mubr.bf16.gmra.mxu0 %v1555
          %v1754 = vpop.f32.mrf.mxu0
          %v1755 = vadd.f32 0.0, %v1754
          %v1756 = vpop.f32.mrf.mxu0
          %v1757 = vadd.f32 0.0, %v1756
          %v1758 = vpop.f32.mrf.mxu0
          %v1759 = vadd.f32 0.0, %v1758
          %v1760 = vpop.f32.mrf.mxu0
          %v1761 = vadd.f32 0.0, %v1760
          %1762 = vdwg.mxu0
          %1763 = vmatprep.subr.bf16.mxu0 0
          %1764 = vmatpush1.bf16.msra.mxu0 0
          %1765 = vmatprep.subr.bf16.mxu0 0
          %1766 = vmatpush1.bf16.msra.mxu0 0
          %1767 = vmatprep.subr.bf16.mxu0 0
          %1768 = vmatpush1.bf16.msra.mxu0 0
          %1769 = vmatprep.subr.bf16.mxu0 0
          %1770 = vmatpush1.bf16.msra.mxu0 0
          %1771 = vmatprep.subr.bf16.mxu0 0
          %1772 = vmatpush1.bf16.msra.mxu0 0
          %1773 = vmatprep.subr.bf16.mxu0 0
          %1774 = vmatpush1.bf16.msra.mxu0 0
          %1775 = vmatprep.subr.bf16.mxu0 0
          %1776 = vmatpush1.bf16.msra.mxu0 0
          %1777 = vmatprep.subr.bf16.mxu0 %v1568
          %1778 = vmatpush1.bf16.msra.mxu0 %v1565
          %1779 = vmatprep.subr.bf16.mxu0 0
          %1780 = vmatpush2.bf16.msra.mxu0 0
          %1781 = vmatprep.subr.bf16.mxu0 0
          %1782 = vmatpush2.bf16.msra.mxu0 0
          %1783 = vmatprep.subr.bf16.mxu0 0
          %1784 = vmatpush2.bf16.msra.mxu0 0
          %1785 = vmatprep.subr.bf16.mxu0 0
          %1786 = vmatpush2.bf16.msra.mxu0 0
          %1787 = vmatprep.subr.bf16.mxu0 0
          %1788 = vmatpush2.bf16.msra.mxu0 0
          %1789 = vmatprep.subr.bf16.mxu0 0
          %1790 = vmatpush2.bf16.msra.mxu0 0
          %1791 = vmatprep.subr.bf16.mxu0 0
          %1792 = vmatpush2.bf16.msra.mxu0 0
          %1793 = vmatprep.subr.bf16.mxu0 0
          %1794 = vmatpush2.bf16.msra.mxu0 0
          %1795 = vmatprep.mubr.bf16.mxu0 0
          %1796 = vmatmul.mubr.bf16.gmra.mxu0 %v1510
          %v1797 = vpop.f32.mrf.mxu0
          %v1798 = vadd.f32 0.0, %v1797
          %v1799 = vpop.f32.mrf.mxu0
          %v1800 = vadd.f32 0.0, %v1799
          %v1801 = vpop.f32.mrf.mxu0
          %v1802 = vadd.f32 0.0, %v1801
          %v1803 = vpop.f32.mrf.mxu0
          %v1804 = vadd.f32 0.0, %v1803
          %1805 = vmatprep.mubr.bf16.mxu0 0
          %1806 = vmatmul.mubr.bf16.gmra.mxu0 %v1513
          %v1807 = vpop.f32.mrf.mxu0
          %v1808 = vadd.f32 0.0, %v1807
          %v1809 = vpop.f32.mrf.mxu0
          %v1810 = vadd.f32 0.0, %v1809
          %v1811 = vpop.f32.mrf.mxu0
          %v1812 = vadd.f32 0.0, %v1811
          %v1813 = vpop.f32.mrf.mxu0
          %v1814 = vadd.f32 0.0, %v1813
          %1815 = vmatprep.mubr.bf16.mxu0 0
          %1816 = vmatmul.mubr.bf16.gmra.mxu0 %v1516
          %v1817 = vpop.f32.mrf.mxu0
          %v1818 = vadd.f32 0.0, %v1817
          %v1819 = vpop.f32.mrf.mxu0
          %v1820 = vadd.f32 0.0, %v1819
          %v1821 = vpop.f32.mrf.mxu0
          %v1822 = vadd.f32 0.0, %v1821
          %v1823 = vpop.f32.mrf.mxu0
          %v1824 = vadd.f32 0.0, %v1823
          %1825 = vmatprep.mubr.bf16.mxu0 0
          %1826 = vmatmul.mubr.bf16.gmra.mxu0 %v1519
          %v1827 = vpop.f32.mrf.mxu0
          %v1828 = vadd.f32 0.0, %v1827
          %v1829 = vpop.f32.mrf.mxu0
          %v1830 = vadd.f32 0.0, %v1829
          %v1831 = vpop.f32.mrf.mxu0
          %v1832 = vadd.f32 0.0, %v1831
          %v1833 = vpop.f32.mrf.mxu0
          %v1834 = vadd.f32 0.0, %v1833
          %1835 = vmatprep.mubr.bf16.mxu0 0
          %1836 = vmatmul.mubr.bf16.gmra.mxu0 %v1522
          %v1837 = vpop.f32.mrf.mxu0
          %v1838 = vadd.f32 0.0, %v1837
          %v1839 = vpop.f32.mrf.mxu0
          %v1840 = vadd.f32 0.0, %v1839
          %v1841 = vpop.f32.mrf.mxu0
          %v1842 = vadd.f32 0.0, %v1841
          %v1843 = vpop.f32.mrf.mxu0
          %v1844 = vadd.f32 0.0, %v1843
          %1845 = vmatprep.mubr.bf16.mxu0 0
          %1846 = vmatmul.mubr.bf16.gmra.mxu0 %v1525
          %v1847 = vpop.f32.mrf.mxu0
          %v1848 = vadd.f32 0.0, %v1847
          %v1849 = vpop.f32.mrf.mxu0
          %v1850 = vadd.f32 0.0, %v1849
          %v1851 = vpop.f32.mrf.mxu0
          %v1852 = vadd.f32 0.0, %v1851
          %v1853 = vpop.f32.mrf.mxu0
          %v1854 = vadd.f32 0.0, %v1853
          %1855 = vmatprep.mubr.bf16.mxu0 0
          %1856 = vmatmul.mubr.bf16.gmra.mxu0 %v1528
          %v1857 = vpop.f32.mrf.mxu0
          %v1858 = vadd.f32 0.0, %v1857
          %v1859 = vpop.f32.mrf.mxu0
          %v1860 = vadd.f32 0.0, %v1859
          %v1861 = vpop.f32.mrf.mxu0
          %v1862 = vadd.f32 0.0, %v1861
          %v1863 = vpop.f32.mrf.mxu0
          %v1864 = vadd.f32 0.0, %v1863
          %1865 = vmatprep.mubr.bf16.mxu0 0
          %1866 = vmatmul.mubr.bf16.gmra.mxu0 %v1531
          %v1867 = vpop.f32.mrf.mxu0
          %v1868 = vadd.f32 0.0, %v1867
          %v1869 = vpop.f32.mrf.mxu0
          %v1870 = vadd.f32 0.0, %v1869
          %v1871 = vpop.f32.mrf.mxu0
          %v1872 = vadd.f32 0.0, %v1871
          %v1873 = vpop.f32.mrf.mxu0
          %v1874 = vadd.f32 0.0, %v1873
          %1875 = vmatprep.mubr.bf16.mxu0 0
          %1876 = vmatmul.mubr.bf16.gmra.mxu0 %v1534
          %v1877 = vpop.f32.mrf.mxu0
          %v1878 = vadd.f32 0.0, %v1877
          %v1879 = vpop.f32.mrf.mxu0
          %v1880 = vadd.f32 0.0, %v1879
          %v1881 = vpop.f32.mrf.mxu0
          %v1882 = vadd.f32 0.0, %v1881
          %v1883 = vpop.f32.mrf.mxu0
          %v1884 = vadd.f32 0.0, %v1883
          %1885 = vmatprep.mubr.bf16.mxu0 0
          %1886 = vmatmul.mubr.bf16.gmra.mxu0 %v1537
          %v1887 = vpop.f32.mrf.mxu0
          %v1888 = vadd.f32 0.0, %v1887
          %v1889 = vpop.f32.mrf.mxu0
          %v1890 = vadd.f32 0.0, %v1889
          %v1891 = vpop.f32.mrf.mxu0
          %v1892 = vadd.f32 0.0, %v1891
          %v1893 = vpop.f32.mrf.mxu0
          %v1894 = vadd.f32 0.0, %v1893
          %1895 = vmatprep.mubr.bf16.mxu0 0
          %1896 = vmatmul.mubr.bf16.gmra.mxu0 %v1540
          %v1897 = vpop.f32.mrf.mxu0
          %v1898 = vadd.f32 0.0, %v1897
          %v1899 = vpop.f32.mrf.mxu0
          %v1900 = vadd.f32 0.0, %v1899
          %v1901 = vpop.f32.mrf.mxu0
          %v1902 = vadd.f32 0.0, %v1901
          %v1903 = vpop.f32.mrf.mxu0
          %v1904 = vadd.f32 0.0, %v1903
          %1905 = vmatprep.mubr.bf16.mxu0 0
          %1906 = vmatmul.mubr.bf16.gmra.mxu0 %v1543
          %v1907 = vpop.f32.mrf.mxu0
          %v1908 = vadd.f32 0.0, %v1907
          %v1909 = vpop.f32.mrf.mxu0
          %v1910 = vadd.f32 0.0, %v1909
          %v1911 = vpop.f32.mrf.mxu0
          %v1912 = vadd.f32 0.0, %v1911
          %v1913 = vpop.f32.mrf.mxu0
          %v1914 = vadd.f32 0.0, %v1913
          %1915 = vmatprep.mubr.bf16.mxu0 0
          %1916 = vmatmul.mubr.bf16.gmra.mxu0 %v1546
          %v1917 = vpop.f32.mrf.mxu0
          %v1918 = vadd.f32 0.0, %v1917
          %v1919 = vpop.f32.mrf.mxu0
          %v1920 = vadd.f32 0.0, %v1919
          %v1921 = vpop.f32.mrf.mxu0
          %v1922 = vadd.f32 0.0, %v1921
          %v1923 = vpop.f32.mrf.mxu0
          %v1924 = vadd.f32 0.0, %v1923
          %1925 = vmatprep.mubr.bf16.mxu0 0
          %1926 = vmatmul.mubr.bf16.gmra.mxu0 %v1549
          %v1927 = vpop.f32.mrf.mxu0
          %v1928 = vadd.f32 0.0, %v1927
          %v1929 = vpop.f32.mrf.mxu0
          %v1930 = vadd.f32 0.0, %v1929
          %v1931 = vpop.f32.mrf.mxu0
          %v1932 = vadd.f32 0.0, %v1931
          %v1933 = vpop.f32.mrf.mxu0
          %v1934 = vadd.f32 0.0, %v1933
          %1935 = vmatprep.mubr.bf16.mxu0 0
          %1936 = vmatmul.mubr.bf16.gmra.mxu0 %v1552
          %v1937 = vpop.f32.mrf.mxu0
          %v1938 = vadd.f32 0.0, %v1937
          %v1939 = vpop.f32.mrf.mxu0
          %v1940 = vadd.f32 0.0, %v1939
          %v1941 = vpop.f32.mrf.mxu0
          %v1942 = vadd.f32 0.0, %v1941
          %v1943 = vpop.f32.mrf.mxu0
          %v1944 = vadd.f32 0.0, %v1943
          %1945 = vmatprep.mubr.bf16.mxu0 0
          %1946 = vmatmul.mubr.bf16.gmra.mxu0 %v1555
          %v1947 = vpop.f32.mrf.mxu0
          %v1948 = vadd.f32 0.0, %v1947
          %v1949 = vpop.f32.mrf.mxu0
          %v1950 = vadd.f32 0.0, %v1949
          %v1951 = vpop.f32.mrf.mxu0
          %v1952 = vadd.f32 0.0, %v1951
          %v1953 = vpop.f32.mrf.mxu0
          %v1954 = vadd.f32 0.0, %v1953
          %1955 = vdwg.mxu0
          %v1956 = vld [vmem:[#allocation5] sm:$0xff]
          %v1957 = vld [vmem:[#allocation5 + $0x8] sm:$0xff]
          %v1958 = vld [vmem:[#allocation5 + $0x10] sm:$0xff]
          %v1959 = vld [vmem:[#allocation5 + $0x18] sm:$0xff]
          %v1960 = vld [vmem:[#allocation5 + $0x20] sm:$0xff]
          %v1961 = vld [vmem:[#allocation5 + $0x28] sm:$0xff]
          %v1962 = vld [vmem:[#allocation5 + $0x30] sm:$0xff]
          %v1963 = vld [vmem:[#allocation5 + $0x38] sm:$0xff]
          %v1964 = vld [vmem:[#allocation5 + $0x40] sm:$0xff]
          %v1965 = vld [vmem:[#allocation5 + $0x48] sm:$0xff]
          %v1966 = vld [vmem:[#allocation5 + $0x50] sm:$0xff]
          %v1967 = vld [vmem:[#allocation5 + $0x58] sm:$0xff]
          %v1968 = vld [vmem:[#allocation5 + $0x60] sm:$0xff]
          %v1969 = vld [vmem:[#allocation5 + $0x68] sm:$0xff]
          %v1970 = vld [vmem:[#allocation5 + $0x70] sm:$0xff]
          %v1971 = vld [vmem:[#allocation5 + $0x78] sm:$0xff]
          %v1972 = vld [vmem:[#allocation5 + $0x80] sm:$0xff]
          %v1973 = vld [vmem:[#allocation5 + $0x88] sm:$0xff]
          %v1974 = vld [vmem:[#allocation5 + $0x90] sm:$0xff]
          %v1975 = vld [vmem:[#allocation5 + $0x98] sm:$0xff]
          %v1976 = vld [vmem:[#allocation5 + $0xa0] sm:$0xff]
          %v1977 = vld [vmem:[#allocation5 + $0xa8] sm:$0xff]
          %v1978 = vld [vmem:[#allocation5 + $0xb0] sm:$0xff]
          %v1979 = vld [vmem:[#allocation5 + $0xb8] sm:$0xff]
          %v1980 = vld [vmem:[#allocation5 + $0xc0] sm:$0xff]
          %v1981 = vld [vmem:[#allocation5 + $0xc8] sm:$0xff]
          %v1982 = vld [vmem:[#allocation5 + $0xd0] sm:$0xff]
          %v1983 = vld [vmem:[#allocation5 + $0xd8] sm:$0xff]
          %v1984 = vld [vmem:[#allocation5 + $0xe0] sm:$0xff]
          %v1985 = vld [vmem:[#allocation5 + $0xe8] sm:$0xff]
          %v1986 = vld [vmem:[#allocation5 + $0xf0] sm:$0xff]
          %v1987 = vld [vmem:[#allocation5 + $0xf8] sm:$0xff]
          %v1988 = vmax.f32 %v1605, %v1607
          %v1989 = vmax.f32 %v1988, %v1798
          %v1990 = vmax.f32 %v1989, %v1800
          %1991 = vmax.xlane.f32.xlu0 %v1990
          %v1992 = vpop.xlane.xlu0 %1991
          %v1993 = vmax.f32 %v1609, %v1611
          %v1994 = vmax.f32 %v1993, %v1802
          %v1995 = vmax.f32 %v1994, %v1804
          %1996 = vmax.xlane.f32.xlu0 %v1995
          %v1997 = vpop.xlane.xlu0 %1996
          %v1998 = vmax.f32 %v1615, %v1617
          %v1999 = vmax.f32 %v1998, %v1808
          %v2000 = vmax.f32 %v1999, %v1810
          %2001 = vmax.xlane.f32.xlu0 %v2000
          %v2002 = vpop.xlane.xlu0 %2001
          %v2003 = vmax.f32 %v1619, %v1621
          %v2004 = vmax.f32 %v2003, %v1812
          %v2005 = vmax.f32 %v2004, %v1814
          %2006 = vmax.xlane.f32.xlu0 %v2005
          %v2007 = vpop.xlane.xlu0 %2006
          %v2008 = vmax.f32 %v1625, %v1627
          %v2009 = vmax.f32 %v2008, %v1818
          %v2010 = vmax.f32 %v2009, %v1820
          %2011 = vmax.xlane.f32.xlu0 %v2010
          %v2012 = vpop.xlane.xlu0 %2011
          %v2013 = vmax.f32 %v1629, %v1631
          %v2014 = vmax.f32 %v2013, %v1822
          %v2015 = vmax.f32 %v2014, %v1824
          %2016 = vmax.xlane.f32.xlu0 %v2015
          %v2017 = vpop.xlane.xlu0 %2016
          %v2018 = vmax.f32 %v1635, %v1637
          %v2019 = vmax.f32 %v2018, %v1828
          %v2020 = vmax.f32 %v2019, %v1830
          %2021 = vmax.xlane.f32.xlu0 %v2020
          %v2022 = vpop.xlane.xlu0 %2021
          %v2023 = vmax.f32 %v1639, %v1641
          %v2024 = vmax.f32 %v2023, %v1832
          %v2025 = vmax.f32 %v2024, %v1834
          %2026 = vmax.xlane.f32.xlu0 %v2025
          %v2027 = vpop.xlane.xlu0 %2026
          %v2028 = vmax.f32 %v1645, %v1647
          %v2029 = vmax.f32 %v2028, %v1838
          %v2030 = vmax.f32 %v2029, %v1840
          %2031 = vmax.xlane.f32.xlu0 %v2030
          %v2032 = vpop.xlane.xlu0 %2031
          %v2033 = vmax.f32 %v1649, %v1651
          %v2034 = vmax.f32 %v2033, %v1842
          %v2035 = vmax.f32 %v2034, %v1844
          %2036 = vmax.xlane.f32.xlu0 %v2035
          %v2037 = vpop.xlane.xlu0 %2036
          %v2038 = vmax.f32 %v1655, %v1657
          %v2039 = vmax.f32 %v2038, %v1848
          %v2040 = vmax.f32 %v2039, %v1850
          %2041 = vmax.xlane.f32.xlu0 %v2040
          %v2042 = vpop.xlane.xlu0 %2041
          %v2043 = vmax.f32 %v1659, %v1661
          %v2044 = vmax.f32 %v2043, %v1852
          %v2045 = vmax.f32 %v2044, %v1854
          %2046 = vmax.xlane.f32.xlu0 %v2045
          %v2047 = vpop.xlane.xlu0 %2046
          %v2048 = vmax.f32 %v1665, %v1667
          %v2049 = vmax.f32 %v2048, %v1858
          %v2050 = vmax.f32 %v2049, %v1860
          %2051 = vmax.xlane.f32.xlu0 %v2050
          %v2052 = vpop.xlane.xlu0 %2051
          %v2053 = vmax.f32 %v1669, %v1671
          %v2054 = vmax.f32 %v2053, %v1862
          %v2055 = vmax.f32 %v2054, %v1864
          %2056 = vmax.xlane.f32.xlu0 %v2055
          %v2057 = vpop.xlane.xlu0 %2056
          %v2058 = vmax.f32 %v1675, %v1677
          %v2059 = vmax.f32 %v2058, %v1868
          %v2060 = vmax.f32 %v2059, %v1870
          %2061 = vmax.xlane.f32.xlu0 %v2060
          %v2062 = vpop.xlane.xlu0 %2061
          %v2063 = vmax.f32 %v1679, %v1681
          %v2064 = vmax.f32 %v2063, %v1872
          %v2065 = vmax.f32 %v2064, %v1874
          %2066 = vmax.xlane.f32.xlu0 %v2065
          %v2067 = vpop.xlane.xlu0 %2066
          %v2068 = vmax.f32 %v1685, %v1687
          %v2069 = vmax.f32 %v2068, %v1878
          %v2070 = vmax.f32 %v2069, %v1880
          %2071 = vmax.xlane.f32.xlu0 %v2070
          %v2072 = vpop.xlane.xlu0 %2071
          %v2073 = vmax.f32 %v1689, %v1691
          %v2074 = vmax.f32 %v2073, %v1882
          %v2075 = vmax.f32 %v2074, %v1884
          %2076 = vmax.xlane.f32.xlu0 %v2075
          %v2077 = vpop.xlane.xlu0 %2076
          %v2078 = vmax.f32 %v1695, %v1697
          %v2079 = vmax.f32 %v2078, %v1888
          %v2080 = vmax.f32 %v2079, %v1890
          %2081 = vmax.xlane.f32.xlu0 %v2080
          %v2082 = vpop.xlane.xlu0 %2081
          %v2083 = vmax.f32 %v1699, %v1701
          %v2084 = vmax.f32 %v2083, %v1892
          %v2085 = vmax.f32 %v2084, %v1894
          %2086 = vmax.xlane.f32.xlu0 %v2085
          %v2087 = vpop.xlane.xlu0 %2086
          %v2088 = vmax.f32 %v1705, %v1707
          %v2089 = vmax.f32 %v2088, %v1898
          %v2090 = vmax.f32 %v2089, %v1900
          %2091 = vmax.xlane.f32.xlu0 %v2090
          %v2092 = vpop.xlane.xlu0 %2091
          %v2093 = vmax.f32 %v1709, %v1711
          %v2094 = vmax.f32 %v2093, %v1902
          %v2095 = vmax.f32 %v2094, %v1904
          %2096 = vmax.xlane.f32.xlu0 %v2095
          %v2097 = vpop.xlane.xlu0 %2096
          %v2098 = vmax.f32 %v1715, %v1717
          %v2099 = vmax.f32 %v2098, %v1908
          %v2100 = vmax.f32 %v2099, %v1910
          %2101 = vmax.xlane.f32.xlu0 %v2100
          %v2102 = vpop.xlane.xlu0 %2101
          %v2103 = vmax.f32 %v1719, %v1721
          %v2104 = vmax.f32 %v2103, %v1912
          %v2105 = vmax.f32 %v2104, %v1914
          %2106 = vmax.xlane.f32.xlu0 %v2105
          %v2107 = vpop.xlane.xlu0 %2106
          %v2108 = vmax.f32 %v1725, %v1727
          %v2109 = vmax.f32 %v2108, %v1918
          %v2110 = vmax.f32 %v2109, %v1920
          %2111 = vmax.xlane.f32.xlu0 %v2110
          %v2112 = vpop.xlane.xlu0 %2111
          %v2113 = vmax.f32 %v1729, %v1731
          %v2114 = vmax.f32 %v2113, %v1922
          %v2115 = vmax.f32 %v2114, %v1924
          %2116 = vmax.xlane.f32.xlu0 %v2115
          %v2117 = vpop.xlane.xlu0 %2116
          %v2118 = vmax.f32 %v1735, %v1737
          %v2119 = vmax.f32 %v2118, %v1928
          %v2120 = vmax.f32 %v2119, %v1930
          %2121 = vmax.xlane.f32.xlu0 %v2120
          %v2122 = vpop.xlane.xlu0 %2121
          %v2123 = vmax.f32 %v1739, %v1741
          %v2124 = vmax.f32 %v2123, %v1932
          %v2125 = vmax.f32 %v2124, %v1934
          %2126 = vmax.xlane.f32.xlu0 %v2125
          %v2127 = vpop.xlane.xlu0 %2126
          %v2128 = vmax.f32 %v1745, %v1747
          %v2129 = vmax.f32 %v2128, %v1938
          %v2130 = vmax.f32 %v2129, %v1940
          %2131 = vmax.xlane.f32.xlu0 %v2130
          %v2132 = vpop.xlane.xlu0 %2131
          %v2133 = vmax.f32 %v1749, %v1751
          %v2134 = vmax.f32 %v2133, %v1942
          %v2135 = vmax.f32 %v2134, %v1944
          %2136 = vmax.xlane.f32.xlu0 %v2135
          %v2137 = vpop.xlane.xlu0 %2136
          %v2138 = vmax.f32 %v1755, %v1757
          %v2139 = vmax.f32 %v2138, %v1948
          %v2140 = vmax.f32 %v2139, %v1950
          %2141 = vmax.xlane.f32.xlu0 %v2140
          %v2142 = vpop.xlane.xlu0 %2141
          %v2143 = vmax.f32 %v1759, %v1761
          %v2144 = vmax.f32 %v2143, %v1952
          %v2145 = vmax.f32 %v2144, %v1954
          %2146 = vmax.xlane.f32.xlu0 %v2145
          %v2147 = vpop.xlane.xlu0 %2146
          %v2148 = vmax.f32 %v1956, %v1992
          %v2149 = vmax.f32 %v1957, %v1997
          %v2150 = vmax.f32 %v1958, %v2002
          %v2151 = vmax.f32 %v1959, %v2007
          %v2152 = vmax.f32 %v1960, %v2012
          %v2153 = vmax.f32 %v1961, %v2017
          %v2154 = vmax.f32 %v1962, %v2022
          %v2155 = vmax.f32 %v1963, %v2027
          %v2156 = vmax.f32 %v1964, %v2032
          %v2157 = vmax.f32 %v1965, %v2037
          %v2158 = vmax.f32 %v1966, %v2042
          %v2159 = vmax.f32 %v1967, %v2047
          %v2160 = vmax.f32 %v1968, %v2052
          %v2161 = vmax.f32 %v1969, %v2057
          %v2162 = vmax.f32 %v1970, %v2062
          %v2163 = vmax.f32 %v1971, %v2067
          %v2164 = vmax.f32 %v1972, %v2072
          %v2165 = vmax.f32 %v1973, %v2077
          %v2166 = vmax.f32 %v1974, %v2082
          %v2167 = vmax.f32 %v1975, %v2087
          %v2168 = vmax.f32 %v1976, %v2092
          %v2169 = vmax.f32 %v1977, %v2097
          %v2170 = vmax.f32 %v1978, %v2102
          %v2171 = vmax.f32 %v1979, %v2107
          %v2172 = vmax.f32 %v1980, %v2112
          %v2173 = vmax.f32 %v1981, %v2117
          %v2174 = vmax.f32 %v1982, %v2122
          %v2175 = vmax.f32 %v1983, %v2127
          %v2176 = vmax.f32 %v1984, %v2132
          %v2177 = vmax.f32 %v1985, %v2137
          %v2178 = vmax.f32 %v1986, %v2142
          %v2179 = vmax.f32 %v1987, %v2147
          %v2180 = vsub.f32 %v1956, %v2148
          %v2181 = vsub.f32 %v1957, %v2149
          %v2182 = vsub.f32 %v1958, %v2150
          %v2183 = vsub.f32 %v1959, %v2151
          %v2184 = vsub.f32 %v1960, %v2152
          %v2185 = vsub.f32 %v1961, %v2153
          %v2186 = vsub.f32 %v1962, %v2154
          %v2187 = vsub.f32 %v1963, %v2155
          %v2188 = vsub.f32 %v1964, %v2156
          %v2189 = vsub.f32 %v1965, %v2157
          %v2190 = vsub.f32 %v1966, %v2158
          %v2191 = vsub.f32 %v1967, %v2159
          %v2192 = vsub.f32 %v1968, %v2160
          %v2193 = vsub.f32 %v1969, %v2161
          %v2194 = vsub.f32 %v1970, %v2162
          %v2195 = vsub.f32 %v1971, %v2163
          %v2196 = vsub.f32 %v1972, %v2164
          %v2197 = vsub.f32 %v1973, %v2165
          %v2198 = vsub.f32 %v1974, %v2166
          %v2199 = vsub.f32 %v1975, %v2167
          %v2200 = vsub.f32 %v1976, %v2168
          %v2201 = vsub.f32 %v1977, %v2169
          %v2202 = vsub.f32 %v1978, %v2170
          %v2203 = vsub.f32 %v1979, %v2171
          %v2204 = vsub.f32 %v1980, %v2172
          %v2205 = vsub.f32 %v1981, %v2173
          %v2206 = vsub.f32 %v1982, %v2174
          %v2207 = vsub.f32 %v1983, %v2175
          %v2208 = vsub.f32 %v1984, %v2176
          %v2209 = vsub.f32 %v1985, %v2177
          %v2210 = vsub.f32 %v1986, %v2178
          %v2211 = vsub.f32 %v1987, %v2179
          %v2212 = vmul.f32 %v2180, 1.442695
          %v2213 = vpow.pop %v2212
          %v2214 = vmul.f32 %v2181, 1.442695
          %v2215 = vpow.pop %v2214
          %v2216 = vmul.f32 %v2182, 1.442695
          %v2217 = vpow.pop %v2216
          %v2218 = vmul.f32 %v2183, 1.442695
          %v2219 = vpow.pop %v2218
          %v2220 = vmul.f32 %v2184, 1.442695
          %v2221 = vpow.pop %v2220
          %v2222 = vmul.f32 %v2185, 1.442695
          %v2223 = vpow.pop %v2222
          %v2224 = vmul.f32 %v2186, 1.442695
          %v2225 = vpow.pop %v2224
          %v2226 = vmul.f32 %v2187, 1.442695
          %v2227 = vpow.pop %v2226
          %v2228 = vmul.f32 %v2188, 1.442695
          %v2229 = vpow.pop %v2228
          %v2230 = vmul.f32 %v2189, 1.442695
          %v2231 = vpow.pop %v2230
          %v2232 = vmul.f32 %v2190, 1.442695
          %v2233 = vpow.pop %v2232
          %v2234 = vmul.f32 %v2191, 1.442695
          %v2235 = vpow.pop %v2234
          %v2236 = vmul.f32 %v2192, 1.442695
          %v2237 = vpow.pop %v2236
          %v2238 = vmul.f32 %v2193, 1.442695
          %v2239 = vpow.pop %v2238
          %v2240 = vmul.f32 %v2194, 1.442695
          %v2241 = vpow.pop %v2240
          %v2242 = vmul.f32 %v2195, 1.442695
          %v2243 = vpow.pop %v2242
          %v2244 = vmul.f32 %v2196, 1.442695
          %v2245 = vpow.pop %v2244
          %v2246 = vmul.f32 %v2197, 1.442695
          %v2247 = vpow.pop %v2246
          %v2248 = vmul.f32 %v2198, 1.442695
          %v2249 = vpow.pop %v2248
          %v2250 = vmul.f32 %v2199, 1.442695
          %v2251 = vpow.pop %v2250
          %v2252 = vmul.f32 %v2200, 1.442695
          %v2253 = vpow.pop %v2252
          %v2254 = vmul.f32 %v2201, 1.442695
          %v2255 = vpow.pop %v2254
          %v2256 = vmul.f32 %v2202, 1.442695
          %v2257 = vpow.pop %v2256
          %v2258 = vmul.f32 %v2203, 1.442695
          %v2259 = vpow.pop %v2258
          %v2260 = vmul.f32 %v2204, 1.442695
          %v2261 = vpow.pop %v2260
          %v2262 = vmul.f32 %v2205, 1.442695
          %v2263 = vpow.pop %v2262
          %v2264 = vmul.f32 %v2206, 1.442695
          %v2265 = vpow.pop %v2264
          %v2266 = vmul.f32 %v2207, 1.442695
          %v2267 = vpow.pop %v2266
          %v2268 = vmul.f32 %v2208, 1.442695
          %v2269 = vpow.pop %v2268
          %v2270 = vmul.f32 %v2209, 1.442695
          %v2271 = vpow.pop %v2270
          %v2272 = vmul.f32 %v2210, 1.442695
          %v2273 = vpow.pop %v2272
          %v2274 = vmul.f32 %v2211, 1.442695
          %v2275 = vpow.pop %v2274
          %2277 = vset.pattern.permute.xlu0 0
          %2278 = vperm.xlu0 %2277, %v2148
          %v2279 = vpop.permute.xlu0 %2278
          %2282 = vset.pattern.permute.xlu0 0
          %2283 = vperm.xlu0 %2282, %v2149
          %v2284 = vpop.permute.xlu0 %2283
          %2287 = vset.pattern.permute.xlu0 0
          %2288 = vperm.xlu0 %2287, %v2150
          %v2289 = vpop.permute.xlu0 %2288
          %2292 = vset.pattern.permute.xlu0 0
          %2293 = vperm.xlu0 %2292, %v2151
          %v2294 = vpop.permute.xlu0 %2293
          %2297 = vset.pattern.permute.xlu0 0
          %2298 = vperm.xlu0 %2297, %v2152
          %v2299 = vpop.permute.xlu0 %2298
          %2302 = vset.pattern.permute.xlu0 0
          %2303 = vperm.xlu0 %2302, %v2153
          %v2304 = vpop.permute.xlu0 %2303
          %2307 = vset.pattern.permute.xlu0 0
          %2308 = vperm.xlu0 %2307, %v2154
          %v2309 = vpop.permute.xlu0 %2308
          %2312 = vset.pattern.permute.xlu0 0
          %2313 = vperm.xlu0 %2312, %v2155
          %v2314 = vpop.permute.xlu0 %2313
          %2317 = vset.pattern.permute.xlu0 0
          %2318 = vperm.xlu0 %2317, %v2156
          %v2319 = vpop.permute.xlu0 %2318
          %2322 = vset.pattern.permute.xlu0 0
          %2323 = vperm.xlu0 %2322, %v2157
          %v2324 = vpop.permute.xlu0 %2323
          %2327 = vset.pattern.permute.xlu0 0
          %2328 = vperm.xlu0 %2327, %v2158
          %v2329 = vpop.permute.xlu0 %2328
          %2332 = vset.pattern.permute.xlu0 0
          %2333 = vperm.xlu0 %2332, %v2159
          %v2334 = vpop.permute.xlu0 %2333
          %2337 = vset.pattern.permute.xlu0 0
          %2338 = vperm.xlu0 %2337, %v2160
          %v2339 = vpop.permute.xlu0 %2338
          %2342 = vset.pattern.permute.xlu0 0
          %2343 = vperm.xlu0 %2342, %v2161
          %v2344 = vpop.permute.xlu0 %2343
          %2347 = vset.pattern.permute.xlu0 0
          %2348 = vperm.xlu0 %2347, %v2162
          %v2349 = vpop.permute.xlu0 %2348
          %2352 = vset.pattern.permute.xlu0 0
          %2353 = vperm.xlu0 %2352, %v2163
          %v2354 = vpop.permute.xlu0 %2353
          %2357 = vset.pattern.permute.xlu0 0
          %2358 = vperm.xlu0 %2357, %v2164
          %v2359 = vpop.permute.xlu0 %2358
          %2362 = vset.pattern.permute.xlu0 0
          %2363 = vperm.xlu0 %2362, %v2165
          %v2364 = vpop.permute.xlu0 %2363
          %2367 = vset.pattern.permute.xlu0 0
          %2368 = vperm.xlu0 %2367, %v2166
          %v2369 = vpop.permute.xlu0 %2368
          %2372 = vset.pattern.permute.xlu0 0
          %2373 = vperm.xlu0 %2372, %v2167
          %v2374 = vpop.permute.xlu0 %2373
          %2377 = vset.pattern.permute.xlu0 0
          %2378 = vperm.xlu0 %2377, %v2168
          %v2379 = vpop.permute.xlu0 %2378
          %2382 = vset.pattern.permute.xlu0 0
          %2383 = vperm.xlu0 %2382, %v2169
          %v2384 = vpop.permute.xlu0 %2383
          %2387 = vset.pattern.permute.xlu0 0
          %2388 = vperm.xlu0 %2387, %v2170
          %v2389 = vpop.permute.xlu0 %2388
          %2392 = vset.pattern.permute.xlu0 0
          %2393 = vperm.xlu0 %2392, %v2171
          %v2394 = vpop.permute.xlu0 %2393
          %2397 = vset.pattern.permute.xlu0 0
          %2398 = vperm.xlu0 %2397, %v2172
          %v2399 = vpop.permute.xlu0 %2398
          %2402 = vset.pattern.permute.xlu0 0
          %2403 = vperm.xlu0 %2402, %v2173
          %v2404 = vpop.permute.xlu0 %2403
          %2407 = vset.pattern.permute.xlu0 0
          %2408 = vperm.xlu0 %2407, %v2174
          %v2409 = vpop.permute.xlu0 %2408
          %2412 = vset.pattern.permute.xlu0 0
          %2413 = vperm.xlu0 %2412, %v2175
          %v2414 = vpop.permute.xlu0 %2413
          %2417 = vset.pattern.permute.xlu0 0
          %2418 = vperm.xlu0 %2417, %v2176
          %v2419 = vpop.permute.xlu0 %2418
          %2422 = vset.pattern.permute.xlu0 0
          %2423 = vperm.xlu0 %2422, %v2177
          %v2424 = vpop.permute.xlu0 %2423
          %2427 = vset.pattern.permute.xlu0 0
          %2428 = vperm.xlu0 %2427, %v2178
          %v2429 = vpop.permute.xlu0 %2428
          %2432 = vset.pattern.permute.xlu0 0
          %2433 = vperm.xlu0 %2432, %v2179
          %v2434 = vpop.permute.xlu0 %2433
          %v2436 = vsub.f32 %v1605, %v2279
          %v2437 = vsub.f32 %v1607, %v2279
          %v2438 = vsub.f32 %v1798, %v2279
          %v2439 = vsub.f32 %v1800, %v2279
          %v2440 = vsub.f32 %v1609, %v2284
          %v2441 = vsub.f32 %v1611, %v2284
          %v2442 = vsub.f32 %v1802, %v2284
          %v2443 = vsub.f32 %v1804, %v2284
          %v2444 = vsub.f32 %v1615, %v2289
          %v2445 = vsub.f32 %v1617, %v2289
          %v2446 = vsub.f32 %v1808, %v2289
          %v2447 = vsub.f32 %v1810, %v2289
          %v2448 = vsub.f32 %v1619, %v2294
          %v2449 = vsub.f32 %v1621, %v2294
          %v2450 = vsub.f32 %v1812, %v2294
          %v2451 = vsub.f32 %v1814, %v2294
          %v2452 = vsub.f32 %v1625, %v2299
          %v2453 = vsub.f32 %v1627, %v2299
          %v2454 = vsub.f32 %v1818, %v2299
          %v2455 = vsub.f32 %v1820, %v2299
          %v2456 = vsub.f32 %v1629, %v2304
          %v2457 = vsub.f32 %v1631, %v2304
          %v2458 = vsub.f32 %v1822, %v2304
          %v2459 = vsub.f32 %v1824, %v2304
          %v2460 = vsub.f32 %v1635, %v2309
          %v2461 = vsub.f32 %v1637, %v2309
          %v2462 = vsub.f32 %v1828, %v2309
          %v2463 = vsub.f32 %v1830, %v2309
          %v2464 = vsub.f32 %v1639, %v2314
          %v2465 = vsub.f32 %v1641, %v2314
          %v2466 = vsub.f32 %v1832, %v2314
          %v2467 = vsub.f32 %v1834, %v2314
          %v2468 = vsub.f32 %v1645, %v2319
          %v2469 = vsub.f32 %v1647, %v2319
          %v2470 = vsub.f32 %v1838, %v2319
          %v2471 = vsub.f32 %v1840, %v2319
          %v2472 = vsub.f32 %v1649, %v2324
          %v2473 = vsub.f32 %v1651, %v2324
          %v2474 = vsub.f32 %v1842, %v2324
          %v2475 = vsub.f32 %v1844, %v2324
          %v2476 = vsub.f32 %v1655, %v2329
          %v2477 = vsub.f32 %v1657, %v2329
          %v2478 = vsub.f32 %v1848, %v2329
          %v2479 = vsub.f32 %v1850, %v2329
          %v2480 = vsub.f32 %v1659, %v2334
          %v2481 = vsub.f32 %v1661, %v2334
          %v2482 = vsub.f32 %v1852, %v2334
          %v2483 = vsub.f32 %v1854, %v2334
          %v2484 = vsub.f32 %v1665, %v2339
          %v2485 = vsub.f32 %v1667, %v2339
          %v2486 = vsub.f32 %v1858, %v2339
          %v2487 = vsub.f32 %v1860, %v2339
          %v2488 = vsub.f32 %v1669, %v2344
          %v2489 = vsub.f32 %v1671, %v2344
          %v2490 = vsub.f32 %v1862, %v2344
          %v2491 = vsub.f32 %v1864, %v2344
          %v2492 = vsub.f32 %v1675, %v2349
          %v2493 = vsub.f32 %v1677, %v2349
          %v2494 = vsub.f32 %v1868, %v2349
          %v2495 = vsub.f32 %v1870, %v2349
          %v2496 = vsub.f32 %v1679, %v2354
          %v2497 = vsub.f32 %v1681, %v2354
          %v2498 = vsub.f32 %v1872, %v2354
          %v2499 = vsub.f32 %v1874, %v2354
          %v2500 = vsub.f32 %v1685, %v2359
          %v2501 = vsub.f32 %v1687, %v2359
          %v2502 = vsub.f32 %v1878, %v2359
          %v2503 = vsub.f32 %v1880, %v2359
          %v2504 = vsub.f32 %v1689, %v2364
          %v2505 = vsub.f32 %v1691, %v2364
          %v2506 = vsub.f32 %v1882, %v2364
          %v2507 = vsub.f32 %v1884, %v2364
          %v2508 = vsub.f32 %v1695, %v2369
          %v2509 = vsub.f32 %v1697, %v2369
          %v2510 = vsub.f32 %v1888, %v2369
          %v2511 = vsub.f32 %v1890, %v2369
          %v2512 = vsub.f32 %v1699, %v2374
          %v2513 = vsub.f32 %v1701, %v2374
          %v2514 = vsub.f32 %v1892, %v2374
          %v2515 = vsub.f32 %v1894, %v2374
          %v2516 = vsub.f32 %v1705, %v2379
          %v2517 = vsub.f32 %v1707, %v2379
          %v2518 = vsub.f32 %v1898, %v2379
          %v2519 = vsub.f32 %v1900, %v2379
          %v2520 = vsub.f32 %v1709, %v2384
          %v2521 = vsub.f32 %v1711, %v2384
          %v2522 = vsub.f32 %v1902, %v2384
          %v2523 = vsub.f32 %v1904, %v2384
          %v2524 = vsub.f32 %v1715, %v2389
          %v2525 = vsub.f32 %v1717, %v2389
          %v2526 = vsub.f32 %v1908, %v2389
          %v2527 = vsub.f32 %v1910, %v2389
          %v2528 = vsub.f32 %v1719, %v2394
          %v2529 = vsub.f32 %v1721, %v2394
          %v2530 = vsub.f32 %v1912, %v2394
          %v2531 = vsub.f32 %v1914, %v2394
          %v2532 = vsub.f32 %v1725, %v2399
          %v2533 = vsub.f32 %v1727, %v2399
          %v2534 = vsub.f32 %v1918, %v2399
          %v2535 = vsub.f32 %v1920, %v2399
          %v2536 = vsub.f32 %v1729, %v2404
          %v2537 = vsub.f32 %v1731, %v2404
          %v2538 = vsub.f32 %v1922, %v2404
          %v2539 = vsub.f32 %v1924, %v2404
          %v2540 = vsub.f32 %v1735, %v2409
          %v2541 = vsub.f32 %v1737, %v2409
          %v2542 = vsub.f32 %v1928, %v2409
          %v2543 = vsub.f32 %v1930, %v2409
          %v2544 = vsub.f32 %v1739, %v2414
          %v2545 = vsub.f32 %v1741, %v2414
          %v2546 = vsub.f32 %v1932, %v2414
          %v2547 = vsub.f32 %v1934, %v2414
          %v2548 = vsub.f32 %v1745, %v2419
          %v2549 = vsub.f32 %v1747, %v2419
          %v2550 = vsub.f32 %v1938, %v2419
          %v2551 = vsub.f32 %v1940, %v2419
          %v2552 = vsub.f32 %v1749, %v2424
          %v2553 = vsub.f32 %v1751, %v2424
          %v2554 = vsub.f32 %v1942, %v2424
          %v2555 = vsub.f32 %v1944, %v2424
          %v2556 = vsub.f32 %v1755, %v2429
          %v2557 = vsub.f32 %v1757, %v2429
          %v2558 = vsub.f32 %v1948, %v2429
          %v2559 = vsub.f32 %v1950, %v2429
          %v2560 = vsub.f32 %v1759, %v2434
          %v2561 = vsub.f32 %v1761, %v2434
          %v2562 = vsub.f32 %v1952, %v2434
          %v2563 = vsub.f32 %v1954, %v2434
          %v2564 = vmul.f32 %v2436, 1.442695
          %v2565 = vpow.pop %v2564
          %v2566 = vmul.f32 %v2437, 1.442695
          %v2567 = vpow.pop %v2566
          %v2568 = vmul.f32 %v2438, 1.442695
          %v2569 = vpow.pop %v2568
          %v2570 = vmul.f32 %v2439, 1.442695
          %v2571 = vpow.pop %v2570
          %v2572 = vmul.f32 %v2440, 1.442695
          %v2573 = vpow.pop %v2572
          %v2574 = vmul.f32 %v2441, 1.442695
          %v2575 = vpow.pop %v2574
          %v2576 = vmul.f32 %v2442, 1.442695
          %v2577 = vpow.pop %v2576
          %v2578 = vmul.f32 %v2443, 1.442695
          %v2579 = vpow.pop %v2578
          %v2580 = vmul.f32 %v2444, 1.442695
          %v2581 = vpow.pop %v2580
          %v2582 = vmul.f32 %v2445, 1.442695
          %v2583 = vpow.pop %v2582
          %v2584 = vmul.f32 %v2446, 1.442695
          %v2585 = vpow.pop %v2584
          %v2586 = vmul.f32 %v2447, 1.442695
          %v2587 = vpow.pop %v2586
          %v2588 = vmul.f32 %v2448, 1.442695
          %v2589 = vpow.pop %v2588
          %v2590 = vmul.f32 %v2449, 1.442695
          %v2591 = vpow.pop %v2590
          %v2592 = vmul.f32 %v2450, 1.442695
          %v2593 = vpow.pop %v2592
          %v2594 = vmul.f32 %v2451, 1.442695
          %v2595 = vpow.pop %v2594
          %v2596 = vmul.f32 %v2452, 1.442695
          %v2597 = vpow.pop %v2596
          %v2598 = vmul.f32 %v2453, 1.442695
          %v2599 = vpow.pop %v2598
          %v2600 = vmul.f32 %v2454, 1.442695
          %v2601 = vpow.pop %v2600
          %v2602 = vmul.f32 %v2455, 1.442695
          %v2603 = vpow.pop %v2602
          %v2604 = vmul.f32 %v2456, 1.442695
          %v2605 = vpow.pop %v2604
          %v2606 = vmul.f32 %v2457, 1.442695
          %v2607 = vpow.pop %v2606
          %v2608 = vmul.f32 %v2458, 1.442695
          %v2609 = vpow.pop %v2608
          %v2610 = vmul.f32 %v2459, 1.442695
          %v2611 = vpow.pop %v2610
          %v2612 = vmul.f32 %v2460, 1.442695
          %v2613 = vpow.pop %v2612
          %v2614 = vmul.f32 %v2461, 1.442695
          %v2615 = vpow.pop %v2614
          %v2616 = vmul.f32 %v2462, 1.442695
          %v2617 = vpow.pop %v2616
          %v2618 = vmul.f32 %v2463, 1.442695
          %v2619 = vpow.pop %v2618
          %v2620 = vmul.f32 %v2464, 1.442695
          %v2621 = vpow.pop %v2620
          %v2622 = vmul.f32 %v2465, 1.442695
          %v2623 = vpow.pop %v2622
          %v2624 = vmul.f32 %v2466, 1.442695
          %v2625 = vpow.pop %v2624
          %v2626 = vmul.f32 %v2467, 1.442695
          %v2627 = vpow.pop %v2626
          %v2628 = vmul.f32 %v2468, 1.442695
          %v2629 = vpow.pop %v2628
          %v2630 = vmul.f32 %v2469, 1.442695
          %v2631 = vpow.pop %v2630
          %v2632 = vmul.f32 %v2470, 1.442695
          %v2633 = vpow.pop %v2632
          %v2634 = vmul.f32 %v2471, 1.442695
          %v2635 = vpow.pop %v2634
          %v2636 = vmul.f32 %v2472, 1.442695
          %v2637 = vpow.pop %v2636
          %v2638 = vmul.f32 %v2473, 1.442695
          %v2639 = vpow.pop %v2638
          %v2640 = vmul.f32 %v2474, 1.442695
          %v2641 = vpow.pop %v2640
          %v2642 = vmul.f32 %v2475, 1.442695
          %v2643 = vpow.pop %v2642
          %v2644 = vmul.f32 %v2476, 1.442695
          %v2645 = vpow.pop %v2644
          %v2646 = vmul.f32 %v2477, 1.442695
          %v2647 = vpow.pop %v2646
          %v2648 = vmul.f32 %v2478, 1.442695
          %v2649 = vpow.pop %v2648
          %v2650 = vmul.f32 %v2479, 1.442695
          %v2651 = vpow.pop %v2650
          %v2652 = vmul.f32 %v2480, 1.442695
          %v2653 = vpow.pop %v2652
          %v2654 = vmul.f32 %v2481, 1.442695
          %v2655 = vpow.pop %v2654
          %v2656 = vmul.f32 %v2482, 1.442695
          %v2657 = vpow.pop %v2656
          %v2658 = vmul.f32 %v2483, 1.442695
          %v2659 = vpow.pop %v2658
          %v2660 = vmul.f32 %v2484, 1.442695
          %v2661 = vpow.pop %v2660
          %v2662 = vmul.f32 %v2485, 1.442695
          %v2663 = vpow.pop %v2662
          %v2664 = vmul.f32 %v2486, 1.442695
          %v2665 = vpow.pop %v2664
          %v2666 = vmul.f32 %v2487, 1.442695
          %v2667 = vpow.pop %v2666
          %v2668 = vmul.f32 %v2488, 1.442695
          %v2669 = vpow.pop %v2668
          %v2670 = vmul.f32 %v2489, 1.442695
          %v2671 = vpow.pop %v2670
          %v2672 = vmul.f32 %v2490, 1.442695
          %v2673 = vpow.pop %v2672
          %v2674 = vmul.f32 %v2491, 1.442695
          %v2675 = vpow.pop %v2674
          %v2676 = vmul.f32 %v2492, 1.442695
          %v2677 = vpow.pop %v2676
          %v2678 = vmul.f32 %v2493, 1.442695
          %v2679 = vpow.pop %v2678
          %v2680 = vmul.f32 %v2494, 1.442695
          %v2681 = vpow.pop %v2680
          %v2682 = vmul.f32 %v2495, 1.442695
          %v2683 = vpow.pop %v2682
          %v2684 = vmul.f32 %v2496, 1.442695
          %v2685 = vpow.pop %v2684
          %v2686 = vmul.f32 %v2497, 1.442695
          %v2687 = vpow.pop %v2686
          %v2688 = vmul.f32 %v2498, 1.442695
          %v2689 = vpow.pop %v2688
          %v2690 = vmul.f32 %v2499, 1.442695
          %v2691 = vpow.pop %v2690
          %v2692 = vmul.f32 %v2500, 1.442695
          %v2693 = vpow.pop %v2692
          %v2694 = vmul.f32 %v2501, 1.442695
          %v2695 = vpow.pop %v2694
          %v2696 = vmul.f32 %v2502, 1.442695
          %v2697 = vpow.pop %v2696
          %v2698 = vmul.f32 %v2503, 1.442695
          %v2699 = vpow.pop %v2698
          %v2700 = vmul.f32 %v2504, 1.442695
          %v2701 = vpow.pop %v2700
          %v2702 = vmul.f32 %v2505, 1.442695
          %v2703 = vpow.pop %v2702
          %v2704 = vmul.f32 %v2506, 1.442695
          %v2705 = vpow.pop %v2704
          %v2706 = vmul.f32 %v2507, 1.442695
          %v2707 = vpow.pop %v2706
          %v2708 = vmul.f32 %v2508, 1.442695
          %v2709 = vpow.pop %v2708
          %v2710 = vmul.f32 %v2509, 1.442695
          %v2711 = vpow.pop %v2710
          %v2712 = vmul.f32 %v2510, 1.442695
          %v2713 = vpow.pop %v2712
          %v2714 = vmul.f32 %v2511, 1.442695
          %v2715 = vpow.pop %v2714
          %v2716 = vmul.f32 %v2512, 1.442695
          %v2717 = vpow.pop %v2716
          %v2718 = vmul.f32 %v2513, 1.442695
          %v2719 = vpow.pop %v2718
          %v2720 = vmul.f32 %v2514, 1.442695
          %v2721 = vpow.pop %v2720
          %v2722 = vmul.f32 %v2515, 1.442695
          %v2723 = vpow.pop %v2722
          %v2724 = vmul.f32 %v2516, 1.442695
          %v2725 = vpow.pop %v2724
          %v2726 = vmul.f32 %v2517, 1.442695
          %v2727 = vpow.pop %v2726
          %v2728 = vmul.f32 %v2518, 1.442695
          %v2729 = vpow.pop %v2728
          %v2730 = vmul.f32 %v2519, 1.442695
          %v2731 = vpow.pop %v2730
          %v2732 = vmul.f32 %v2520, 1.442695
          %v2733 = vpow.pop %v2732
          %v2734 = vmul.f32 %v2521, 1.442695
          %v2735 = vpow.pop %v2734
          %v2736 = vmul.f32 %v2522, 1.442695
          %v2737 = vpow.pop %v2736
          %v2738 = vmul.f32 %v2523, 1.442695
          %v2739 = vpow.pop %v2738
          %v2740 = vmul.f32 %v2524, 1.442695
          %v2741 = vpow.pop %v2740
          %v2742 = vmul.f32 %v2525, 1.442695
          %v2743 = vpow.pop %v2742
          %v2744 = vmul.f32 %v2526, 1.442695
          %v2745 = vpow.pop %v2744
          %v2746 = vmul.f32 %v2527, 1.442695
          %v2747 = vpow.pop %v2746
          %v2748 = vmul.f32 %v2528, 1.442695
          %v2749 = vpow.pop %v2748
          %v2750 = vmul.f32 %v2529, 1.442695
          %v2751 = vpow.pop %v2750
          %v2752 = vmul.f32 %v2530, 1.442695
          %v2753 = vpow.pop %v2752
          %v2754 = vmul.f32 %v2531, 1.442695
          %v2755 = vpow.pop %v2754
          %v2756 = vmul.f32 %v2532, 1.442695
          %v2757 = vpow.pop %v2756
          %v2758 = vmul.f32 %v2533, 1.442695
          %v2759 = vpow.pop %v2758
          %v2760 = vmul.f32 %v2534, 1.442695
          %v2761 = vpow.pop %v2760
          %v2762 = vmul.f32 %v2535, 1.442695
          %v2763 = vpow.pop %v2762
          %v2764 = vmul.f32 %v2536, 1.442695
          %v2765 = vpow.pop %v2764
          %v2766 = vmul.f32 %v2537, 1.442695
          %v2767 = vpow.pop %v2766
          %v2768 = vmul.f32 %v2538, 1.442695
          %v2769 = vpow.pop %v2768
          %v2770 = vmul.f32 %v2539, 1.442695
          %v2771 = vpow.pop %v2770
          %v2772 = vmul.f32 %v2540, 1.442695
          %v2773 = vpow.pop %v2772
          %v2774 = vmul.f32 %v2541, 1.442695
          %v2775 = vpow.pop %v2774
          %v2776 = vmul.f32 %v2542, 1.442695
          %v2777 = vpow.pop %v2776
          %v2778 = vmul.f32 %v2543, 1.442695
          %v2779 = vpow.pop %v2778
          %v2780 = vmul.f32 %v2544, 1.442695
          %v2781 = vpow.pop %v2780
          %v2782 = vmul.f32 %v2545, 1.442695
          %v2783 = vpow.pop %v2782
          %v2784 = vmul.f32 %v2546, 1.442695
          %v2785 = vpow.pop %v2784
          %v2786 = vmul.f32 %v2547, 1.442695
          %v2787 = vpow.pop %v2786
          %v2788 = vmul.f32 %v2548, 1.442695
          %v2789 = vpow.pop %v2788
          %v2790 = vmul.f32 %v2549, 1.442695
          %v2791 = vpow.pop %v2790
          %v2792 = vmul.f32 %v2550, 1.442695
          %v2793 = vpow.pop %v2792
          %v2794 = vmul.f32 %v2551, 1.442695
          %v2795 = vpow.pop %v2794
          %v2796 = vmul.f32 %v2552, 1.442695
          %v2797 = vpow.pop %v2796
          %v2798 = vmul.f32 %v2553, 1.442695
          %v2799 = vpow.pop %v2798
          %v2800 = vmul.f32 %v2554, 1.442695
          %v2801 = vpow.pop %v2800
          %v2802 = vmul.f32 %v2555, 1.442695
          %v2803 = vpow.pop %v2802
          %v2804 = vmul.f32 %v2556, 1.442695
          %v2805 = vpow.pop %v2804
          %v2806 = vmul.f32 %v2557, 1.442695
          %v2807 = vpow.pop %v2806
          %v2808 = vmul.f32 %v2558, 1.442695
          %v2809 = vpow.pop %v2808
          %v2810 = vmul.f32 %v2559, 1.442695
          %v2811 = vpow.pop %v2810
          %v2812 = vmul.f32 %v2560, 1.442695
          %v2813 = vpow.pop %v2812
          %v2814 = vmul.f32 %v2561, 1.442695
          %v2815 = vpow.pop %v2814
          %v2816 = vmul.f32 %v2562, 1.442695
          %v2817 = vpow.pop %v2816
          %v2818 = vmul.f32 %v2563, 1.442695
          %v2819 = vpow.pop %v2818
          %v2820 = vld [vmem:[#allocation6] sm:$0xff]
          %v2821 = vld [vmem:[#allocation6 + $0x8] sm:$0xff]
          %v2822 = vld [vmem:[#allocation6 + $0x10] sm:$0xff]
          %v2823 = vld [vmem:[#allocation6 + $0x18] sm:$0xff]
          %v2824 = vld [vmem:[#allocation6 + $0x20] sm:$0xff]
          %v2825 = vld [vmem:[#allocation6 + $0x28] sm:$0xff]
          %v2826 = vld [vmem:[#allocation6 + $0x30] sm:$0xff]
          %v2827 = vld [vmem:[#allocation6 + $0x38] sm:$0xff]
          %v2828 = vld [vmem:[#allocation6 + $0x40] sm:$0xff]
          %v2829 = vld [vmem:[#allocation6 + $0x48] sm:$0xff]
          %v2830 = vld [vmem:[#allocation6 + $0x50] sm:$0xff]
          %v2831 = vld [vmem:[#allocation6 + $0x58] sm:$0xff]
          %v2832 = vld [vmem:[#allocation6 + $0x60] sm:$0xff]
          %v2833 = vld [vmem:[#allocation6 + $0x68] sm:$0xff]
          %v2834 = vld [vmem:[#allocation6 + $0x70] sm:$0xff]
          %v2835 = vld [vmem:[#allocation6 + $0x78] sm:$0xff]
          %v2836 = vld [vmem:[#allocation6 + $0x80] sm:$0xff]
          %v2837 = vld [vmem:[#allocation6 + $0x88] sm:$0xff]
          %v2838 = vld [vmem:[#allocation6 + $0x90] sm:$0xff]
          %v2839 = vld [vmem:[#allocation6 + $0x98] sm:$0xff]
          %v2840 = vld [vmem:[#allocation6 + $0xa0] sm:$0xff]
          %v2841 = vld [vmem:[#allocation6 + $0xa8] sm:$0xff]
          %v2842 = vld [vmem:[#allocation6 + $0xb0] sm:$0xff]
          %v2843 = vld [vmem:[#allocation6 + $0xb8] sm:$0xff]
          %v2844 = vld [vmem:[#allocation6 + $0xc0] sm:$0xff]
          %v2845 = vld [vmem:[#allocation6 + $0xc8] sm:$0xff]
          %v2846 = vld [vmem:[#allocation6 + $0xd0] sm:$0xff]
          %v2847 = vld [vmem:[#allocation6 + $0xd8] sm:$0xff]
          %v2848 = vld [vmem:[#allocation6 + $0xe0] sm:$0xff]
          %v2849 = vld [vmem:[#allocation6 + $0xe8] sm:$0xff]
          %v2850 = vld [vmem:[#allocation6 + $0xf0] sm:$0xff]
          %v2851 = vld [vmem:[#allocation6 + $0xf8] sm:$0xff]
          %v2852 = vmul.f32 %v2213, %v2820
          %v2853 = vmul.f32 %v2215, %v2821
          %v2854 = vmul.f32 %v2217, %v2822
          %v2855 = vmul.f32 %v2219, %v2823
          %v2856 = vmul.f32 %v2221, %v2824
          %v2857 = vmul.f32 %v2223, %v2825
          %v2858 = vmul.f32 %v2225, %v2826
          %v2859 = vmul.f32 %v2227, %v2827
          %v2860 = vmul.f32 %v2229, %v2828
          %v2861 = vmul.f32 %v2231, %v2829
          %v2862 = vmul.f32 %v2233, %v2830
          %v2863 = vmul.f32 %v2235, %v2831
          %v2864 = vmul.f32 %v2237, %v2832
          %v2865 = vmul.f32 %v2239, %v2833
          %v2866 = vmul.f32 %v2241, %v2834
          %v2867 = vmul.f32 %v2243, %v2835
          %v2868 = vmul.f32 %v2245, %v2836
          %v2869 = vmul.f32 %v2247, %v2837
          %v2870 = vmul.f32 %v2249, %v2838
          %v2871 = vmul.f32 %v2251, %v2839
          %v2872 = vmul.f32 %v2253, %v2840
          %v2873 = vmul.f32 %v2255, %v2841
          %v2874 = vmul.f32 %v2257, %v2842
          %v2875 = vmul.f32 %v2259, %v2843
          %v2876 = vmul.f32 %v2261, %v2844
          %v2877 = vmul.f32 %v2263, %v2845
          %v2878 = vmul.f32 %v2265, %v2846
          %v2879 = vmul.f32 %v2267, %v2847
          %v2880 = vmul.f32 %v2269, %v2848
          %v2881 = vmul.f32 %v2271, %v2849
          %v2882 = vmul.f32 %v2273, %v2850
          %v2883 = vmul.f32 %v2275, %v2851
          %v2884 = vadd.f32 %v2565, %v2567
          %v2885 = vadd.f32 %v2884, %v2569
          %v2886 = vadd.f32 %v2885, %v2571
          %2887 = vadd.xlane.f32.xlu0 %v2886
          %v2888 = vpop.xlane.xlu0 %2887
          %v2889 = vadd.f32 %v2573, %v2575
          %v2890 = vadd.f32 %v2889, %v2577
          %v2891 = vadd.f32 %v2890, %v2579
          %2892 = vadd.xlane.f32.xlu0 %v2891
          %v2893 = vpop.xlane.xlu0 %2892
          %v2894 = vadd.f32 %v2581, %v2583
          %v2895 = vadd.f32 %v2894, %v2585
          %v2896 = vadd.f32 %v2895, %v2587
          %2897 = vadd.xlane.f32.xlu0 %v2896
          %v2898 = vpop.xlane.xlu0 %2897
          %v2899 = vadd.f32 %v2589, %v2591
          %v2900 = vadd.f32 %v2899, %v2593
          %v2901 = vadd.f32 %v2900, %v2595
          %2902 = vadd.xlane.f32.xlu0 %v2901
          %v2903 = vpop.xlane.xlu0 %2902
          %v2904 = vadd.f32 %v2597, %v2599
          %v2905 = vadd.f32 %v2904, %v2601
          %v2906 = vadd.f32 %v2905, %v2603
          %2907 = vadd.xlane.f32.xlu0 %v2906
          %v2908 = vpop.xlane.xlu0 %2907
          %v2909 = vadd.f32 %v2605, %v2607
          %v2910 = vadd.f32 %v2909, %v2609
          %v2911 = vadd.f32 %v2910, %v2611
          %2912 = vadd.xlane.f32.xlu0 %v2911
          %v2913 = vpop.xlane.xlu0 %2912
          %v2914 = vadd.f32 %v2613, %v2615
          %v2915 = vadd.f32 %v2914, %v2617
          %v2916 = vadd.f32 %v2915, %v2619
          %2917 = vadd.xlane.f32.xlu0 %v2916
          %v2918 = vpop.xlane.xlu0 %2917
          %v2919 = vadd.f32 %v2621, %v2623
          %v2920 = vadd.f32 %v2919, %v2625
          %v2921 = vadd.f32 %v2920, %v2627
          %2922 = vadd.xlane.f32.xlu0 %v2921
          %v2923 = vpop.xlane.xlu0 %2922
          %v2924 = vadd.f32 %v2629, %v2631
          %v2925 = vadd.f32 %v2924, %v2633
          %v2926 = vadd.f32 %v2925, %v2635
          %2927 = vadd.xlane.f32.xlu0 %v2926
          %v2928 = vpop.xlane.xlu0 %2927
          %v2929 = vadd.f32 %v2637, %v2639
          %v2930 = vadd.f32 %v2929, %v2641
          %v2931 = vadd.f32 %v2930, %v2643
          %2932 = vadd.xlane.f32.xlu0 %v2931
          %v2933 = vpop.xlane.xlu0 %2932
          %v2934 = vadd.f32 %v2645, %v2647
          %v2935 = vadd.f32 %v2934, %v2649
          %v2936 = vadd.f32 %v2935, %v2651
          %2937 = vadd.xlane.f32.xlu0 %v2936
          %v2938 = vpop.xlane.xlu0 %2937
          %v2939 = vadd.f32 %v2653, %v2655
          %v2940 = vadd.f32 %v2939, %v2657
          %v2941 = vadd.f32 %v2940, %v2659
          %2942 = vadd.xlane.f32.xlu0 %v2941
          %v2943 = vpop.xlane.xlu0 %2942
          %v2944 = vadd.f32 %v2661, %v2663
          %v2945 = vadd.f32 %v2944, %v2665
          %v2946 = vadd.f32 %v2945, %v2667
          %2947 = vadd.xlane.f32.xlu0 %v2946
          %v2948 = vpop.xlane.xlu0 %2947
          %v2949 = vadd.f32 %v2669, %v2671
          %v2950 = vadd.f32 %v2949, %v2673
          %v2951 = vadd.f32 %v2950, %v2675
          %2952 = vadd.xlane.f32.xlu0 %v2951
          %v2953 = vpop.xlane.xlu0 %2952
          %v2954 = vadd.f32 %v2677, %v2679
          %v2955 = vadd.f32 %v2954, %v2681
          %v2956 = vadd.f32 %v2955, %v2683
          %2957 = vadd.xlane.f32.xlu0 %v2956
          %v2958 = vpop.xlane.xlu0 %2957
          %v2959 = vadd.f32 %v2685, %v2687
          %v2960 = vadd.f32 %v2959, %v2689
          %v2961 = vadd.f32 %v2960, %v2691
          %2962 = vadd.xlane.f32.xlu0 %v2961
          %v2963 = vpop.xlane.xlu0 %2962
          %v2964 = vadd.f32 %v2693, %v2695
          %v2965 = vadd.f32 %v2964, %v2697
          %v2966 = vadd.f32 %v2965, %v2699
          %2967 = vadd.xlane.f32.xlu0 %v2966
          %v2968 = vpop.xlane.xlu0 %2967
          %v2969 = vadd.f32 %v2701, %v2703
          %v2970 = vadd.f32 %v2969, %v2705
          %v2971 = vadd.f32 %v2970, %v2707
          %2972 = vadd.xlane.f32.xlu0 %v2971
          %v2973 = vpop.xlane.xlu0 %2972
          %v2974 = vadd.f32 %v2709, %v2711
          %v2975 = vadd.f32 %v2974, %v2713
          %v2976 = vadd.f32 %v2975, %v2715
          %2977 = vadd.xlane.f32.xlu0 %v2976
          %v2978 = vpop.xlane.xlu0 %2977
          %v2979 = vadd.f32 %v2717, %v2719
          %v2980 = vadd.f32 %v2979, %v2721
          %v2981 = vadd.f32 %v2980, %v2723
          %2982 = vadd.xlane.f32.xlu0 %v2981
          %v2983 = vpop.xlane.xlu0 %2982
          %v2984 = vadd.f32 %v2725, %v2727
          %v2985 = vadd.f32 %v2984, %v2729
          %v2986 = vadd.f32 %v2985, %v2731
          %2987 = vadd.xlane.f32.xlu0 %v2986
          %v2988 = vpop.xlane.xlu0 %2987
          %v2989 = vadd.f32 %v2733, %v2735
          %v2990 = vadd.f32 %v2989, %v2737
          %v2991 = vadd.f32 %v2990, %v2739
          %2992 = vadd.xlane.f32.xlu0 %v2991
          %v2993 = vpop.xlane.xlu0 %2992
          %v2994 = vadd.f32 %v2741, %v2743
          %v2995 = vadd.f32 %v2994, %v2745
          %v2996 = vadd.f32 %v2995, %v2747
          %2997 = vadd.xlane.f32.xlu0 %v2996
          %v2998 = vpop.xlane.xlu0 %2997
          %v2999 = vadd.f32 %v2749, %v2751
          %v3000 = vadd.f32 %v2999, %v2753
          %v3001 = vadd.f32 %v3000, %v2755
          %3002 = vadd.xlane.f32.xlu0 %v3001
          %v3003 = vpop.xlane.xlu0 %3002
          %v3004 = vadd.f32 %v2757, %v2759
          %v3005 = vadd.f32 %v3004, %v2761
          %v3006 = vadd.f32 %v3005, %v2763
          %3007 = vadd.xlane.f32.xlu0 %v3006
          %v3008 = vpop.xlane.xlu0 %3007
          %v3009 = vadd.f32 %v2765, %v2767
          %v3010 = vadd.f32 %v3009, %v2769
          %v3011 = vadd.f32 %v3010, %v2771
          %3012 = vadd.xlane.f32.xlu0 %v3011
          %v3013 = vpop.xlane.xlu0 %3012
          %v3014 = vadd.f32 %v2773, %v2775
          %v3015 = vadd.f32 %v3014, %v2777
          %v3016 = vadd.f32 %v3015, %v2779
          %3017 = vadd.xlane.f32.xlu0 %v3016
          %v3018 = vpop.xlane.xlu0 %3017
          %v3019 = vadd.f32 %v2781, %v2783
          %v3020 = vadd.f32 %v3019, %v2785
          %v3021 = vadd.f32 %v3020, %v2787
          %3022 = vadd.xlane.f32.xlu0 %v3021
          %v3023 = vpop.xlane.xlu0 %3022
          %v3024 = vadd.f32 %v2789, %v2791
          %v3025 = vadd.f32 %v3024, %v2793
          %v3026 = vadd.f32 %v3025, %v2795
          %3027 = vadd.xlane.f32.xlu0 %v3026
          %v3028 = vpop.xlane.xlu0 %3027
          %v3029 = vadd.f32 %v2797, %v2799
          %v3030 = vadd.f32 %v3029, %v2801
          %v3031 = vadd.f32 %v3030, %v2803
          %3032 = vadd.xlane.f32.xlu0 %v3031
          %v3033 = vpop.xlane.xlu0 %3032
          %v3034 = vadd.f32 %v2805, %v2807
          %v3035 = vadd.f32 %v3034, %v2809
          %v3036 = vadd.f32 %v3035, %v2811
          %3037 = vadd.xlane.f32.xlu0 %v3036
          %v3038 = vpop.xlane.xlu0 %3037
          %v3039 = vadd.f32 %v2813, %v2815
          %v3040 = vadd.f32 %v3039, %v2817
          %v3041 = vadd.f32 %v3040, %v2819
          %3042 = vadd.xlane.f32.xlu0 %v3041
          %v3043 = vpop.xlane.xlu0 %3042
          %v3044 = vadd.f32 %v2852, %v2888
          %v3045 = vadd.f32 %v2853, %v2893
          %v3046 = vadd.f32 %v2854, %v2898
          %v3047 = vadd.f32 %v2855, %v2903
          %v3048 = vadd.f32 %v2856, %v2908
          %v3049 = vadd.f32 %v2857, %v2913
          %v3050 = vadd.f32 %v2858, %v2918
          %v3051 = vadd.f32 %v2859, %v2923
          %v3052 = vadd.f32 %v2860, %v2928
          %v3053 = vadd.f32 %v2861, %v2933
          %v3054 = vadd.f32 %v2862, %v2938
          %v3055 = vadd.f32 %v2863, %v2943
          %v3056 = vadd.f32 %v2864, %v2948
          %v3057 = vadd.f32 %v2865, %v2953
          %v3058 = vadd.f32 %v2866, %v2958
          %v3059 = vadd.f32 %v2867, %v2963
          %v3060 = vadd.f32 %v2868, %v2968
          %v3061 = vadd.f32 %v2869, %v2973
          %v3062 = vadd.f32 %v2870, %v2978
          %v3063 = vadd.f32 %v2871, %v2983
          %v3064 = vadd.f32 %v2872, %v2988
          %v3065 = vadd.f32 %v2873, %v2993
          %v3066 = vadd.f32 %v2874, %v2998
          %v3067 = vadd.f32 %v2875, %v3003
          %v3068 = vadd.f32 %v2876, %v3008
          %v3069 = vadd.f32 %v2877, %v3013
          %v3070 = vadd.f32 %v2878, %v3018
          %v3071 = vadd.f32 %v2879, %v3023
          %v3072 = vadd.f32 %v2880, %v3028
          %v3073 = vadd.f32 %v2881, %v3033
          %v3074 = vadd.f32 %v2882, %v3038
          %v3075 = vadd.f32 %v2883, %v3043
          %3076 = vst.msk [vmem:[#allocation6] sm:$0xff] %vm1289, %v3044
          %3077 = vst.msk [vmem:[#allocation6 + $0x8] sm:$0xff] %vm1289, %v3045
          %3078 = vst.msk [vmem:[#allocation6 + $0x10] sm:$0xff] %vm1289, %v3046
          %3079 = vst.msk [vmem:[#allocation6 + $0x18] sm:$0xff] %vm1289, %v3047
          %3080 = vst.msk [vmem:[#allocation6 + $0x20] sm:$0xff] %vm1289, %v3048
          %3081 = vst.msk [vmem:[#allocation6 + $0x28] sm:$0xff] %vm1289, %v3049
          %3082 = vst.msk [vmem:[#allocation6 + $0x30] sm:$0xff] %vm1289, %v3050
          %3083 = vst.msk [vmem:[#allocation6 + $0x38] sm:$0xff] %vm1289, %v3051
          %3084 = vst.msk [vmem:[#allocation6 + $0x40] sm:$0xff] %vm1289, %v3052
          %3085 = vst.msk [vmem:[#allocation6 + $0x48] sm:$0xff] %vm1289, %v3053
          %3086 = vst.msk [vmem:[#allocation6 + $0x50] sm:$0xff] %vm1289, %v3054
          %3087 = vst.msk [vmem:[#allocation6 + $0x58] sm:$0xff] %vm1289, %v3055
          %3088 = vst.msk [vmem:[#allocation6 + $0x60] sm:$0xff] %vm1289, %v3056
          %3089 = vst.msk [vmem:[#allocation6 + $0x68] sm:$0xff] %vm1289, %v3057
          %3090 = vst.msk [vmem:[#allocation6 + $0x70] sm:$0xff] %vm1289, %v3058
          %3091 = vst.msk [vmem:[#allocation6 + $0x78] sm:$0xff] %vm1289, %v3059
          %3092 = vst.msk [vmem:[#allocation6 + $0x80] sm:$0xff] %vm1289, %v3060
          %3093 = vst.msk [vmem:[#allocation6 + $0x88] sm:$0xff] %vm1289, %v3061
          %3094 = vst.msk [vmem:[#allocation6 + $0x90] sm:$0xff] %vm1289, %v3062
          %3095 = vst.msk [vmem:[#allocation6 + $0x98] sm:$0xff] %vm1289, %v3063
          %3096 = vst.msk [vmem:[#allocation6 + $0xa0] sm:$0xff] %vm1289, %v3064
          %3097 = vst.msk [vmem:[#allocation6 + $0xa8] sm:$0xff] %vm1289, %v3065
          %3098 = vst.msk [vmem:[#allocation6 + $0xb0] sm:$0xff] %vm1289, %v3066
          %3099 = vst.msk [vmem:[#allocation6 + $0xb8] sm:$0xff] %vm1289, %v3067
          %3100 = vst.msk [vmem:[#allocation6 + $0xc0] sm:$0xff] %vm1289, %v3068
          %3101 = vst.msk [vmem:[#allocation6 + $0xc8] sm:$0xff] %vm1289, %v3069
          %3102 = vst.msk [vmem:[#allocation6 + $0xd0] sm:$0xff] %vm1289, %v3070
          %3103 = vst.msk [vmem:[#allocation6 + $0xd8] sm:$0xff] %vm1289, %v3071
          %3104 = vst.msk [vmem:[#allocation6 + $0xe0] sm:$0xff] %vm1289, %v3072
          %3105 = vst.msk [vmem:[#allocation6 + $0xe8] sm:$0xff] %vm1289, %v3073
          %3106 = vst.msk [vmem:[#allocation6 + $0xf0] sm:$0xff] %vm1289, %v3074
          %3107 = vst.msk [vmem:[#allocation6 + $0xf8] sm:$0xff] %vm1289, %v3075
          %3108 = vst.msk [vmem:[#allocation5] sm:$0xff] %vm1289, %v2148
          %3109 = vst.msk [vmem:[#allocation5 + $0x8] sm:$0xff] %vm1289, %v2149
          %3110 = vst.msk [vmem:[#allocation5 + $0x10] sm:$0xff] %vm1289, %v2150
          %3111 = vst.msk [vmem:[#allocation5 + $0x18] sm:$0xff] %vm1289, %v2151
          %3112 = vst.msk [vmem:[#allocation5 + $0x20] sm:$0xff] %vm1289, %v2152
          %3113 = vst.msk [vmem:[#allocation5 + $0x28] sm:$0xff] %vm1289, %v2153
          %3114 = vst.msk [vmem:[#allocation5 + $0x30] sm:$0xff] %vm1289, %v2154
          %3115 = vst.msk [vmem:[#allocation5 + $0x38] sm:$0xff] %vm1289, %v2155
          %3116 = vst.msk [vmem:[#allocation5 + $0x40] sm:$0xff] %vm1289, %v2156
          %3117 = vst.msk [vmem:[#allocation5 + $0x48] sm:$0xff] %vm1289, %v2157
          %3118 = vst.msk [vmem:[#allocation5 + $0x50] sm:$0xff] %vm1289, %v2158
          %3119 = vst.msk [vmem:[#allocation5 + $0x58] sm:$0xff] %vm1289, %v2159
          %3120 = vst.msk [vmem:[#allocation5 + $0x60] sm:$0xff] %vm1289, %v2160
          %3121 = vst.msk [vmem:[#allocation5 + $0x68] sm:$0xff] %vm1289, %v2161
          %3122 = vst.msk [vmem:[#allocation5 + $0x70] sm:$0xff] %vm1289, %v2162
          %3123 = vst.msk [vmem:[#allocation5 + $0x78] sm:$0xff] %vm1289, %v2163
          %3124 = vst.msk [vmem:[#allocation5 + $0x80] sm:$0xff] %vm1289, %v2164
          %3125 = vst.msk [vmem:[#allocation5 + $0x88] sm:$0xff] %vm1289, %v2165
          %3126 = vst.msk [vmem:[#allocation5 + $0x90] sm:$0xff] %vm1289, %v2166
          %3127 = vst.msk [vmem:[#allocation5 + $0x98] sm:$0xff] %vm1289, %v2167
          %3128 = vst.msk [vmem:[#allocation5 + $0xa0] sm:$0xff] %vm1289, %v2168
          %3129 = vst.msk [vmem:[#allocation5 + $0xa8] sm:$0xff] %vm1289, %v2169
          %3130 = vst.msk [vmem:[#allocation5 + $0xb0] sm:$0xff] %vm1289, %v2170
          %3131 = vst.msk [vmem:[#allocation5 + $0xb8] sm:$0xff] %vm1289, %v2171
          %3132 = vst.msk [vmem:[#allocation5 + $0xc0] sm:$0xff] %vm1289, %v2172
          %3133 = vst.msk [vmem:[#allocation5 + $0xc8] sm:$0xff] %vm1289, %v2173
          %3134 = vst.msk [vmem:[#allocation5 + $0xd0] sm:$0xff] %vm1289, %v2174
          %3135 = vst.msk [vmem:[#allocation5 + $0xd8] sm:$0xff] %vm1289, %v2175
          %3136 = vst.msk [vmem:[#allocation5 + $0xe0] sm:$0xff] %vm1289, %v2176
          %3137 = vst.msk [vmem:[#allocation5 + $0xe8] sm:$0xff] %vm1289, %v2177
          %3138 = vst.msk [vmem:[#allocation5 + $0xf0] sm:$0xff] %vm1289, %v2178
          %3139 = vst.msk [vmem:[#allocation5 + $0xf8] sm:$0xff] %vm1289, %v2179
          %v3140 = vpack.c.bf16 %v2573, %v2565
          %v3141 = vpack.c.bf16 %v2575, %v2567
          %v3142 = vpack.c.bf16 %v2577, %v2569
          %v3143 = vpack.c.bf16 %v2579, %v2571
          %v3144 = vpack.c.bf16 %v2589, %v2581
          %v3145 = vpack.c.bf16 %v2591, %v2583
          %v3146 = vpack.c.bf16 %v2593, %v2585
          %v3147 = vpack.c.bf16 %v2595, %v2587
          %v3148 = vpack.c.bf16 %v2605, %v2597
          %v3149 = vpack.c.bf16 %v2607, %v2599
          %v3150 = vpack.c.bf16 %v2609, %v2601
          %v3151 = vpack.c.bf16 %v2611, %v2603
          %v3152 = vpack.c.bf16 %v2621, %v2613
          %v3153 = vpack.c.bf16 %v2623, %v2615
          %v3154 = vpack.c.bf16 %v2625, %v2617
          %v3155 = vpack.c.bf16 %v2627, %v2619
          %v3156 = vpack.c.bf16 %v2637, %v2629
          %v3157 = vpack.c.bf16 %v2639, %v2631
          %v3158 = vpack.c.bf16 %v2641, %v2633
          %v3159 = vpack.c.bf16 %v2643, %v2635
          %v3160 = vpack.c.bf16 %v2653, %v2645
          %v3161 = vpack.c.bf16 %v2655, %v2647
          %v3162 = vpack.c.bf16 %v2657, %v2649
          %v3163 = vpack.c.bf16 %v2659, %v2651
          %v3164 = vpack.c.bf16 %v2669, %v2661
          %v3165 = vpack.c.bf16 %v2671, %v2663
          %v3166 = vpack.c.bf16 %v2673, %v2665
          %v3167 = vpack.c.bf16 %v2675, %v2667
          %v3168 = vpack.c.bf16 %v2685, %v2677
          %v3169 = vpack.c.bf16 %v2687, %v2679
          %v3170 = vpack.c.bf16 %v2689, %v2681
          %v3171 = vpack.c.bf16 %v2691, %v2683
          %v3172 = vpack.c.bf16 %v2701, %v2693
          %v3173 = vpack.c.bf16 %v2703, %v2695
          %v3174 = vpack.c.bf16 %v2705, %v2697
          %v3175 = vpack.c.bf16 %v2707, %v2699
          %v3176 = vpack.c.bf16 %v2717, %v2709
          %v3177 = vpack.c.bf16 %v2719, %v2711
          %v3178 = vpack.c.bf16 %v2721, %v2713
          %v3179 = vpack.c.bf16 %v2723, %v2715
          %v3180 = vpack.c.bf16 %v2733, %v2725
          %v3181 = vpack.c.bf16 %v2735, %v2727
          %v3182 = vpack.c.bf16 %v2737, %v2729
          %v3183 = vpack.c.bf16 %v2739, %v2731
          %v3184 = vpack.c.bf16 %v2749, %v2741
          %v3185 = vpack.c.bf16 %v2751, %v2743
          %v3186 = vpack.c.bf16 %v2753, %v2745
          %v3187 = vpack.c.bf16 %v2755, %v2747
          %v3188 = vpack.c.bf16 %v2765, %v2757
          %v3189 = vpack.c.bf16 %v2767, %v2759
          %v3190 = vpack.c.bf16 %v2769, %v2761
          %v3191 = vpack.c.bf16 %v2771, %v2763
          %v3192 = vpack.c.bf16 %v2781, %v2773
          %v3193 = vpack.c.bf16 %v2783, %v2775
          %v3194 = vpack.c.bf16 %v2785, %v2777
          %v3195 = vpack.c.bf16 %v2787, %v2779
          %v3196 = vpack.c.bf16 %v2797, %v2789
          %v3197 = vpack.c.bf16 %v2799, %v2791
          %v3198 = vpack.c.bf16 %v2801, %v2793
          %v3199 = vpack.c.bf16 %v2803, %v2795
          %v3200 = vpack.c.bf16 %v2813, %v2805
          %v3201 = vpack.c.bf16 %v2815, %v2807
          %v3202 = vpack.c.bf16 %v2817, %v2809
          %v3203 = vpack.c.bf16 %v2819, %v2811
          %v3220 = vunpack.c.l.b16 %v1402
          %v3221 = vunpack.c.h.b16 %v1402
          %v3222 = vunpack.c.l.b16 %v1403
          %v3223 = vunpack.c.h.b16 %v1403
          %v3224 = vunpack.c.l.b16 %v1404
          %v3225 = vunpack.c.h.b16 %v1404
          %v3226 = vunpack.c.l.b16 %v1405
          %v3227 = vunpack.c.h.b16 %v1405
          %v3228 = vunpack.c.l.b16 %v1406
          %v3229 = vunpack.c.h.b16 %v1406
          %v3230 = vunpack.c.l.b16 %v1407
          %v3231 = vunpack.c.h.b16 %v1407
          %v3232 = vunpack.c.l.b16 %v1408
          %v3233 = vunpack.c.h.b16 %v1408
          %v3234 = vunpack.c.l.b16 %v1409
          %v3235 = vunpack.c.h.b16 %v1409
          %v3236 = vunpack.c.l.b16 %v1410
          %v3237 = vunpack.c.h.b16 %v1410
          %v3238 = vunpack.c.l.b16 %v1411
          %v3239 = vunpack.c.h.b16 %v1411
          %v3240 = vunpack.c.l.b16 %v1412
          %v3241 = vunpack.c.h.b16 %v1412
          %v3242 = vunpack.c.l.b16 %v1413
          %v3243 = vunpack.c.h.b16 %v1413
          %v3244 = vunpack.c.l.b16 %v1414
          %v3245 = vunpack.c.h.b16 %v1414
          %v3246 = vunpack.c.l.b16 %v1415
          %v3247 = vunpack.c.h.b16 %v1415
          %v3248 = vunpack.c.l.b16 %v1416
          %v3249 = vunpack.c.h.b16 %v1416
          %v3250 = vunpack.c.l.b16 %v1417
          %v3251 = vunpack.c.h.b16 %v1417
          %v3252 = vpack.c.b16 %v3224, %v3220
          %v3253 = vpack.c.b16 %v3225, %v3221
          %v3254 = vpack.c.b16 %v3226, %v3222
          %v3255 = vpack.c.b16 %v3227, %v3223
          %v3256 = vpack.c.b16 %v3232, %v3228
          %v3257 = vpack.c.b16 %v3233, %v3229
          %v3258 = vpack.c.b16 %v3234, %v3230
          %v3259 = vpack.c.b16 %v3235, %v3231
          %v3260 = vpack.c.b16 %v3240, %v3236
          %v3261 = vpack.c.b16 %v3241, %v3237
          %v3262 = vpack.c.b16 %v3242, %v3238
          %v3263 = vpack.c.b16 %v3243, %v3239
          %v3264 = vpack.c.b16 %v3248, %v3244
          %v3265 = vpack.c.b16 %v3249, %v3245
          %v3266 = vpack.c.b16 %v3250, %v3246
          %v3267 = vpack.c.b16 %v3251, %v3247
          %3284 = vmatprep.subr.bf16.mxu0 0
          %3285 = vmatpush1.bf16.xpose.msra.mxu0 0
          %3286 = vmatprep.subr.bf16.mxu0 0
          %3287 = vmatpush1.bf16.xpose.msra.mxu0 0
          %3288 = vmatprep.subr.bf16.mxu0 0
          %3289 = vmatpush1.bf16.xpose.msra.mxu0 0
          %3290 = vmatprep.subr.bf16.mxu0 0
          %3291 = vmatpush1.bf16.xpose.msra.mxu0 0
          %3292 = vmatprep.subr.bf16.mxu0 %v3265
          %3293 = vmatpush1.bf16.xpose.msra.mxu0 %v3264
          %3294 = vmatprep.subr.bf16.mxu0 %v3261
          %3295 = vmatpush1.bf16.xpose.msra.mxu0 %v3260
          %3296 = vmatprep.subr.bf16.mxu0 %v3257
          %3297 = vmatpush1.bf16.xpose.msra.mxu0 %v3256
          %3298 = vmatprep.subr.bf16.mxu0 %v3253
          %3299 = vmatpush1.bf16.xpose.msra.mxu0 %v3252
          %3300 = vmatprep.subr.bf16.mxu0 0
          %3301 = vmatpush2.bf16.xpose.msra.mxu0 0
          %3302 = vmatprep.subr.bf16.mxu0 0
          %3303 = vmatpush2.bf16.xpose.msra.mxu0 0
          %3304 = vmatprep.subr.bf16.mxu0 0
          %3305 = vmatpush2.bf16.xpose.msra.mxu0 0
          %3306 = vmatprep.subr.bf16.mxu0 0
          %3307 = vmatpush2.bf16.xpose.msra.mxu0 0
          %3308 = vmatprep.subr.bf16.mxu0 0
          %3309 = vmatpush2.bf16.xpose.msra.mxu0 0
          %3310 = vmatprep.subr.bf16.mxu0 0
          %3311 = vmatpush2.bf16.xpose.msra.mxu0 0
          %3312 = vmatprep.subr.bf16.mxu0 0
          %3313 = vmatpush2.bf16.xpose.msra.mxu0 0
          %3314 = vmatprep.subr.bf16.mxu0 0
          %3315 = vmatpush2.bf16.xpose.msra.mxu0 0
          %3316 = vmatprep.mubr.bf16.mxu0 %v3141
          %3317 = vmatmul.mubr.bf16.gmra.mxu0 %v3140
          %v3318 = vpop.f32.mrf.mxu0
          %v3319 = vadd.f32 0.0, %v3318
          %v3320 = vpop.f32.mrf.mxu0
          %v3321 = vpop.f32.mrf.mxu0
          %v3322 = vadd.f32 0.0, %v3321
          %v3323 = vpop.f32.mrf.mxu0
          %3324 = vmatprep.mubr.bf16.mxu0 %v3145
          %3325 = vmatmul.mubr.bf16.gmra.mxu0 %v3144
          %v3326 = vpop.f32.mrf.mxu0
          %v3327 = vadd.f32 0.0, %v3326
          %v3328 = vpop.f32.mrf.mxu0
          %v3329 = vpop.f32.mrf.mxu0
          %v3330 = vadd.f32 0.0, %v3329
          %v3331 = vpop.f32.mrf.mxu0
          %3332 = vmatprep.mubr.bf16.mxu0 %v3149
          %3333 = vmatmul.mubr.bf16.gmra.mxu0 %v3148
          %v3334 = vpop.f32.mrf.mxu0
          %v3335 = vadd.f32 0.0, %v3334
          %v3336 = vpop.f32.mrf.mxu0
          %v3337 = vpop.f32.mrf.mxu0
          %v3338 = vadd.f32 0.0, %v3337
          %v3339 = vpop.f32.mrf.mxu0
          %3340 = vmatprep.mubr.bf16.mxu0 %v3153
          %3341 = vmatmul.mubr.bf16.gmra.mxu0 %v3152
          %v3342 = vpop.f32.mrf.mxu0
          %v3343 = vadd.f32 0.0, %v3342
          %v3344 = vpop.f32.mrf.mxu0
          %v3345 = vpop.f32.mrf.mxu0
          %v3346 = vadd.f32 0.0, %v3345
          %v3347 = vpop.f32.mrf.mxu0
          %3348 = vmatprep.mubr.bf16.mxu0 %v3157
          %3349 = vmatmul.mubr.bf16.gmra.mxu0 %v3156
          %v3350 = vpop.f32.mrf.mxu0
          %v3351 = vadd.f32 0.0, %v3350
          %v3352 = vpop.f32.mrf.mxu0
          %v3353 = vpop.f32.mrf.mxu0
          %v3354 = vadd.f32 0.0, %v3353
          %v3355 = vpop.f32.mrf.mxu0
          %3356 = vmatprep.mubr.bf16.mxu0 %v3161
          %3357 = vmatmul.mubr.bf16.gmra.mxu0 %v3160
          %v3358 = vpop.f32.mrf.mxu0
          %v3359 = vadd.f32 0.0, %v3358
          %v3360 = vpop.f32.mrf.mxu0
          %v3361 = vpop.f32.mrf.mxu0
          %v3362 = vadd.f32 0.0, %v3361
          %v3363 = vpop.f32.mrf.mxu0
          %3364 = vmatprep.mubr.bf16.mxu0 %v3165
          %3365 = vmatmul.mubr.bf16.gmra.mxu0 %v3164
          %v3366 = vpop.f32.mrf.mxu0
          %v3367 = vadd.f32 0.0, %v3366
          %v3368 = vpop.f32.mrf.mxu0
          %v3369 = vpop.f32.mrf.mxu0
          %v3370 = vadd.f32 0.0, %v3369
          %v3371 = vpop.f32.mrf.mxu0
          %3372 = vmatprep.mubr.bf16.mxu0 %v3169
          %3373 = vmatmul.mubr.bf16.gmra.mxu0 %v3168
          %v3374 = vpop.f32.mrf.mxu0
          %v3375 = vadd.f32 0.0, %v3374
          %v3376 = vpop.f32.mrf.mxu0
          %v3377 = vpop.f32.mrf.mxu0
          %v3378 = vadd.f32 0.0, %v3377
          %v3379 = vpop.f32.mrf.mxu0
          %3380 = vmatprep.mubr.bf16.mxu0 %v3173
          %3381 = vmatmul.mubr.bf16.gmra.mxu0 %v3172
          %v3382 = vpop.f32.mrf.mxu0
          %v3383 = vadd.f32 0.0, %v3382
          %v3384 = vpop.f32.mrf.mxu0
          %v3385 = vpop.f32.mrf.mxu0
          %v3386 = vadd.f32 0.0, %v3385
          %v3387 = vpop.f32.mrf.mxu0
          %3388 = vmatprep.mubr.bf16.mxu0 %v3177
          %3389 = vmatmul.mubr.bf16.gmra.mxu0 %v3176
          %v3390 = vpop.f32.mrf.mxu0
          %v3391 = vadd.f32 0.0, %v3390
          %v3392 = vpop.f32.mrf.mxu0
          %v3393 = vpop.f32.mrf.mxu0
          %v3394 = vadd.f32 0.0, %v3393
          %v3395 = vpop.f32.mrf.mxu0
          %3396 = vmatprep.mubr.bf16.mxu0 %v3181
          %3397 = vmatmul.mubr.bf16.gmra.mxu0 %v3180
          %v3398 = vpop.f32.mrf.mxu0
          %v3399 = vadd.f32 0.0, %v3398
          %v3400 = vpop.f32.mrf.mxu0
          %v3401 = vpop.f32.mrf.mxu0
          %v3402 = vadd.f32 0.0, %v3401
          %v3403 = vpop.f32.mrf.mxu0
          %3404 = vmatprep.mubr.bf16.mxu0 %v3185
          %3405 = vmatmul.mubr.bf16.gmra.mxu0 %v3184
          %v3406 = vpop.f32.mrf.mxu0
          %v3407 = vadd.f32 0.0, %v3406
          %v3408 = vpop.f32.mrf.mxu0
          %v3409 = vpop.f32.mrf.mxu0
          %v3410 = vadd.f32 0.0, %v3409
          %v3411 = vpop.f32.mrf.mxu0
          %3412 = vmatprep.mubr.bf16.mxu0 %v3189
          %3413 = vmatmul.mubr.bf16.gmra.mxu0 %v3188
          %v3414 = vpop.f32.mrf.mxu0
          %v3415 = vadd.f32 0.0, %v3414
          %v3416 = vpop.f32.mrf.mxu0
          %v3417 = vpop.f32.mrf.mxu0
          %v3418 = vadd.f32 0.0, %v3417
          %v3419 = vpop.f32.mrf.mxu0
          %3420 = vmatprep.mubr.bf16.mxu0 %v3193
          %3421 = vmatmul.mubr.bf16.gmra.mxu0 %v3192
          %v3422 = vpop.f32.mrf.mxu0
          %v3423 = vadd.f32 0.0, %v3422
          %v3424 = vpop.f32.mrf.mxu0
          %v3425 = vpop.f32.mrf.mxu0
          %v3426 = vadd.f32 0.0, %v3425
          %v3427 = vpop.f32.mrf.mxu0
          %3428 = vmatprep.mubr.bf16.mxu0 %v3197
          %3429 = vmatmul.mubr.bf16.gmra.mxu0 %v3196
          %v3430 = vpop.f32.mrf.mxu0
          %v3431 = vadd.f32 0.0, %v3430
          %v3432 = vpop.f32.mrf.mxu0
          %v3433 = vpop.f32.mrf.mxu0
          %v3434 = vadd.f32 0.0, %v3433
          %v3435 = vpop.f32.mrf.mxu0
          %3436 = vmatprep.mubr.bf16.mxu0 %v3201
          %3437 = vmatmul.mubr.bf16.gmra.mxu0 %v3200
          %v3438 = vpop.f32.mrf.mxu0
          %v3439 = vadd.f32 0.0, %v3438
          %v3440 = vpop.f32.mrf.mxu0
          %v3441 = vpop.f32.mrf.mxu0
          %v3442 = vadd.f32 0.0, %v3441
          %v3443 = vpop.f32.mrf.mxu0
          %3444 = vdwg.mxu0
          %3445 = vmatprep.subr.bf16.mxu0 0
          %3446 = vmatpush1.bf16.xpose.msra.mxu0 0
          %3447 = vmatprep.subr.bf16.mxu0 0
          %3448 = vmatpush1.bf16.xpose.msra.mxu0 0
          %3449 = vmatprep.subr.bf16.mxu0 0
          %3450 = vmatpush1.bf16.xpose.msra.mxu0 0
          %3451 = vmatprep.subr.bf16.mxu0 0
          %3452 = vmatpush1.bf16.xpose.msra.mxu0 0
          %3453 = vmatprep.subr.bf16.mxu0 %v3267
          %3454 = vmatpush1.bf16.xpose.msra.mxu0 %v3266
          %3455 = vmatprep.subr.bf16.mxu0 %v3263
          %3456 = vmatpush1.bf16.xpose.msra.mxu0 %v3262
          %3457 = vmatprep.subr.bf16.mxu0 %v3259
          %3458 = vmatpush1.bf16.xpose.msra.mxu0 %v3258
          %3459 = vmatprep.subr.bf16.mxu0 %v3255
          %3460 = vmatpush1.bf16.xpose.msra.mxu0 %v3254
          %3461 = vmatprep.subr.bf16.mxu0 0
          %3462 = vmatpush2.bf16.xpose.msra.mxu0 0
          %3463 = vmatprep.subr.bf16.mxu0 0
          %3464 = vmatpush2.bf16.xpose.msra.mxu0 0
          %3465 = vmatprep.subr.bf16.mxu0 0
          %3466 = vmatpush2.bf16.xpose.msra.mxu0 0
          %3467 = vmatprep.subr.bf16.mxu0 0
          %3468 = vmatpush2.bf16.xpose.msra.mxu0 0
          %3469 = vmatprep.subr.bf16.mxu0 0
          %3470 = vmatpush2.bf16.xpose.msra.mxu0 0
          %3471 = vmatprep.subr.bf16.mxu0 0
          %3472 = vmatpush2.bf16.xpose.msra.mxu0 0
          %3473 = vmatprep.subr.bf16.mxu0 0
          %3474 = vmatpush2.bf16.xpose.msra.mxu0 0
          %3475 = vmatprep.subr.bf16.mxu0 0
          %3476 = vmatpush2.bf16.xpose.msra.mxu0 0
          %3477 = vmatprep.mubr.bf16.mxu0 %v3143
          %3478 = vmatmul.mubr.bf16.gmra.mxu0 %v3142
          %v3479 = vpop.f32.mrf.mxu0
          %v3480 = vadd.f32 %v3319, %v3479
          %v3481 = vpop.f32.mrf.mxu0
          %v3482 = vpop.f32.mrf.mxu0
          %v3483 = vadd.f32 %v3322, %v3482
          %v3484 = vpop.f32.mrf.mxu0
          %3485 = vmatprep.mubr.bf16.mxu0 %v3147
          %3486 = vmatmul.mubr.bf16.gmra.mxu0 %v3146
          %v3487 = vpop.f32.mrf.mxu0
          %v3488 = vadd.f32 %v3327, %v3487
          %v3489 = vpop.f32.mrf.mxu0
          %v3490 = vpop.f32.mrf.mxu0
          %v3491 = vadd.f32 %v3330, %v3490
          %v3492 = vpop.f32.mrf.mxu0
          %3493 = vmatprep.mubr.bf16.mxu0 %v3151
          %3494 = vmatmul.mubr.bf16.gmra.mxu0 %v3150
          %v3495 = vpop.f32.mrf.mxu0
          %v3496 = vadd.f32 %v3335, %v3495
          %v3497 = vpop.f32.mrf.mxu0
          %v3498 = vpop.f32.mrf.mxu0
          %v3499 = vadd.f32 %v3338, %v3498
          %v3500 = vpop.f32.mrf.mxu0
          %3501 = vmatprep.mubr.bf16.mxu0 %v3155
          %3502 = vmatmul.mubr.bf16.gmra.mxu0 %v3154
          %v3503 = vpop.f32.mrf.mxu0
          %v3504 = vadd.f32 %v3343, %v3503
          %v3505 = vpop.f32.mrf.mxu0
          %v3506 = vpop.f32.mrf.mxu0
          %v3507 = vadd.f32 %v3346, %v3506
          %v3508 = vpop.f32.mrf.mxu0
          %3509 = vmatprep.mubr.bf16.mxu0 %v3159
          %3510 = vmatmul.mubr.bf16.gmra.mxu0 %v3158
          %v3511 = vpop.f32.mrf.mxu0
          %v3512 = vadd.f32 %v3351, %v3511
          %v3513 = vpop.f32.mrf.mxu0
          %v3514 = vpop.f32.mrf.mxu0
          %v3515 = vadd.f32 %v3354, %v3514
          %v3516 = vpop.f32.mrf.mxu0
          %3517 = vmatprep.mubr.bf16.mxu0 %v3163
          %3518 = vmatmul.mubr.bf16.gmra.mxu0 %v3162
          %v3519 = vpop.f32.mrf.mxu0
          %v3520 = vadd.f32 %v3359, %v3519
          %v3521 = vpop.f32.mrf.mxu0
          %v3522 = vpop.f32.mrf.mxu0
          %v3523 = vadd.f32 %v3362, %v3522
          %v3524 = vpop.f32.mrf.mxu0
          %3525 = vmatprep.mubr.bf16.mxu0 %v3167
          %3526 = vmatmul.mubr.bf16.gmra.mxu0 %v3166
          %v3527 = vpop.f32.mrf.mxu0
          %v3528 = vadd.f32 %v3367, %v3527
          %v3529 = vpop.f32.mrf.mxu0
          %v3530 = vpop.f32.mrf.mxu0
          %v3531 = vadd.f32 %v3370, %v3530
          %v3532 = vpop.f32.mrf.mxu0
          %3533 = vmatprep.mubr.bf16.mxu0 %v3171
          %3534 = vmatmul.mubr.bf16.gmra.mxu0 %v3170
          %v3535 = vpop.f32.mrf.mxu0
          %v3536 = vadd.f32 %v3375, %v3535
          %v3537 = vpop.f32.mrf.mxu0
          %v3538 = vpop.f32.mrf.mxu0
          %v3539 = vadd.f32 %v3378, %v3538
          %v3540 = vpop.f32.mrf.mxu0
          %3541 = vmatprep.mubr.bf16.mxu0 %v3175
          %3542 = vmatmul.mubr.bf16.gmra.mxu0 %v3174
          %v3543 = vpop.f32.mrf.mxu0
          %v3544 = vadd.f32 %v3383, %v3543
          %v3545 = vpop.f32.mrf.mxu0
          %v3546 = vpop.f32.mrf.mxu0
          %v3547 = vadd.f32 %v3386, %v3546
          %v3548 = vpop.f32.mrf.mxu0
          %3549 = vmatprep.mubr.bf16.mxu0 %v3179
          %3550 = vmatmul.mubr.bf16.gmra.mxu0 %v3178
          %v3551 = vpop.f32.mrf.mxu0
          %v3552 = vadd.f32 %v3391, %v3551
          %v3553 = vpop.f32.mrf.mxu0
          %v3554 = vpop.f32.mrf.mxu0
          %v3555 = vadd.f32 %v3394, %v3554
          %v3556 = vpop.f32.mrf.mxu0
          %3557 = vmatprep.mubr.bf16.mxu0 %v3183
          %3558 = vmatmul.mubr.bf16.gmra.mxu0 %v3182
          %v3559 = vpop.f32.mrf.mxu0
          %v3560 = vadd.f32 %v3399, %v3559
          %v3561 = vpop.f32.mrf.mxu0
          %v3562 = vpop.f32.mrf.mxu0
          %v3563 = vadd.f32 %v3402, %v3562
          %v3564 = vpop.f32.mrf.mxu0
          %3565 = vmatprep.mubr.bf16.mxu0 %v3187
          %3566 = vmatmul.mubr.bf16.gmra.mxu0 %v3186
          %v3567 = vpop.f32.mrf.mxu0
          %v3568 = vadd.f32 %v3407, %v3567
          %v3569 = vpop.f32.mrf.mxu0
          %v3570 = vpop.f32.mrf.mxu0
          %v3571 = vadd.f32 %v3410, %v3570
          %v3572 = vpop.f32.mrf.mxu0
          %3573 = vmatprep.mubr.bf16.mxu0 %v3191
          %3574 = vmatmul.mubr.bf16.gmra.mxu0 %v3190
          %v3575 = vpop.f32.mrf.mxu0
          %v3576 = vadd.f32 %v3415, %v3575
          %v3577 = vpop.f32.mrf.mxu0
          %v3578 = vpop.f32.mrf.mxu0
          %v3579 = vadd.f32 %v3418, %v3578
          %v3580 = vpop.f32.mrf.mxu0
          %3581 = vmatprep.mubr.bf16.mxu0 %v3195
          %3582 = vmatmul.mubr.bf16.gmra.mxu0 %v3194
          %v3583 = vpop.f32.mrf.mxu0
          %v3584 = vadd.f32 %v3423, %v3583
          %v3585 = vpop.f32.mrf.mxu0
          %v3586 = vpop.f32.mrf.mxu0
          %v3587 = vadd.f32 %v3426, %v3586
          %v3588 = vpop.f32.mrf.mxu0
          %3589 = vmatprep.mubr.bf16.mxu0 %v3199
          %3590 = vmatmul.mubr.bf16.gmra.mxu0 %v3198
          %v3591 = vpop.f32.mrf.mxu0
          %v3592 = vadd.f32 %v3431, %v3591
          %v3593 = vpop.f32.mrf.mxu0
          %v3594 = vpop.f32.mrf.mxu0
          %v3595 = vadd.f32 %v3434, %v3594
          %v3596 = vpop.f32.mrf.mxu0
          %3597 = vmatprep.mubr.bf16.mxu0 %v3203
          %3598 = vmatmul.mubr.bf16.gmra.mxu0 %v3202
          %v3599 = vpop.f32.mrf.mxu0
          %v3600 = vadd.f32 %v3439, %v3599
          %v3601 = vpop.f32.mrf.mxu0
          %v3602 = vpop.f32.mrf.mxu0
          %v3603 = vadd.f32 %v3442, %v3602
          %v3604 = vpop.f32.mrf.mxu0
          %3605 = vdwg.mxu0
          %v3606 = vld [vmem:[#allocation7] sm:$0xff]
          %v3607 = vld [vmem:[#allocation7 + $0x8] sm:$0xff]
          %v3608 = vld [vmem:[#allocation7 + $0x10] sm:$0xff]
          %v3609 = vld [vmem:[#allocation7 + $0x18] sm:$0xff]
          %v3610 = vld [vmem:[#allocation7 + $0x20] sm:$0xff]
          %v3611 = vld [vmem:[#allocation7 + $0x28] sm:$0xff]
          %v3612 = vld [vmem:[#allocation7 + $0x30] sm:$0xff]
          %v3613 = vld [vmem:[#allocation7 + $0x38] sm:$0xff]
          %v3614 = vld [vmem:[#allocation7 + $0x40] sm:$0xff]
          %v3615 = vld [vmem:[#allocation7 + $0x48] sm:$0xff]
          %v3616 = vld [vmem:[#allocation7 + $0x50] sm:$0xff]
          %v3617 = vld [vmem:[#allocation7 + $0x58] sm:$0xff]
          %v3618 = vld [vmem:[#allocation7 + $0x60] sm:$0xff]
          %v3619 = vld [vmem:[#allocation7 + $0x68] sm:$0xff]
          %v3620 = vld [vmem:[#allocation7 + $0x70] sm:$0xff]
          %v3621 = vld [vmem:[#allocation7 + $0x78] sm:$0xff]
          %v3622 = vld [vmem:[#allocation7 + $0x80] sm:$0xff]
          %v3623 = vld [vmem:[#allocation7 + $0x88] sm:$0xff]
          %v3624 = vld [vmem:[#allocation7 + $0x90] sm:$0xff]
          %v3625 = vld [vmem:[#allocation7 + $0x98] sm:$0xff]
          %v3626 = vld [vmem:[#allocation7 + $0xa0] sm:$0xff]
          %v3627 = vld [vmem:[#allocation7 + $0xa8] sm:$0xff]
          %v3628 = vld [vmem:[#allocation7 + $0xb0] sm:$0xff]
          %v3629 = vld [vmem:[#allocation7 + $0xb8] sm:$0xff]
          %v3630 = vld [vmem:[#allocation7 + $0xc0] sm:$0xff]
          %v3631 = vld [vmem:[#allocation7 + $0xc8] sm:$0xff]
          %v3632 = vld [vmem:[#allocation7 + $0xd0] sm:$0xff]
          %v3633 = vld [vmem:[#allocation7 + $0xd8] sm:$0xff]
          %v3634 = vld [vmem:[#allocation7 + $0xe0] sm:$0xff]
          %v3635 = vld [vmem:[#allocation7 + $0xe8] sm:$0xff]
          %v3636 = vld [vmem:[#allocation7 + $0xf0] sm:$0xff]
          %v3637 = vld [vmem:[#allocation7 + $0xf8] sm:$0xff]
          %3639 = vset.pattern.permute.xlu0 0
          %3640 = vperm.xlu0 %3639, %v2213
          %v3641 = vpop.permute.xlu0 %3640
          %3644 = vset.pattern.permute.xlu0 0
          %3645 = vperm.xlu0 %3644, %v2215
          %v3646 = vpop.permute.xlu0 %3645
          %3649 = vset.pattern.permute.xlu0 0
          %3650 = vperm.xlu0 %3649, %v2217
          %v3651 = vpop.permute.xlu0 %3650
          %3654 = vset.pattern.permute.xlu0 0
          %3655 = vperm.xlu0 %3654, %v2219
          %v3656 = vpop.permute.xlu0 %3655
          %3659 = vset.pattern.permute.xlu0 0
          %3660 = vperm.xlu0 %3659, %v2221
          %v3661 = vpop.permute.xlu0 %3660
          %3664 = vset.pattern.permute.xlu0 0
          %3665 = vperm.xlu0 %3664, %v2223
          %v3666 = vpop.permute.xlu0 %3665
          %3669 = vset.pattern.permute.xlu0 0
          %3670 = vperm.xlu0 %3669, %v2225
          %v3671 = vpop.permute.xlu0 %3670
          %3674 = vset.pattern.permute.xlu0 0
          %3675 = vperm.xlu0 %3674, %v2227
          %v3676 = vpop.permute.xlu0 %3675
          %3679 = vset.pattern.permute.xlu0 0
          %3680 = vperm.xlu0 %3679, %v2229
          %v3681 = vpop.permute.xlu0 %3680
          %3684 = vset.pattern.permute.xlu0 0
          %3685 = vperm.xlu0 %3684, %v2231
          %v3686 = vpop.permute.xlu0 %3685
          %3689 = vset.pattern.permute.xlu0 0
          %3690 = vperm.xlu0 %3689, %v2233
          %v3691 = vpop.permute.xlu0 %3690
          %3694 = vset.pattern.permute.xlu0 0
          %3695 = vperm.xlu0 %3694, %v2235
          %v3696 = vpop.permute.xlu0 %3695
          %3699 = vset.pattern.permute.xlu0 0
          %3700 = vperm.xlu0 %3699, %v2237
          %v3701 = vpop.permute.xlu0 %3700
          %3704 = vset.pattern.permute.xlu0 0
          %3705 = vperm.xlu0 %3704, %v2239
          %v3706 = vpop.permute.xlu0 %3705
          %3709 = vset.pattern.permute.xlu0 0
          %3710 = vperm.xlu0 %3709, %v2241
          %v3711 = vpop.permute.xlu0 %3710
          %3714 = vset.pattern.permute.xlu0 0
          %3715 = vperm.xlu0 %3714, %v2243
          %v3716 = vpop.permute.xlu0 %3715
          %3719 = vset.pattern.permute.xlu0 0
          %3720 = vperm.xlu0 %3719, %v2245
          %v3721 = vpop.permute.xlu0 %3720
          %3724 = vset.pattern.permute.xlu0 0
          %3725 = vperm.xlu0 %3724, %v2247
          %v3726 = vpop.permute.xlu0 %3725
          %3729 = vset.pattern.permute.xlu0 0
          %3730 = vperm.xlu0 %3729, %v2249
          %v3731 = vpop.permute.xlu0 %3730
          %3734 = vset.pattern.permute.xlu0 0
          %3735 = vperm.xlu0 %3734, %v2251
          %v3736 = vpop.permute.xlu0 %3735
          %3739 = vset.pattern.permute.xlu0 0
          %3740 = vperm.xlu0 %3739, %v2253
          %v3741 = vpop.permute.xlu0 %3740
          %3744 = vset.pattern.permute.xlu0 0
          %3745 = vperm.xlu0 %3744, %v2255
          %v3746 = vpop.permute.xlu0 %3745
          %3749 = vset.pattern.permute.xlu0 0
          %3750 = vperm.xlu0 %3749, %v2257
          %v3751 = vpop.permute.xlu0 %3750
          %3754 = vset.pattern.permute.xlu0 0
          %3755 = vperm.xlu0 %3754, %v2259
          %v3756 = vpop.permute.xlu0 %3755
          %3759 = vset.pattern.permute.xlu0 0
          %3760 = vperm.xlu0 %3759, %v2261
          %v3761 = vpop.permute.xlu0 %3760
          %3764 = vset.pattern.permute.xlu0 0
          %3765 = vperm.xlu0 %3764, %v2263
          %v3766 = vpop.permute.xlu0 %3765
          %3769 = vset.pattern.permute.xlu0 0
          %3770 = vperm.xlu0 %3769, %v2265
          %v3771 = vpop.permute.xlu0 %3770
          %3774 = vset.pattern.permute.xlu0 0
          %3775 = vperm.xlu0 %3774, %v2267
          %v3776 = vpop.permute.xlu0 %3775
          %3779 = vset.pattern.permute.xlu0 0
          %3780 = vperm.xlu0 %3779, %v2269
          %v3781 = vpop.permute.xlu0 %3780
          %3784 = vset.pattern.permute.xlu0 0
          %3785 = vperm.xlu0 %3784, %v2271
          %v3786 = vpop.permute.xlu0 %3785
          %3789 = vset.pattern.permute.xlu0 0
          %3790 = vperm.xlu0 %3789, %v2273
          %v3791 = vpop.permute.xlu0 %3790
          %3794 = vset.pattern.permute.xlu0 0
          %3795 = vperm.xlu0 %3794, %v2275
          %v3796 = vpop.permute.xlu0 %3795
          %v3798 = vmul.f32 %v3606, %v3641
          %v3799 = vmul.f32 %v3607, %v3646
          %v3800 = vmul.f32 %v3608, %v3651
          %v3801 = vmul.f32 %v3609, %v3656
          %v3802 = vmul.f32 %v3610, %v3661
          %v3803 = vmul.f32 %v3611, %v3666
          %v3804 = vmul.f32 %v3612, %v3671
          %v3805 = vmul.f32 %v3613, %v3676
          %v3806 = vmul.f32 %v3614, %v3681
          %v3807 = vmul.f32 %v3615, %v3686
          %v3808 = vmul.f32 %v3616, %v3691
          %v3809 = vmul.f32 %v3617, %v3696
          %v3810 = vmul.f32 %v3618, %v3701
          %v3811 = vmul.f32 %v3619, %v3706
          %v3812 = vmul.f32 %v3620, %v3711
          %v3813 = vmul.f32 %v3621, %v3716
          %v3814 = vmul.f32 %v3622, %v3721
          %v3815 = vmul.f32 %v3623, %v3726
          %v3816 = vmul.f32 %v3624, %v3731
          %v3817 = vmul.f32 %v3625, %v3736
          %v3818 = vmul.f32 %v3626, %v3741
          %v3819 = vmul.f32 %v3627, %v3746
          %v3820 = vmul.f32 %v3628, %v3751
          %v3821 = vmul.f32 %v3629, %v3756
          %v3822 = vmul.f32 %v3630, %v3761
          %v3823 = vmul.f32 %v3631, %v3766
          %v3824 = vmul.f32 %v3632, %v3771
          %v3825 = vmul.f32 %v3633, %v3776
          %v3826 = vmul.f32 %v3634, %v3781
          %v3827 = vmul.f32 %v3635, %v3786
          %v3828 = vmul.f32 %v3636, %v3791
          %v3829 = vmul.f32 %v3637, %v3796
          %v3830 = vadd.f32 %v3798, %v3480
          %v3831 = vadd.f32 %v3799, %v3483
          %v3832 = vadd.f32 %v3800, %v3488
          %v3833 = vadd.f32 %v3801, %v3491
          %v3834 = vadd.f32 %v3802, %v3496
          %v3835 = vadd.f32 %v3803, %v3499
          %v3836 = vadd.f32 %v3804, %v3504
          %v3837 = vadd.f32 %v3805, %v3507
          %v3838 = vadd.f32 %v3806, %v3512
          %v3839 = vadd.f32 %v3807, %v3515
          %v3840 = vadd.f32 %v3808, %v3520
          %v3841 = vadd.f32 %v3809, %v3523
          %v3842 = vadd.f32 %v3810, %v3528
          %v3843 = vadd.f32 %v3811, %v3531
          %v3844 = vadd.f32 %v3812, %v3536
          %v3845 = vadd.f32 %v3813, %v3539
          %v3846 = vadd.f32 %v3814, %v3544
          %v3847 = vadd.f32 %v3815, %v3547
          %v3848 = vadd.f32 %v3816, %v3552
          %v3849 = vadd.f32 %v3817, %v3555
          %v3850 = vadd.f32 %v3818, %v3560
          %v3851 = vadd.f32 %v3819, %v3563
          %v3852 = vadd.f32 %v3820, %v3568
          %v3853 = vadd.f32 %v3821, %v3571
          %v3854 = vadd.f32 %v3822, %v3576
          %v3855 = vadd.f32 %v3823, %v3579
          %v3856 = vadd.f32 %v3824, %v3584
          %v3857 = vadd.f32 %v3825, %v3587
          %v3858 = vadd.f32 %v3826, %v3592
          %v3859 = vadd.f32 %v3827, %v3595
          %v3860 = vadd.f32 %v3828, %v3600
          %v3861 = vadd.f32 %v3829, %v3603
          %3862 = vst.msk [vmem:[#allocation7] sm:$0xff] %vm1354, %v3830
          %3863 = vst.msk [vmem:[#allocation7 + $0x8] sm:$0xff] %vm1354, %v3831
          %3864 = vst.msk [vmem:[#allocation7 + $0x10] sm:$0xff] %vm1354, %v3832
          %3865 = vst.msk [vmem:[#allocation7 + $0x18] sm:$0xff] %vm1354, %v3833
          %3866 = vst.msk [vmem:[#allocation7 + $0x20] sm:$0xff] %vm1354, %v3834
          %3867 = vst.msk [vmem:[#allocation7 + $0x28] sm:$0xff] %vm1354, %v3835
          %3868 = vst.msk [vmem:[#allocation7 + $0x30] sm:$0xff] %vm1354, %v3836
          %3869 = vst.msk [vmem:[#allocation7 + $0x38] sm:$0xff] %vm1354, %v3837
          %3870 = vst.msk [vmem:[#allocation7 + $0x40] sm:$0xff] %vm1354, %v3838
          %3871 = vst.msk [vmem:[#allocation7 + $0x48] sm:$0xff] %vm1354, %v3839
          %3872 = vst.msk [vmem:[#allocation7 + $0x50] sm:$0xff] %vm1354, %v3840
          %3873 = vst.msk [vmem:[#allocation7 + $0x58] sm:$0xff] %vm1354, %v3841
          %3874 = vst.msk [vmem:[#allocation7 + $0x60] sm:$0xff] %vm1354, %v3842
          %3875 = vst.msk [vmem:[#allocation7 + $0x68] sm:$0xff] %vm1354, %v3843
          %3876 = vst.msk [vmem:[#allocation7 + $0x70] sm:$0xff] %vm1354, %v3844
          %3877 = vst.msk [vmem:[#allocation7 + $0x78] sm:$0xff] %vm1354, %v3845
          %3878 = vst.msk [vmem:[#allocation7 + $0x80] sm:$0xff] %vm1354, %v3846
          %3879 = vst.msk [vmem:[#allocation7 + $0x88] sm:$0xff] %vm1354, %v3847
          %3880 = vst.msk [vmem:[#allocation7 + $0x90] sm:$0xff] %vm1354, %v3848
          %3881 = vst.msk [vmem:[#allocation7 + $0x98] sm:$0xff] %vm1354, %v3849
          %3882 = vst.msk [vmem:[#allocation7 + $0xa0] sm:$0xff] %vm1354, %v3850
          %3883 = vst.msk [vmem:[#allocation7 + $0xa8] sm:$0xff] %vm1354, %v3851
          %3884 = vst.msk [vmem:[#allocation7 + $0xb0] sm:$0xff] %vm1354, %v3852
          %3885 = vst.msk [vmem:[#allocation7 + $0xb8] sm:$0xff] %vm1354, %v3853
          %3886 = vst.msk [vmem:[#allocation7 + $0xc0] sm:$0xff] %vm1354, %v3854
          %3887 = vst.msk [vmem:[#allocation7 + $0xc8] sm:$0xff] %vm1354, %v3855
          %3888 = vst.msk [vmem:[#allocation7 + $0xd0] sm:$0xff] %vm1354, %v3856
          %3889 = vst.msk [vmem:[#allocation7 + $0xd8] sm:$0xff] %vm1354, %v3857
          %3890 = vst.msk [vmem:[#allocation7 + $0xe0] sm:$0xff] %vm1354, %v3858
          %3891 = vst.msk [vmem:[#allocation7 + $0xe8] sm:$0xff] %vm1354, %v3859
          %3892 = vst.msk [vmem:[#allocation7 + $0xf0] sm:$0xff] %vm1354, %v3860
          %3893 = vst.msk [vmem:[#allocation7 + $0xf8] sm:$0xff] %vm1354, %v3861
        $region60: #{tpu_custom_call.1} parent=39 // loop_footer
          %s1392 = sadd.s32 1, %s1388
        $region61: #{tpu_custom_call.1} parent=39 // loop_footer_branch
          %1387 = sbr.rel target = $region57
        $region62: #{tpu_custom_call.1} parent=39 // loop_exit
          _
        %v3894 = vld [vmem:[#allocation7] sm:$0xff]
        %v3895 = vld [vmem:[#allocation7 + $0x8] sm:$0xff]
        %v3896 = vld [vmem:[#allocation7 + $0x10] sm:$0xff]
        %v3897 = vld [vmem:[#allocation7 + $0x18] sm:$0xff]
        %v3898 = vld [vmem:[#allocation7 + $0x20] sm:$0xff]
        %v3899 = vld [vmem:[#allocation7 + $0x28] sm:$0xff]
        %v3900 = vld [vmem:[#allocation7 + $0x30] sm:$0xff]
        %v3901 = vld [vmem:[#allocation7 + $0x38] sm:$0xff]
        %v3902 = vld [vmem:[#allocation7 + $0x40] sm:$0xff]
        %v3903 = vld [vmem:[#allocation7 + $0x48] sm:$0xff]
        %v3904 = vld [vmem:[#allocation7 + $0x50] sm:$0xff]
        %v3905 = vld [vmem:[#allocation7 + $0x58] sm:$0xff]
        %v3906 = vld [vmem:[#allocation7 + $0x60] sm:$0xff]
        %v3907 = vld [vmem:[#allocation7 + $0x68] sm:$0xff]
        %v3908 = vld [vmem:[#allocation7 + $0x70] sm:$0xff]
        %v3909 = vld [vmem:[#allocation7 + $0x78] sm:$0xff]
        %v3910 = vld [vmem:[#allocation7 + $0x80] sm:$0xff]
        %v3911 = vld [vmem:[#allocation7 + $0x88] sm:$0xff]
        %v3912 = vld [vmem:[#allocation7 + $0x90] sm:$0xff]
        %v3913 = vld [vmem:[#allocation7 + $0x98] sm:$0xff]
        %v3914 = vld [vmem:[#allocation7 + $0xa0] sm:$0xff]
        %v3915 = vld [vmem:[#allocation7 + $0xa8] sm:$0xff]
        %v3916 = vld [vmem:[#allocation7 + $0xb0] sm:$0xff]
        %v3917 = vld [vmem:[#allocation7 + $0xb8] sm:$0xff]
        %v3918 = vld [vmem:[#allocation7 + $0xc0] sm:$0xff]
        %v3919 = vld [vmem:[#allocation7 + $0xc8] sm:$0xff]
        %v3920 = vld [vmem:[#allocation7 + $0xd0] sm:$0xff]
        %v3921 = vld [vmem:[#allocation7 + $0xd8] sm:$0xff]
        %v3922 = vld [vmem:[#allocation7 + $0xe0] sm:$0xff]
        %v3923 = vld [vmem:[#allocation7 + $0xe8] sm:$0xff]
        %v3924 = vld [vmem:[#allocation7 + $0xf0] sm:$0xff]
        %v3925 = vld [vmem:[#allocation7 + $0xf8] sm:$0xff]
        %v3926 = vld [vmem:[#allocation6] sm:$0xff]
        %v3927 = vld [vmem:[#allocation6 + $0x8] sm:$0xff]
        %v3928 = vld [vmem:[#allocation6 + $0x10] sm:$0xff]
        %v3929 = vld [vmem:[#allocation6 + $0x18] sm:$0xff]
        %v3930 = vld [vmem:[#allocation6 + $0x20] sm:$0xff]
        %v3931 = vld [vmem:[#allocation6 + $0x28] sm:$0xff]
        %v3932 = vld [vmem:[#allocation6 + $0x30] sm:$0xff]
        %v3933 = vld [vmem:[#allocation6 + $0x38] sm:$0xff]
        %v3934 = vld [vmem:[#allocation6 + $0x40] sm:$0xff]
        %v3935 = vld [vmem:[#allocation6 + $0x48] sm:$0xff]
        %v3936 = vld [vmem:[#allocation6 + $0x50] sm:$0xff]
        %v3937 = vld [vmem:[#allocation6 + $0x58] sm:$0xff]
        %v3938 = vld [vmem:[#allocation6 + $0x60] sm:$0xff]
        %v3939 = vld [vmem:[#allocation6 + $0x68] sm:$0xff]
        %v3940 = vld [vmem:[#allocation6 + $0x70] sm:$0xff]
        %v3941 = vld [vmem:[#allocation6 + $0x78] sm:$0xff]
        %v3942 = vld [vmem:[#allocation6 + $0x80] sm:$0xff]
        %v3943 = vld [vmem:[#allocation6 + $0x88] sm:$0xff]
        %v3944 = vld [vmem:[#allocation6 + $0x90] sm:$0xff]
        %v3945 = vld [vmem:[#allocation6 + $0x98] sm:$0xff]
        %v3946 = vld [vmem:[#allocation6 + $0xa0] sm:$0xff]
        %v3947 = vld [vmem:[#allocation6 + $0xa8] sm:$0xff]
        %v3948 = vld [vmem:[#allocation6 + $0xb0] sm:$0xff]
        %v3949 = vld [vmem:[#allocation6 + $0xb8] sm:$0xff]
        %v3950 = vld [vmem:[#allocation6 + $0xc0] sm:$0xff]
        %v3951 = vld [vmem:[#allocation6 + $0xc8] sm:$0xff]
        %v3952 = vld [vmem:[#allocation6 + $0xd0] sm:$0xff]
        %v3953 = vld [vmem:[#allocation6 + $0xd8] sm:$0xff]
        %v3954 = vld [vmem:[#allocation6 + $0xe0] sm:$0xff]
        %v3955 = vld [vmem:[#allocation6 + $0xe8] sm:$0xff]
        %v3956 = vld [vmem:[#allocation6 + $0xf0] sm:$0xff]
        %v3957 = vld [vmem:[#allocation6 + $0xf8] sm:$0xff]
        %v3958 = vrcp.pop %v3926
        %v3959 = vrcp.pop %v3927
        %v3960 = vrcp.pop %v3928
        %v3961 = vrcp.pop %v3929
        %v3962 = vrcp.pop %v3930
        %v3963 = vrcp.pop %v3931
        %v3964 = vrcp.pop %v3932
        %v3965 = vrcp.pop %v3933
        %v3966 = vrcp.pop %v3934
        %v3967 = vrcp.pop %v3935
        %v3968 = vrcp.pop %v3936
        %v3969 = vrcp.pop %v3937
        %v3970 = vrcp.pop %v3938
        %v3971 = vrcp.pop %v3939
        %v3972 = vrcp.pop %v3940
        %v3973 = vrcp.pop %v3941
        %v3974 = vrcp.pop %v3942
        %v3975 = vrcp.pop %v3943
        %v3976 = vrcp.pop %v3944
        %v3977 = vrcp.pop %v3945
        %v3978 = vrcp.pop %v3946
        %v3979 = vrcp.pop %v3947
        %v3980 = vrcp.pop %v3948
        %v3981 = vrcp.pop %v3949
        %v3982 = vrcp.pop %v3950
        %v3983 = vrcp.pop %v3951
        %v3984 = vrcp.pop %v3952
        %v3985 = vrcp.pop %v3953
        %v3986 = vrcp.pop %v3954
        %v3987 = vrcp.pop %v3955
        %v3988 = vrcp.pop %v3956
        %v3989 = vrcp.pop %v3957
        %3991 = vset.pattern.permute.xlu0 0
        %3992 = vperm.xlu0 %3991, %v3958
        %v3993 = vpop.permute.xlu0 %3992
        %3996 = vset.pattern.permute.xlu0 0
        %3997 = vperm.xlu0 %3996, %v3959
        %v3998 = vpop.permute.xlu0 %3997
        %4001 = vset.pattern.permute.xlu0 0
        %4002 = vperm.xlu0 %4001, %v3960
        %v4003 = vpop.permute.xlu0 %4002
        %4006 = vset.pattern.permute.xlu0 0
        %4007 = vperm.xlu0 %4006, %v3961
        %v4008 = vpop.permute.xlu0 %4007
        %4011 = vset.pattern.permute.xlu0 0
        %4012 = vperm.xlu0 %4011, %v3962
        %v4013 = vpop.permute.xlu0 %4012
        %4016 = vset.pattern.permute.xlu0 0
        %4017 = vperm.xlu0 %4016, %v3963
        %v4018 = vpop.permute.xlu0 %4017
        %4021 = vset.pattern.permute.xlu0 0
        %4022 = vperm.xlu0 %4021, %v3964
        %v4023 = vpop.permute.xlu0 %4022
        %4026 = vset.pattern.permute.xlu0 0
        %4027 = vperm.xlu0 %4026, %v3965
        %v4028 = vpop.permute.xlu0 %4027
        %4031 = vset.pattern.permute.xlu0 0
        %4032 = vperm.xlu0 %4031, %v3966
        %v4033 = vpop.permute.xlu0 %4032
        %4036 = vset.pattern.permute.xlu0 0
        %4037 = vperm.xlu0 %4036, %v3967
        %v4038 = vpop.permute.xlu0 %4037
        %4041 = vset.pattern.permute.xlu0 0
        %4042 = vperm.xlu0 %4041, %v3968
        %v4043 = vpop.permute.xlu0 %4042
        %4046 = vset.pattern.permute.xlu0 0
        %4047 = vperm.xlu0 %4046, %v3969
        %v4048 = vpop.permute.xlu0 %4047
        %4051 = vset.pattern.permute.xlu0 0
        %4052 = vperm.xlu0 %4051, %v3970
        %v4053 = vpop.permute.xlu0 %4052
        %4056 = vset.pattern.permute.xlu0 0
        %4057 = vperm.xlu0 %4056, %v3971
        %v4058 = vpop.permute.xlu0 %4057
        %4061 = vset.pattern.permute.xlu0 0
        %4062 = vperm.xlu0 %4061, %v3972
        %v4063 = vpop.permute.xlu0 %4062
        %4066 = vset.pattern.permute.xlu0 0
        %4067 = vperm.xlu0 %4066, %v3973
        %v4068 = vpop.permute.xlu0 %4067
        %4071 = vset.pattern.permute.xlu0 0
        %4072 = vperm.xlu0 %4071, %v3974
        %v4073 = vpop.permute.xlu0 %4072
        %4076 = vset.pattern.permute.xlu0 0
        %4077 = vperm.xlu0 %4076, %v3975
        %v4078 = vpop.permute.xlu0 %4077
        %4081 = vset.pattern.permute.xlu0 0
        %4082 = vperm.xlu0 %4081, %v3976
        %v4083 = vpop.permute.xlu0 %4082
        %4086 = vset.pattern.permute.xlu0 0
        %4087 = vperm.xlu0 %4086, %v3977
        %v4088 = vpop.permute.xlu0 %4087
        %4091 = vset.pattern.permute.xlu0 0
        %4092 = vperm.xlu0 %4091, %v3978
        %v4093 = vpop.permute.xlu0 %4092
        %4096 = vset.pattern.permute.xlu0 0
        %4097 = vperm.xlu0 %4096, %v3979
        %v4098 = vpop.permute.xlu0 %4097
        %4101 = vset.pattern.permute.xlu0 0
        %4102 = vperm.xlu0 %4101, %v3980
        %v4103 = vpop.permute.xlu0 %4102
        %4106 = vset.pattern.permute.xlu0 0
        %4107 = vperm.xlu0 %4106, %v3981
        %v4108 = vpop.permute.xlu0 %4107
        %4111 = vset.pattern.permute.xlu0 0
        %4112 = vperm.xlu0 %4111, %v3982
        %v4113 = vpop.permute.xlu0 %4112
        %4116 = vset.pattern.permute.xlu0 0
        %4117 = vperm.xlu0 %4116, %v3983
        %v4118 = vpop.permute.xlu0 %4117
        %4121 = vset.pattern.permute.xlu0 0
        %4122 = vperm.xlu0 %4121, %v3984
        %v4123 = vpop.permute.xlu0 %4122
        %4126 = vset.pattern.permute.xlu0 0
        %4127 = vperm.xlu0 %4126, %v3985
        %v4128 = vpop.permute.xlu0 %4127
        %4131 = vset.pattern.permute.xlu0 0
        %4132 = vperm.xlu0 %4131, %v3986
        %v4133 = vpop.permute.xlu0 %4132
        %4136 = vset.pattern.permute.xlu0 0
        %4137 = vperm.xlu0 %4136, %v3987
        %v4138 = vpop.permute.xlu0 %4137
        %4141 = vset.pattern.permute.xlu0 0
        %4142 = vperm.xlu0 %4141, %v3988
        %v4143 = vpop.permute.xlu0 %4142
        %4146 = vset.pattern.permute.xlu0 0
        %4147 = vperm.xlu0 %4146, %v3989
        %v4148 = vpop.permute.xlu0 %4147
        %v4150 = vmul.f32 %v3894, %v3993
        %v4151 = vmul.f32 %v3895, %v3998
        %v4152 = vmul.f32 %v3896, %v4003
        %v4153 = vmul.f32 %v3897, %v4008
        %v4154 = vmul.f32 %v3898, %v4013
        %v4155 = vmul.f32 %v3899, %v4018
        %v4156 = vmul.f32 %v3900, %v4023
        %v4157 = vmul.f32 %v3901, %v4028
        %v4158 = vmul.f32 %v3902, %v4033
        %v4159 = vmul.f32 %v3903, %v4038
        %v4160 = vmul.f32 %v3904, %v4043
        %v4161 = vmul.f32 %v3905, %v4048
        %v4162 = vmul.f32 %v3906, %v4053
        %v4163 = vmul.f32 %v3907, %v4058
        %v4164 = vmul.f32 %v3908, %v4063
        %v4165 = vmul.f32 %v3909, %v4068
        %v4166 = vmul.f32 %v3910, %v4073
        %v4167 = vmul.f32 %v3911, %v4078
        %v4168 = vmul.f32 %v3912, %v4083
        %v4169 = vmul.f32 %v3913, %v4088
        %v4170 = vmul.f32 %v3914, %v4093
        %v4171 = vmul.f32 %v3915, %v4098
        %v4172 = vmul.f32 %v3916, %v4103
        %v4173 = vmul.f32 %v3917, %v4108
        %v4174 = vmul.f32 %v3918, %v4113
        %v4175 = vmul.f32 %v3919, %v4118
        %v4176 = vmul.f32 %v3920, %v4123
        %v4177 = vmul.f32 %v3921, %v4128
        %v4178 = vmul.f32 %v3922, %v4133
        %v4179 = vmul.f32 %v3923, %v4138
        %v4180 = vmul.f32 %v3924, %v4143
        %v4181 = vmul.f32 %v3925, %v4148
        %4182 = vxpose.xlu0.b32.start [1/16] %v4150, 128
        %4183 = vxpose.xlu0.b32.cont [2/16] %v4151, 128
        %4184 = vxpose.xlu0.b32.cont [3/16] %v4152, 128
        %4185 = vxpose.xlu0.b32.cont [4/16] %v4153, 128
        %4186 = vxpose.xlu0.b32.cont [5/16] %v4154, 128
        %4187 = vxpose.xlu0.b32.cont [6/16] %v4155, 128
        %4188 = vxpose.xlu0.b32.cont [7/16] %v4156, 128
        %4189 = vxpose.xlu0.b32.cont [8/16] %v4157, 128
        %4190 = vxpose.xlu0.b32.cont [9/16] %v4158, 128
        %4191 = vxpose.xlu0.b32.cont [10/16] %v4159, 128
        %4192 = vxpose.xlu0.b32.cont [11/16] %v4160, 128
        %4193 = vxpose.xlu0.b32.cont [12/16] %v4161, 128
        %4194 = vxpose.xlu0.b32.cont [13/16] %v4162, 128
        %4195 = vxpose.xlu0.b32.cont [14/16] %v4163, 128
        %4196 = vxpose.xlu0.b32.cont [15/16] %v4164, 128
        %4197 = vxpose.xlu0.b32.end [16/16] %v4165, 128
        %v4198 = vpop.trf.xlu0
        %v4199 = vpop.trf.xlu0
        %v4200 = vpop.trf.xlu0
        %v4201 = vpop.trf.xlu0
        %v4202 = vpop.trf.xlu0
        %v4203 = vpop.trf.xlu0
        %v4204 = vpop.trf.xlu0
        %v4205 = vpop.trf.xlu0
        %v4206 = vpop.trf.xlu0
        %v4207 = vpop.trf.xlu0
        %v4208 = vpop.trf.xlu0
        %v4209 = vpop.trf.xlu0
        %v4210 = vpop.trf.xlu0
        %v4211 = vpop.trf.xlu0
        %v4212 = vpop.trf.xlu0
        %v4213 = vpop.trf.xlu0
        %4214 = vxpose.xlu0.b32.start [1/16] %v4166, 128
        %4215 = vxpose.xlu0.b32.cont [2/16] %v4167, 128
        %4216 = vxpose.xlu0.b32.cont [3/16] %v4168, 128
        %4217 = vxpose.xlu0.b32.cont [4/16] %v4169, 128
        %4218 = vxpose.xlu0.b32.cont [5/16] %v4170, 128
        %4219 = vxpose.xlu0.b32.cont [6/16] %v4171, 128
        %4220 = vxpose.xlu0.b32.cont [7/16] %v4172, 128
        %4221 = vxpose.xlu0.b32.cont [8/16] %v4173, 128
        %4222 = vxpose.xlu0.b32.cont [9/16] %v4174, 128
        %4223 = vxpose.xlu0.b32.cont [10/16] %v4175, 128
        %4224 = vxpose.xlu0.b32.cont [11/16] %v4176, 128
        %4225 = vxpose.xlu0.b32.cont [12/16] %v4177, 128
        %4226 = vxpose.xlu0.b32.cont [13/16] %v4178, 128
        %4227 = vxpose.xlu0.b32.cont [14/16] %v4179, 128
        %4228 = vxpose.xlu0.b32.cont [15/16] %v4180, 128
        %4229 = vxpose.xlu0.b32.end [16/16] %v4181, 128
        %v4230 = vpop.trf.xlu0
        %v4231 = vpop.trf.xlu0
        %v4232 = vpop.trf.xlu0
        %v4233 = vpop.trf.xlu0
        %v4234 = vpop.trf.xlu0
        %v4235 = vpop.trf.xlu0
        %v4236 = vpop.trf.xlu0
        %v4237 = vpop.trf.xlu0
        %v4238 = vpop.trf.xlu0
        %v4239 = vpop.trf.xlu0
        %v4240 = vpop.trf.xlu0
        %v4241 = vpop.trf.xlu0
        %v4242 = vpop.trf.xlu0
        %v4243 = vpop.trf.xlu0
        %v4244 = vpop.trf.xlu0
        %v4245 = vpop.trf.xlu0
        %4246 = vst [vmem:[%s256] sm:$0xff] %v4198
        %4247 = vst [vmem:[%s256 + $0x8] sm:$0xff] %v4230
        %4248 = vst [vmem:[%s256 + $0x10] sm:$0xff] %v4199
        %4249 = vst [vmem:[%s256 + $0x18] sm:$0xff] %v4231
        %4250 = vst [vmem:[%s256 + $0x20] sm:$0xff] %v4200
        %4251 = vst [vmem:[%s256 + $0x28] sm:$0xff] %v4232
        %4252 = vst [vmem:[%s256 + $0x30] sm:$0xff] %v4201
        %4253 = vst [vmem:[%s256 + $0x38] sm:$0xff] %v4233
        %4254 = vst [vmem:[%s256 + $0x40] sm:$0xff] %v4202
        %4255 = vst [vmem:[%s256 + $0x48] sm:$0xff] %v4234
        %4256 = vst [vmem:[%s256 + $0x50] sm:$0xff] %v4203
        %4257 = vst [vmem:[%s256 + $0x58] sm:$0xff] %v4235
        %4258 = vst [vmem:[%s256 + $0x60] sm:$0xff] %v4204
        %4259 = vst [vmem:[%s256 + $0x68] sm:$0xff] %v4236
        %4260 = vst [vmem:[%s256 + $0x70] sm:$0xff] %v4205
        %4261 = vst [vmem:[%s256 + $0x78] sm:$0xff] %v4237
        %s4262 = sand.u32 %s154, 1
        %s4263 = scalar_lea.sflag [#allocation10], %s4262
        %s4264 = sand.u32 %s154, 1
        %s4265 = smul.addr %s4264, 128
        %s4266 = scalar_lea.vmem [#allocation11], %s4265
        // Predicated region
        $region63: #{tpu_custom_call.1} parent=39 // pred_check
          %p4267 = pneg %p164
        $region64: #{tpu_custom_call.1} parent=39 // pred_check_branch
          %4269 = sbr.rel (%p4267) target = $region66
        $region65: #{tpu_custom_call.1} parent=39 // pred_region
          %s4270 = smul.u32 2, %s27
          %s4272 = ssub.s32 2048, 2048
          %4273 = vsyncadd %s4263, %s4272
          %s4274 = smul.addr %s26, 64
          %s4275 = sadd.s32 %s4270, %s4274
          %s4276 = smul.addr %s4275, 128
          %s4277 = scalar_lea.hbm %s5, %s4276
          %s4278 = sshll.u32 %s4266, 4
          %s4279 = int_to_ptr.vmem [resolvable:$true] %s4278
          %4284 = dma.vmem_to_hbm [thread:$0]  %s4279, 2048, %s4277, %s4263, 256, 1024, 16
        $region66: #{tpu_custom_call.1} parent=39 // pred_fallthru
          _
      $region40: #{tpu_custom_call.1} parent=5 // pred_fallthru
        _
      %p4285 = scmp.le.s32.totalorder 2, %s17
      // Predicated region
      $region67: #{tpu_custom_call.1} parent=5 // pred_check
        %p4286 = pneg %p4285
      $region68: #{tpu_custom_call.1} parent=5 // pred_check_branch
        %4288 = sbr.rel (%p4286) target = $region70
      $region69: #{tpu_custom_call.1} parent=5 // pred_region
        %s4289 = ssub.s32 %s17, 2
        // Predicated region
        $region71: #{tpu_custom_call.1} parent=69 // pred_check
          %p4290 = pneg %p170
        $region72: #{tpu_custom_call.1} parent=69 // pred_check_branch
          %4292 = sbr.rel (%p4290) target = $region74
        $region73: #{tpu_custom_call.1} parent=69 // pred_region
          %s4293 = sand.u32 %s155, 1
          %s4294 = scalar_lea.sflag [#allocation10], %s4293
          %s4295 = sand.u32 %s155, 1
          %s4296 = smul.addr %s4295, 128
          %s4297 = scalar_lea.vmem [#allocation11], %s4296
          %4298 = dma.done %s4294, 2048
        $region74: #{tpu_custom_call.1} parent=69 // pred_fallthru
          _
      $region70: #{tpu_custom_call.1} parent=5 // pred_fallthru
        _
    $region6: #{tpu_custom_call.1} parent=1 // loop_footer
      %s21 = sadd.s32 1, %s17
    $region7: #{tpu_custom_call.1} parent=1 // loop_footer_branch
      %16 = sbr.rel target = $region3
    $region8: #{tpu_custom_call.1} parent=1 // loop_exit
      _
    %4299 = vsyncpa [#allocation9], 1
    %s4300 = scalar_lea.sflag [#allocation9], 1
    %4301 = vsyncpa %s4300, 1
    %4302 = vsyncpa [#allocation10], 1
    %s4303 = scalar_lea.sflag [#allocation10], 1
    %4304 = vsyncpa %s4303, 1

</llo_original>
